<compile_context>
chip_gen: v5e
topology: v5e:2x2
jax: 0.10.0
libtpu: 0.0.40
codegen_flags: <defaults>
</compile_context>

<pallas_src>
import functools

import jax
import jax.numpy as jnp
from jax.experimental import pallas as pl
from jax.experimental.pallas import tpu as pltpu


# ----------------------------------------------------------------------------
# Pallas kernel: tiled  matmul + bias + activation  with f32 VMEM accumulator
# ----------------------------------------------------------------------------
def _matmul_bias_act_kernel(a_ref, w_ref, b_ref, o_ref, acc_ref, *, act):
    k = pl.program_id(2)

    @pl.when(k == 0)
    def _():
        acc_ref[...] = jnp.zeros_like(acc_ref)

    acc_ref[...] += jnp.dot(
        a_ref[...], w_ref[...], preferred_element_type=jnp.float32
    )

    @pl.when(k == pl.num_programs(2) - 1)
    def _():
        out = acc_ref[...] + b_ref[...]          # (tm, tn) + (1, tn)
        if act == "relu":
            out = jnp.maximum(out, 0.0)
        elif act == "sigmoid":
            out = jax.nn.sigmoid(out)
        o_ref[...] = out.astype(o_ref.dtype)


def _round_up(x, m):
    return (x + m - 1) // m * m


def matmul_bias_act(a, w, b, act="none"):
    """a: (M, K), w: (K, N), b: (N,) -> act(a @ w + b) : (M, N) float32.

    A and W are cast to bfloat16 for the MXU; accumulation is float32.
    """
    M, K = a.shape
    K2, N = w.shape
    assert K == K2

    # Tile sizes: lane-dense N (>=128), MXU-aligned K, modest M.  Padded
    # problem dims are exact multiples of the tiles (no ragged edge blocks).
    tm = min(512, _round_up(M, 8))
    tn = min(256, _round_up(N, 128))
    tk = min(512, _round_up(K, 128))
    Mp = _round_up(M, tm)
    Np = _round_up(N, tn)
    Kp = _round_up(K, tk)

    a_p = jnp.pad(a.astype(jnp.bfloat16), ((0, Mp - M), (0, Kp - K)))
    w_p = jnp.pad(w.astype(jnp.bfloat16), ((0, Kp - K), (0, Np - N)))
    b_p = jnp.pad(b.astype(jnp.float32), (0, Np - N)).reshape(1, Np)

    grid = (Mp // tm, Np // tn, Kp // tk)
    kernel = functools.partial(_matmul_bias_act_kernel, act=act)

    out = pl.pallas_call(
        kernel,
        out_shape=jax.ShapeDtypeStruct((Mp, Np), jnp.float32),
        grid=grid,
        in_specs=[
            pl.BlockSpec((tm, tk), lambda i, j, k: (i, k)),
            pl.BlockSpec((tk, tn), lambda i, j, k: (k, j)),
            pl.BlockSpec((1, tn), lambda i, j, k: (0, j)),
        ],
        out_specs=pl.BlockSpec((tm, tn), lambda i, j, k: (i, j)),
        scratch_shapes=[pltpu.VMEM((tm, tn), jnp.float32)],
        compiler_params=pltpu.CompilerParams(
            dimension_semantics=("parallel", "parallel", "arbitrary")
        ),
    )(a_p, w_p, b_p)
    return out[:M, :N]


# ----------------------------------------------------------------------------
# Conv2d (stride=2, padding=1, k=3) on NHWC activations via im2col + matmul
# ----------------------------------------------------------------------------
def conv2d_nhwc(x, w, b, act):
    """x: (N, H, W, Cin) ; w: (Cout, Cin, 3, 3) PyTorch layout."""
    Cout, Cin, K, _ = w.shape
    N, H, W, C = x.shape
    assert C == Cin
    x = x.astype(jnp.bfloat16)                      # halve patch-matrix bytes
    xp = jnp.pad(x, ((0, 0), (1, 1), (1, 1), (0, 0)))
    Hout = (H + 2 - K) // 2 + 1
    Wout = (W + 2 - K) // 2 + 1
    taps = []
    for kh in range(K):
        for kw in range(K):
            taps.append(
                xp[:, kh:kh + 2 * (Hout - 1) + 1:2,
                      kw:kw + 2 * (Wout - 1) + 1:2, :]
            )
    # column order (kh, kw, cin) matches w.transpose(2, 3, 1, 0) below
    patches = jnp.concatenate(taps, axis=-1).reshape(N * Hout * Wout, K * K * Cin)
    wm = jnp.transpose(w, (2, 3, 1, 0)).reshape(K * K * Cin, Cout)
    y = matmul_bias_act(patches, wm, b, act)        # (N*Hout*Wout, Cout)
    return y.reshape(N, Hout, Wout, Cout)


# ----------------------------------------------------------------------------
# ConvTranspose2d (stride=2, padding=1, output_padding=1, k=3) via phase split
# ----------------------------------------------------------------------------
def _deconv_phase_weight(w):
    """w: (Cin, Cout, 3, 3) PyTorch ConvTranspose2d weight -> (4*Cin, 4*Cout).

    Row blocks:    [x(i,j), x(i,j+1), x(i+1,j), x(i+1,j+1)]  (each Cin rows)
    Column blocks: [out(2i,2j), out(2i,2j+1), out(2i+1,2j), out(2i+1,2j+1)]
    """
    Cin, Cout = w.shape[0], w.shape[1]
    z = jnp.zeros((Cin, Cout), w.dtype)
    r0 = [w[:, :, 1, 1], w[:, :, 1, 2], w[:, :, 2, 1], w[:, :, 2, 2]]
    r1 = [z,             w[:, :, 1, 0], z,             w[:, :, 2, 0]]
    r2 = [z,             z,             w[:, :, 0, 1], w[:, :, 0, 2]]
    r3 = [z,             z,             z,             w[:, :, 0, 0]]
    rows = [jnp.concatenate(r, axis=1) for r in (r0, r1, r2, r3)]
    return jnp.concatenate(rows, axis=0)            # (4*Cin, 4*Cout)


def conv_transpose2d_nhwc(x, w, b, act):
    """x: (N, H, W, Cin) ; w: (Cin, Cout, 3, 3) PyTorch layout -> (N, 2H, 2W, Cout)."""
    Cin, Cout, K, _ = w.shape
    N, H, W, C = x.shape
    assert C == Cin and K == 3
    x = x.astype(jnp.bfloat16)
    xp = jnp.pad(x, ((0, 0), (0, 1), (0, 1), (0, 0)))   # high-side zero halo
    s00 = xp[:, :H, :W, :]
    s01 = xp[:, :H, 1:, :]
    s10 = xp[:, 1:, :W, :]
    s11 = xp[:, 1:, 1:, :]
    patches = jnp.concatenate([s00, s01, s10, s11], axis=-1)
    patches = patches.reshape(N * H * W, 4 * Cin)
    wbig = _deconv_phase_weight(w)                      # (4*Cin, 4*Cout)
    bbig = jnp.tile(b, 4)                               # (4*Cout,)
    y = matmul_bias_act(patches, wbig, bbig, act)       # (N*H*W, 4*Cout)
    # pixel shuffle: column blocks are (ph, pw) phases
    y = y.reshape(N, H, W, 2, 2, Cout)
    y = y.transpose(0, 1, 3, 2, 4, 5).reshape(N, 2 * H, 2 * W, Cout)
    return y


# ----------------------------------------------------------------------------
# Linear
# ----------------------------------------------------------------------------
def linear(x, w, b, act):
    """PyTorch Linear semantics. x: (N, in), w: (out, in), b: (out,)."""
    return matmul_bias_act(x.astype(jnp.bfloat16), w.T, b, act)


# ----------------------------------------------------------------------------
# Parameter construction (deterministic, PyTorch-style uniform fan-in init)
# ----------------------------------------------------------------------------
def _uniform(key, shape, fan_in):
    bound = 1.0 / jnp.sqrt(jnp.float32(fan_in))
    return jax.random.uniform(key, shape, jnp.float32, -bound, bound)


def init_params(key, latent_dim, input_size):
    enc_chs = [(3, 16), (16, 32), (32, 64), (64, 128)]
    dec_chs = [(128, 64), (64, 32), (32, 16), (16, 3)]
    K = 3
    params = {}
    keys = jax.random.split(key, 2 * (len(enc_chs) + len(dec_chs)) + 4)
    ki = 0

    params["enc_conv"] = []
    for cin, cout in enc_chs:
        fan_in = cin * K * K
        w = _uniform(keys[ki], (cout, cin, K, K), fan_in); ki += 1
        b = _uniform(keys[ki], (cout,), fan_in); ki += 1
        params["enc_conv"].append((w, b))

    # spatial size after 4 stride-2 convs
    feat_hw = input_size // 16
    flattened = 128 * feat_hw * feat_hw
    params["feature_shape"] = (128, feat_hw, feat_hw)

    w = _uniform(keys[ki], (latent_dim, flattened), flattened); ki += 1
    b = _uniform(keys[ki], (latent_dim,), flattened); ki += 1
    params["enc_fc"] = (w, b)

    w = _uniform(keys[ki], (flattened, latent_dim), latent_dim); ki += 1
    b = _uniform(keys[ki], (flattened,), latent_dim); ki += 1
    params["dec_fc"] = (w, b)

    params["dec_deconv"] = []
    for cin, cout in dec_chs:
        fan_in = cout * K * K  # PyTorch ConvTranspose2d uses weight.size(1)*K*K
        w = _uniform(keys[ki], (cin, cout, K, K), fan_in); ki += 1
        b = _uniform(keys[ki], (cout,), fan_in); ki += 1
        params["dec_deconv"].append((w, b))

    return params


# ----------------------------------------------------------------------------
# Forward pass (NCHW in / NCHW out, NHWC internally)
# ----------------------------------------------------------------------------
def conv_autoencoder_forward(params, x):
    N = x.shape[0]
    h = jnp.transpose(x, (0, 2, 3, 1))                  # NCHW -> NHWC

    # encoder conv stack
    for (w, b) in params["enc_conv"]:
        h = conv2d_nhwc(h, w, b, act="relu")

    # flatten in NCHW order (same as torch.flatten on an NCHW tensor)
    C, fh, fw = params["feature_shape"]
    h = jnp.transpose(h, (0, 3, 1, 2)).reshape(N, -1)

    # encoder / decoder fc
    w, b = params["enc_fc"]
    z = linear(h, w, b, act="relu")
    w, b = params["dec_fc"]
    h = linear(z, w, b, act="relu")

    # unflatten back to NHWC
    h = h.reshape(N, C, fh, fw).transpose(0, 2, 3, 1)

    # decoder deconv stack
    acts = ["relu", "relu", "relu", "sigmoid"]
    for (w, b), act in zip(params["dec_deconv"], acts):
        h = conv_transpose2d_nhwc(h, w, b, act)

    return jnp.transpose(h, (0, 3, 1, 2))               # NHWC -> NCHW


if __name__ == "__main__":
    latent_dim = 32
    input_size = 16          # small spatial size; module default is 1024
    batch = 2

    key = jax.random.PRNGKey(0)
    pkey, xkey = jax.random.split(key)
    params = init_params(pkey, latent_dim, input_size)
    x = jax.random.uniform(xkey, (batch, 3, input_size, input_size), jnp.float32)

    fwd = jax.jit(lambda x: conv_autoencoder_forward(params, x))
    out = fwd(x)
    jax.block_until_ready(out)

    assert out.shape == (batch, 3, input_size, input_size), out.shape
    assert bool(jnp.all(jnp.isfinite(out)))
    # sigmoid output range check
    assert bool(jnp.all((out >= 0.0) & (out <= 1.0)))
    print("KERNEL_OK")
</pallas_src>

<mosaic_0001>
module attributes {stable_mosaic.version = 11 : i64} {
  func.func @_matmul_bias_act_kernel(%arg0: i32, %arg1: i32, %arg2: i32, %arg3: memref<128x128xbf16, #tpu.memory_space<vmem>>, %arg4: memref<128x128xbf16, #tpu.memory_space<vmem>>, %arg5: memref<1x128xf32, #tpu.memory_space<vmem>>, %arg6: memref<128x128xf32, #tpu.memory_space<vmem>>, %arg7: memref<128x128xf32, #tpu.memory_space<vmem>>) attributes {dimension_semantics = [#tpu.dimension_semantics<parallel>, #tpu.dimension_semantics<parallel>, #tpu.dimension_semantics<arbitrary>], iteration_bounds = array<i64: 1, 1, 1>, scalar_prefetch = 0 : i64, scratch_operands = 1 : i64, tpu.core_type = #tpu.core_type<tc>, window_params = [{transform_indices = @transform_0, window_bounds = array<i64: 128, 128>}, {transform_indices = @transform_1, window_bounds = array<i64: 128, 128>}, {transform_indices = @transform_2, window_bounds = array<i64: 1, 128>}, {transform_indices = @transform_3, window_bounds = array<i64: 128, 128>}]} {
    %c0_i32 = arith.constant 0 : i32
    %0 = arith.cmpi eq, %arg2, %c0_i32 : i32
    %1 = arith.extui %0 : i1 to i32
    %c0_i32_0 = arith.constant 0 : i32
    %2 = arith.cmpi ne, %1, %c0_i32_0 : i32
    scf.if %2 {
      %cst_10 = arith.constant 0.000000e+00 : f32
      %12 = vector.broadcast %cst_10 : f32 to vector<128x128xf32>
      %c0_11 = arith.constant 0 : index
      %c0_12 = arith.constant 0 : index
      %13 = vector.load %arg7[%c0_11, %c0_12] : memref<128x128xf32, #tpu.memory_space<vmem>>, vector<128x128xf32>
      tpu.vector_store %arg7[%c0_11, %c0_12], %12 {strides = array<i32>} : memref<128x128xf32, #tpu.memory_space<vmem>>, vector<128x128xf32>,
    } else {
    }
    %c0 = arith.constant 0 : index
    %c0_1 = arith.constant 0 : index
    %3 = vector.load %arg7[%c0, %c0_1] : memref<128x128xf32, #tpu.memory_space<vmem>>, vector<128x128xf32>
    %c0_2 = arith.constant 0 : index
    %c0_3 = arith.constant 0 : index
    %4 = vector.load %arg3[%c0_2, %c0_3] : memref<128x128xbf16, #tpu.memory_space<vmem>>, vector<128x128xbf16>
    %c0_4 = arith.constant 0 : index
    %c0_5 = arith.constant 0 : index
    %5 = vector.load %arg4[%c0_4, %c0_5] : memref<128x128xbf16, #tpu.memory_space<vmem>>, vector<128x128xbf16>
    %cst = arith.constant dense<0.000000e+00> : vector<128x128xf32>
    %6 = tpu.matmul %4, %5, %cst {dimension_numbers = #tpu.dot_dimension_numbers<[1], [0], [0], [1], [0, 0, 1, 1], [], []>} : vector<128x128xbf16>, vector<128x128xbf16>, vector<128x128xf32> -> vector<128x128xf32>
    %7 = arith.addf %3, %6 : vector<128x128xf32>
    %c0_6 = arith.constant 0 : index
    %c0_7 = arith.constant 0 : index
    %8 = vector.load %arg7[%c0_6, %c0_7] : memref<128x128xf32, #tpu.memory_space<vmem>>, vector<128x128xf32>
    tpu.vector_store %arg7[%c0_6, %c0_7], %7 {strides = array<i32>} : memref<128x128xf32, #tpu.memory_space<vmem>>, vector<128x128xf32>,
    %c0_i32_8 = arith.constant 0 : i32
    %9 = arith.cmpi eq, %arg2, %c0_i32_8 : i32
    %10 = arith.extui %9 : i1 to i32
    %c0_i32_9 = arith.constant 0 : i32
    %11 = arith.cmpi ne, %10, %c0_i32_9 : i32
    scf.if %11 {
      %c0_10 = arith.constant 0 : index
      %c0_11 = arith.constant 0 : index
      %12 = vector.load %arg7[%c0_10, %c0_11] : memref<128x128xf32, #tpu.memory_space<vmem>>, vector<128x128xf32>
      %c0_12 = arith.constant 0 : index
      %c0_13 = arith.constant 0 : index
      %13 = vector.load %arg5[%c0_12, %c0_13] : memref<1x128xf32, #tpu.memory_space<vmem>>, vector<1x128xf32>
      %14 = vector.broadcast %13 : vector<1x128xf32> to vector<128x128xf32>
      %15 = arith.addf %12, %14 : vector<128x128xf32>
      %cst_14 = arith.constant 0.000000e+00 : f32
      %16 = vector.broadcast %cst_14 : f32 to vector<128x128xf32>
      %17 = arith.maximumf %15, %16 : vector<128x128xf32>
      %c0_15 = arith.constant 0 : index
      %c0_16 = arith.constant 0 : index
      %18 = vector.load %arg6[%c0_15, %c0_16] : memref<128x128xf32, #tpu.memory_space<vmem>>, vector<128x128xf32>
      tpu.vector_store %arg6[%c0_15, %c0_16], %17 {strides = array<i32>} : memref<128x128xf32, #tpu.memory_space<vmem>>, vector<128x128xf32>,
    } else {
    }
    return
  }
  func.func @transform_0(%arg0: i32, %arg1: i32, %arg2: i32) -> (i32, i32) {
    %c0_i32 = arith.constant 0 : i32
    return %arg0, %arg2 : i32, i32
  }
  func.func @transform_1(%arg0: i32, %arg1: i32, %arg2: i32) -> (i32, i32) {
    %c0_i32 = arith.constant 0 : i32
    return %arg2, %arg1 : i32, i32
  }
  func.func @transform_2(%arg0: i32, %arg1: i32, %arg2: i32) -> (i32, i32) {
    %c0_i32 = arith.constant 0 : i32
    %c0_i32_0 = arith.constant 0 : i32
    return %c0_i32, %arg1 : i32, i32
  }
  func.func @transform_3(%arg0: i32, %arg1: i32, %arg2: i32) -> (i32, i32) {
    %c0_i32 = arith.constant 0 : i32
    return %arg0, %arg1 : i32, i32
  }
}

module attributes {stable_mosaic.version = 11 : i64} {
  func.func @_matmul_bias_act_kernel(%arg0: i32, %arg1: i32, %arg2: i32, %arg3: memref<32x256xbf16, #tpu.memory_space<vmem>>, %arg4: memref<256x128xbf16, #tpu.memory_space<vmem>>, %arg5: memref<1x128xf32, #tpu.memory_space<vmem>>, %arg6: memref<32x128xf32, #tpu.memory_space<vmem>>, %arg7: memref<32x128xf32, #tpu.memory_space<vmem>>) attributes {dimension_semantics = [#tpu.dimension_semantics<parallel>, #tpu.dimension_semantics<parallel>, #tpu.dimension_semantics<arbitrary>], iteration_bounds = array<i64: 1, 1, 1>, scalar_prefetch = 0 : i64, scratch_operands = 1 : i64, tpu.core_type = #tpu.core_type<tc>, window_params = [{transform_indices = @transform_0, window_bounds = array<i64: 32, 256>}, {transform_indices = @transform_1, window_bounds = array<i64: 256, 128>}, {transform_indices = @transform_2, window_bounds = array<i64: 1, 128>}, {transform_indices = @transform_3, window_bounds = array<i64: 32, 128>}]} {
    %c0_i32 = arith.constant 0 : i32
    %0 = arith.cmpi eq, %arg2, %c0_i32 : i32
    %1 = arith.extui %0 : i1 to i32
    %c0_i32_0 = arith.constant 0 : i32
    %2 = arith.cmpi ne, %1, %c0_i32_0 : i32
    scf.if %2 {
      %cst_10 = arith.constant 0.000000e+00 : f32
      %12 = vector.broadcast %cst_10 : f32 to vector<32x128xf32>
      %c0_11 = arith.constant 0 : index
      %c0_12 = arith.constant 0 : index
      %13 = vector.load %arg7[%c0_11, %c0_12] : memref<32x128xf32, #tpu.memory_space<vmem>>, vector<32x128xf32>
      tpu.vector_store %arg7[%c0_11, %c0_12], %12 {strides = array<i32>} : memref<32x128xf32, #tpu.memory_space<vmem>>, vector<32x128xf32>,
    } else {
    }
    %c0 = arith.constant 0 : index
    %c0_1 = arith.constant 0 : index
    %3 = vector.load %arg7[%c0, %c0_1] : memref<32x128xf32, #tpu.memory_space<vmem>>, vector<32x128xf32>
    %c0_2 = arith.constant 0 : index
    %c0_3 = arith.constant 0 : index
    %4 = vector.load %arg3[%c0_2, %c0_3] : memref<32x256xbf16, #tpu.memory_space<vmem>>, vector<32x256xbf16>
    %c0_4 = arith.constant 0 : index
    %c0_5 = arith.constant 0 : index
    %5 = vector.load %arg4[%c0_4, %c0_5] : memref<256x128xbf16, #tpu.memory_space<vmem>>, vector<256x128xbf16>
    %cst = arith.constant dense<0.000000e+00> : vector<32x128xf32>
    %6 = tpu.matmul %4, %5, %cst {dimension_numbers = #tpu.dot_dimension_numbers<[1], [0], [0], [1], [0, 0, 1, 1], [], []>} : vector<32x256xbf16>, vector<256x128xbf16>, vector<32x128xf32> -> vector<32x128xf32>
    %7 = arith.addf %3, %6 : vector<32x128xf32>
    %c0_6 = arith.constant 0 : index
    %c0_7 = arith.constant 0 : index
    %8 = vector.load %arg7[%c0_6, %c0_7] : memref<32x128xf32, #tpu.memory_space<vmem>>, vector<32x128xf32>
    tpu.vector_store %arg7[%c0_6, %c0_7], %7 {strides = array<i32>} : memref<32x128xf32, #tpu.memory_space<vmem>>, vector<32x128xf32>,
    %c0_i32_8 = arith.constant 0 : i32
    %9 = arith.cmpi eq, %arg2, %c0_i32_8 : i32
    %10 = arith.extui %9 : i1 to i32
    %c0_i32_9 = arith.constant 0 : i32
    %11 = arith.cmpi ne, %10, %c0_i32_9 : i32
    scf.if %11 {
      %c0_10 = arith.constant 0 : index
      %c0_11 = arith.constant 0 : index
      %12 = vector.load %arg7[%c0_10, %c0_11] : memref<32x128xf32, #tpu.memory_space<vmem>>, vector<32x128xf32>
      %c0_12 = arith.constant 0 : index
      %c0_13 = arith.constant 0 : index
      %13 = vector.load %arg5[%c0_12, %c0_13] : memref<1x128xf32, #tpu.memory_space<vmem>>, vector<1x128xf32>
      %14 = vector.broadcast %13 : vector<1x128xf32> to vector<32x128xf32>
      %15 = arith.addf %12, %14 : vector<32x128xf32>
      %cst_14 = arith.constant 0.000000e+00 : f32
      %16 = vector.broadcast %cst_14 : f32 to vector<32x128xf32>
      %17 = arith.maximumf %15, %16 : vector<32x128xf32>
      %c0_15 = arith.constant 0 : index
      %c0_16 = arith.constant 0 : index
      %18 = vector.load %arg6[%c0_15, %c0_16] : memref<32x128xf32, #tpu.memory_space<vmem>>, vector<32x128xf32>
      tpu.vector_store %arg6[%c0_15, %c0_16], %17 {strides = array<i32>} : memref<32x128xf32, #tpu.memory_space<vmem>>, vector<32x128xf32>,
    } else {
    }
    return
  }
  func.func @transform_0(%arg0: i32, %arg1: i32, %arg2: i32) -> (i32, i32) {
    %c0_i32 = arith.constant 0 : i32
    return %arg0, %arg2 : i32, i32
  }
  func.func @transform_1(%arg0: i32, %arg1: i32, %arg2: i32) -> (i32, i32) {
    %c0_i32 = arith.constant 0 : i32
    return %arg2, %arg1 : i32, i32
  }
  func.func @transform_2(%arg0: i32, %arg1: i32, %arg2: i32) -> (i32, i32) {
    %c0_i32 = arith.constant 0 : i32
    %c0_i32_0 = arith.constant 0 : i32
    return %c0_i32, %arg1 : i32, i32
  }
  func.func @transform_3(%arg0: i32, %arg1: i32, %arg2: i32) -> (i32, i32) {
    %c0_i32 = arith.constant 0 : i32
    return %arg0, %arg1 : i32, i32
  }
}

module attributes {stable_mosaic.version = 11 : i64} {
  func.func @_matmul_bias_act_kernel(%arg0: i32, %arg1: i32, %arg2: i32, %arg3: memref<8x384xbf16, #tpu.memory_space<vmem>>, %arg4: memref<384x128xbf16, #tpu.memory_space<vmem>>, %arg5: memref<1x128xf32, #tpu.memory_space<vmem>>, %arg6: memref<8x128xf32, #tpu.memory_space<vmem>>, %arg7: memref<8x128xf32, #tpu.memory_space<vmem>>) attributes {dimension_semantics = [#tpu.dimension_semantics<parallel>, #tpu.dimension_semantics<parallel>, #tpu.dimension_semantics<arbitrary>], iteration_bounds = array<i64: 1, 1, 1>, scalar_prefetch = 0 : i64, scratch_operands = 1 : i64, tpu.core_type = #tpu.core_type<tc>, window_params = [{transform_indices = @transform_0, window_bounds = array<i64: 8, 384>}, {transform_indices = @transform_1, window_bounds = array<i64: 384, 128>}, {transform_indices = @transform_2, window_bounds = array<i64: 1, 128>}, {transform_indices = @transform_3, window_bounds = array<i64: 8, 128>}]} {
    %c0_i32 = arith.constant 0 : i32
    %0 = arith.cmpi eq, %arg2, %c0_i32 : i32
    %1 = arith.extui %0 : i1 to i32
    %c0_i32_0 = arith.constant 0 : i32
    %2 = arith.cmpi ne, %1, %c0_i32_0 : i32
    scf.if %2 {
      %cst_10 = arith.constant 0.000000e+00 : f32
      %12 = vector.broadcast %cst_10 : f32 to vector<8x128xf32>
      %c0_11 = arith.constant 0 : index
      %c0_12 = arith.constant 0 : index
      %13 = vector.load %arg7[%c0_11, %c0_12] : memref<8x128xf32, #tpu.memory_space<vmem>>, vector<8x128xf32>
      tpu.vector_store %arg7[%c0_11, %c0_12], %12 {strides = array<i32>} : memref<8x128xf32, #tpu.memory_space<vmem>>, vector<8x128xf32>,
    } else {
    }
    %c0 = arith.constant 0 : index
    %c0_1 = arith.constant 0 : index
    %3 = vector.load %arg7[%c0, %c0_1] : memref<8x128xf32, #tpu.memory_space<vmem>>, vector<8x128xf32>
    %c0_2 = arith.constant 0 : index
    %c0_3 = arith.constant 0 : index
    %4 = vector.load %arg3[%c0_2, %c0_3] : memref<8x384xbf16, #tpu.memory_space<vmem>>, vector<8x384xbf16>
    %c0_4 = arith.constant 0 : index
    %c0_5 = arith.constant 0 : index
    %5 = vector.load %arg4[%c0_4, %c0_5] : memref<384x128xbf16, #tpu.memory_space<vmem>>, vector<384x128xbf16>
    %cst = arith.constant dense<0.000000e+00> : vector<8x128xf32>
    %6 = tpu.matmul %4, %5, %cst {dimension_numbers = #tpu.dot_dimension_numbers<[1], [0], [0], [1], [0, 0, 1, 1], [], []>} : vector<8x384xbf16>, vector<384x128xbf16>, vector<8x128xf32> -> vector<8x128xf32>
    %7 = arith.addf %3, %6 : vector<8x128xf32>
    %c0_6 = arith.constant 0 : index
    %c0_7 = arith.constant 0 : index
    %8 = vector.load %arg7[%c0_6, %c0_7] : memref<8x128xf32, #tpu.memory_space<vmem>>, vector<8x128xf32>
    tpu.vector_store %arg7[%c0_6, %c0_7], %7 {strides = array<i32>} : memref<8x128xf32, #tpu.memory_space<vmem>>, vector<8x128xf32>,
    %c0_i32_8 = arith.constant 0 : i32
    %9 = arith.cmpi eq, %arg2, %c0_i32_8 : i32
    %10 = arith.extui %9 : i1 to i32
    %c0_i32_9 = arith.constant 0 : i32
    %11 = arith.cmpi ne, %10, %c0_i32_9 : i32
    scf.if %11 {
      %c0_10 = arith.constant 0 : index
      %c0_11 = arith.constant 0 : index
      %12 = vector.load %arg7[%c0_10, %c0_11] : memref<8x128xf32, #tpu.memory_space<vmem>>, vector<8x128xf32>
      %c0_12 = arith.constant 0 : index
      %c0_13 = arith.constant 0 : index
      %13 = vector.load %arg5[%c0_12, %c0_13] : memref<1x128xf32, #tpu.memory_space<vmem>>, vector<1x128xf32>
      %14 = vector.broadcast %13 : vector<1x128xf32> to vector<8x128xf32>
      %15 = arith.addf %12, %14 : vector<8x128xf32>
      %cst_14 = arith.constant 0.000000e+00 : f32
      %16 = vector.broadcast %cst_14 : f32 to vector<8x128xf32>
      %17 = arith.maximumf %15, %16 : vector<8x128xf32>
      %c0_15 = arith.constant 0 : index
      %c0_16 = arith.constant 0 : index
      %18 = vector.load %arg6[%c0_15, %c0_16] : memref<8x128xf32, #tpu.memory_space<vmem>>, vector<8x128xf32>
      tpu.vector_store %arg6[%c0_15, %c0_16], %17 {strides = array<i32>} : memref<8x128xf32, #tpu.memory_space<vmem>>, vector<8x128xf32>,
    } else {
    }
    return
  }
  func.func @transform_0(%arg0: i32, %arg1: i32, %arg2: i32) -> (i32, i32) {
    %c0_i32 = arith.constant 0 : i32
    return %arg0, %arg2 : i32, i32
  }
  func.func @transform_1(%arg0: i32, %arg1: i32, %arg2: i32) -> (i32, i32) {
    %c0_i32 = arith.constant 0 : i32
    return %arg2, %arg1 : i32, i32
  }
  func.func @transform_2(%arg0: i32, %arg1: i32, %arg2: i32) -> (i32, i32) {
    %c0_i32 = arith.constant 0 : i32
    %c0_i32_0 = arith.constant 0 : i32
    return %c0_i32, %arg1 : i32, i32
  }
  func.func @transform_3(%arg0: i32, %arg1: i32, %arg2: i32) -> (i32, i32) {
    %c0_i32 = arith.constant 0 : i32
    return %arg0, %arg1 : i32, i32
  }
}

module attributes {stable_mosaic.version = 11 : i64} {
  func.func @_matmul_bias_act_kernel(%arg0: i32, %arg1: i32, %arg2: i32, %arg3: memref<8x512xbf16, #tpu.memory_space<vmem>>, %arg4: memref<512x128xbf16, #tpu.memory_space<vmem>>, %arg5: memref<1x128xf32, #tpu.memory_space<vmem>>, %arg6: memref<8x128xf32, #tpu.memory_space<vmem>>, %arg7: memref<8x128xf32, #tpu.memory_space<vmem>>) attributes {dimension_semantics = [#tpu.dimension_semantics<parallel>, #tpu.dimension_semantics<parallel>, #tpu.dimension_semantics<arbitrary>], iteration_bounds = array<i64: 1, 1, 2>, scalar_prefetch = 0 : i64, scratch_operands = 1 : i64, tpu.core_type = #tpu.core_type<tc>, window_params = [{transform_indices = @transform_0, window_bounds = array<i64: 8, 512>}, {transform_indices = @transform_1, window_bounds = array<i64: 512, 128>}, {transform_indices = @transform_2, window_bounds = array<i64: 1, 128>}, {transform_indices = @transform_3, window_bounds = array<i64: 8, 128>}]} {
    %c0_i32 = arith.constant 0 : i32
    %0 = arith.cmpi eq, %arg2, %c0_i32 : i32
    %1 = arith.extui %0 : i1 to i32
    %c0_i32_0 = arith.constant 0 : i32
    %2 = arith.cmpi ne, %1, %c0_i32_0 : i32
    scf.if %2 {
      %cst_9 = arith.constant 0.000000e+00 : f32
      %12 = vector.broadcast %cst_9 : f32 to vector<8x128xf32>
      %c0_10 = arith.constant 0 : index
      %c0_11 = arith.constant 0 : index
      %13 = vector.load %arg7[%c0_10, %c0_11] : memref<8x128xf32, #tpu.memory_space<vmem>>, vector<8x128xf32>
      tpu.vector_store %arg7[%c0_10, %c0_11], %12 {strides = array<i32>} : memref<8x128xf32, #tpu.memory_space<vmem>>, vector<8x128xf32>,
    } else {
    }
    %c0 = arith.constant 0 : index
    %c0_1 = arith.constant 0 : index
    %3 = vector.load %arg7[%c0, %c0_1] : memref<8x128xf32, #tpu.memory_space<vmem>>, vector<8x128xf32>
    %c0_2 = arith.constant 0 : index
    %c0_3 = arith.constant 0 : index
    %4 = vector.load %arg3[%c0_2, %c0_3] : memref<8x512xbf16, #tpu.memory_space<vmem>>, vector<8x512xbf16>
    %c0_4 = arith.constant 0 : index
    %c0_5 = arith.constant 0 : index
    %5 = vector.load %arg4[%c0_4, %c0_5] : memref<512x128xbf16, #tpu.memory_space<vmem>>, vector<512x128xbf16>
    %cst = arith.constant dense<0.000000e+00> : vector<8x128xf32>
    %6 = tpu.matmul %4, %5, %cst {dimension_numbers = #tpu.dot_dimension_numbers<[1], [0], [0], [1], [0, 0, 1, 1], [], []>} : vector<8x512xbf16>, vector<512x128xbf16>, vector<8x128xf32> -> vector<8x128xf32>
    %7 = arith.addf %3, %6 : vector<8x128xf32>
    %c0_6 = arith.constant 0 : index
    %c0_7 = arith.constant 0 : index
    %8 = vector.load %arg7[%c0_6, %c0_7] : memref<8x128xf32, #tpu.memory_space<vmem>>, vector<8x128xf32>
    tpu.vector_store %arg7[%c0_6, %c0_7], %7 {strides = array<i32>} : memref<8x128xf32, #tpu.memory_space<vmem>>, vector<8x128xf32>,
    %c1_i32 = arith.constant 1 : i32
    %9 = arith.cmpi eq, %arg2, %c1_i32 : i32
    %10 = arith.extui %9 : i1 to i32
    %c0_i32_8 = arith.constant 0 : i32
    %11 = arith.cmpi ne, %10, %c0_i32_8 : i32
    scf.if %11 {
      %c0_9 = arith.constant 0 : index
      %c0_10 = arith.constant 0 : index
      %12 = vector.load %arg7[%c0_9, %c0_10] : memref<8x128xf32, #tpu.memory_space<vmem>>, vector<8x128xf32>
      %c0_11 = arith.constant 0 : index
      %c0_12 = arith.constant 0 : index
      %13 = vector.load %arg5[%c0_11, %c0_12] : memref<1x128xf32, #tpu.memory_space<vmem>>, vector<1x128xf32>
      %14 = vector.broadcast %13 : vector<1x128xf32> to vector<8x128xf32>
      %15 = arith.addf %12, %14 : vector<8x128xf32>
      %cst_13 = arith.constant 0.000000e+00 : f32
      %16 = vector.broadcast %cst_13 : f32 to vector<8x128xf32>
      %17 = arith.maximumf %15, %16 : vector<8x128xf32>
      %c0_14 = arith.constant 0 : index
      %c0_15 = arith.constant 0 : index
      %18 = vector.load %arg6[%c0_14, %c0_15] : memref<8x128xf32, #tpu.memory_space<vmem>>, vector<8x128xf32>
      tpu.vector_store %arg6[%c0_14, %c0_15], %17 {strides = array<i32>} : memref<8x128xf32, #tpu.memory_space<vmem>>, vector<8x128xf32>,
    } else {
    }
    return
  }
  func.func @transform_0(%arg0: i32, %arg1: i32, %arg2: i32) -> (i32, i32) {
    %c0_i32 = arith.constant 0 : i32
    return %arg0, %arg2 : i32, i32
  }
  func.func @transform_1(%arg0: i32, %arg1: i32, %arg2: i32) -> (i32, i32) {
    %c0_i32 = arith.constant 0 : i32
    return %arg2, %arg1 : i32, i32
  }
  func.func @transform_2(%arg0: i32, %arg1: i32, %arg2: i32) -> (i32, i32) {
    %c0_i32 = arith.constant 0 : i32
    %c0_i32_0 = arith.constant 0 : i32
    return %c0_i32, %arg1 : i32, i32
  }
  func.func @transform_3(%arg0: i32, %arg1: i32, %arg2: i32) -> (i32, i32) {
    %c0_i32 = arith.constant 0 : i32
    return %arg0, %arg1 : i32, i32
  }
}

module attributes {stable_mosaic.version = 11 : i64} {
  func.func @_matmul_bias_act_kernel(%arg0: i32, %arg1: i32, %arg2: i32, %arg3: memref<8x128xbf16, #tpu.memory_space<vmem>>, %arg4: memref<128x128xbf16, #tpu.memory_space<vmem>>, %arg5: memref<1x128xf32, #tpu.memory_space<vmem>>, %arg6: memref<8x128xf32, #tpu.memory_space<vmem>>, %arg7: memref<8x128xf32, #tpu.memory_space<vmem>>) attributes {dimension_semantics = [#tpu.dimension_semantics<parallel>, #tpu.dimension_semantics<parallel>, #tpu.dimension_semantics<arbitrary>], iteration_bounds = array<i64: 1, 1, 1>, scalar_prefetch = 0 : i64, scratch_operands = 1 : i64, tpu.core_type = #tpu.core_type<tc>, window_params = [{transform_indices = @transform_0, window_bounds = array<i64: 8, 128>}, {transform_indices = @transform_1, window_bounds = array<i64: 128, 128>}, {transform_indices = @transform_2, window_bounds = array<i64: 1, 128>}, {transform_indices = @transform_3, window_bounds = array<i64: 8, 128>}]} {
    %c0_i32 = arith.constant 0 : i32
    %0 = arith.cmpi eq, %arg2, %c0_i32 : i32
    %1 = arith.extui %0 : i1 to i32
    %c0_i32_0 = arith.constant 0 : i32
    %2 = arith.cmpi ne, %1, %c0_i32_0 : i32
    scf.if %2 {
      %cst_10 = arith.constant 0.000000e+00 : f32
      %12 = vector.broadcast %cst_10 : f32 to vector<8x128xf32>
      %c0_11 = arith.constant 0 : index
      %c0_12 = arith.constant 0 : index
      %13 = vector.load %arg7[%c0_11, %c0_12] : memref<8x128xf32, #tpu.memory_space<vmem>>, vector<8x128xf32>
      tpu.vector_store %arg7[%c0_11, %c0_12], %12 {strides = array<i32>} : memref<8x128xf32, #tpu.memory_space<vmem>>, vector<8x128xf32>,
    } else {
    }
    %c0 = arith.constant 0 : index
    %c0_1 = arith.constant 0 : index
    %3 = vector.load %arg7[%c0, %c0_1] : memref<8x128xf32, #tpu.memory_space<vmem>>, vector<8x128xf32>
    %c0_2 = arith.constant 0 : index
    %c0_3 = arith.constant 0 : index
    %4 = vector.load %arg3[%c0_2, %c0_3] : memref<8x128xbf16, #tpu.memory_space<vmem>>, vector<8x128xbf16>
    %c0_4 = arith.constant 0 : index
    %c0_5 = arith.constant 0 : index
    %5 = vector.load %arg4[%c0_4, %c0_5] : memref<128x128xbf16, #tpu.memory_space<vmem>>, vector<128x128xbf16>
    %cst = arith.constant dense<0.000000e+00> : vector<8x128xf32>
    %6 = tpu.matmul %4, %5, %cst {dimension_numbers = #tpu.dot_dimension_numbers<[1], [0], [0], [1], [0, 0, 1, 1], [], []>} : vector<8x128xbf16>, vector<128x128xbf16>, vector<8x128xf32> -> vector<8x128xf32>
    %7 = arith.addf %3, %6 : vector<8x128xf32>
    %c0_6 = arith.constant 0 : index
    %c0_7 = arith.constant 0 : index
    %8 = vector.load %arg7[%c0_6, %c0_7] : memref<8x128xf32, #tpu.memory_space<vmem>>, vector<8x128xf32>
    tpu.vector_store %arg7[%c0_6, %c0_7], %7 {strides = array<i32>} : memref<8x128xf32, #tpu.memory_space<vmem>>, vector<8x128xf32>,
    %c0_i32_8 = arith.constant 0 : i32
    %9 = arith.cmpi eq, %arg2, %c0_i32_8 : i32
    %10 = arith.extui %9 : i1 to i32
    %c0_i32_9 = arith.constant 0 : i32
    %11 = arith.cmpi ne, %10, %c0_i32_9 : i32
    scf.if %11 {
      %c0_10 = arith.constant 0 : index
      %c0_11 = arith.constant 0 : index
      %12 = vector.load %arg7[%c0_10, %c0_11] : memref<8x128xf32, #tpu.memory_space<vmem>>, vector<8x128xf32>
      %c0_12 = arith.constant 0 : index
      %c0_13 = arith.constant 0 : index
      %13 = vector.load %arg5[%c0_12, %c0_13] : memref<1x128xf32, #tpu.memory_space<vmem>>, vector<1x128xf32>
      %14 = vector.broadcast %13 : vector<1x128xf32> to vector<8x128xf32>
      %15 = arith.addf %12, %14 : vector<8x128xf32>
      %cst_14 = arith.constant 0.000000e+00 : f32
      %16 = vector.broadcast %cst_14 : f32 to vector<8x128xf32>
      %17 = arith.maximumf %15, %16 : vector<8x128xf32>
      %c0_15 = arith.constant 0 : index
      %c0_16 = arith.constant 0 : index
      %18 = vector.load %arg6[%c0_15, %c0_16] : memref<8x128xf32, #tpu.memory_space<vmem>>, vector<8x128xf32>
      tpu.vector_store %arg6[%c0_15, %c0_16], %17 {strides = array<i32>} : memref<8x128xf32, #tpu.memory_space<vmem>>, vector<8x128xf32>,
    } else {
    }
    return
  }
  func.func @transform_0(%arg0: i32, %arg1: i32, %arg2: i32) -> (i32, i32) {
    %c0_i32 = arith.constant 0 : i32
    return %arg0, %arg2 : i32, i32
  }
  func.func @transform_1(%arg0: i32, %arg1: i32, %arg2: i32) -> (i32, i32) {
    %c0_i32 = arith.constant 0 : i32
    return %arg2, %arg1 : i32, i32
  }
  func.func @transform_2(%arg0: i32, %arg1: i32, %arg2: i32) -> (i32, i32) {
    %c0_i32 = arith.constant 0 : i32
    %c0_i32_0 = arith.constant 0 : i32
    return %c0_i32, %arg1 : i32, i32
  }
  func.func @transform_3(%arg0: i32, %arg1: i32, %arg2: i32) -> (i32, i32) {
    %c0_i32 = arith.constant 0 : i32
    return %arg0, %arg1 : i32, i32
  }
}

module attributes {stable_mosaic.version = 11 : i64} {
  func.func @_matmul_bias_act_kernel(%arg0: i32, %arg1: i32, %arg2: i32, %arg3: memref<8x512xbf16, #tpu.memory_space<vmem>>, %arg4: memref<512x256xbf16, #tpu.memory_space<vmem>>, %arg5: memref<1x256xf32, #tpu.memory_space<vmem>>, %arg6: memref<8x256xf32, #tpu.memory_space<vmem>>, %arg7: memref<8x256xf32, #tpu.memory_space<vmem>>) attributes {dimension_semantics = [#tpu.dimension_semantics<parallel>, #tpu.dimension_semantics<parallel>, #tpu.dimension_semantics<arbitrary>], iteration_bounds = array<i64: 1, 1, 1>, scalar_prefetch = 0 : i64, scratch_operands = 1 : i64, tpu.core_type = #tpu.core_type<tc>, window_params = [{transform_indices = @transform_0, window_bounds = array<i64: 8, 512>}, {transform_indices = @transform_1, window_bounds = array<i64: 512, 256>}, {transform_indices = @transform_2, window_bounds = array<i64: 1, 256>}, {transform_indices = @transform_3, window_bounds = array<i64: 8, 256>}]} {
    %c0_i32 = arith.constant 0 : i32
    %0 = arith.cmpi eq, %arg2, %c0_i32 : i32
    %1 = arith.extui %0 : i1 to i32
    %c0_i32_0 = arith.constant 0 : i32
    %2 = arith.cmpi ne, %1, %c0_i32_0 : i32
    scf.if %2 {
      %cst_10 = arith.constant 0.000000e+00 : f32
      %12 = vector.broadcast %cst_10 : f32 to vector<8x256xf32>
      %c0_11 = arith.constant 0 : index
      %c0_12 = arith.constant 0 : index
      %13 = vector.load %arg7[%c0_11, %c0_12] : memref<8x256xf32, #tpu.memory_space<vmem>>, vector<8x256xf32>
      tpu.vector_store %arg7[%c0_11, %c0_12], %12 {strides = array<i32>} : memref<8x256xf32, #tpu.memory_space<vmem>>, vector<8x256xf32>,
    } else {
    }
    %c0 = arith.constant 0 : index
    %c0_1 = arith.constant 0 : index
    %3 = vector.load %arg7[%c0, %c0_1] : memref<8x256xf32, #tpu.memory_space<vmem>>, vector<8x256xf32>
    %c0_2 = arith.constant 0 : index
    %c0_3 = arith.constant 0 : index
    %4 = vector.load %arg3[%c0_2, %c0_3] : memref<8x512xbf16, #tpu.memory_space<vmem>>, vector<8x512xbf16>
    %c0_4 = arith.constant 0 : index
    %c0_5 = arith.constant 0 : index
    %5 = vector.load %arg4[%c0_4, %c0_5] : memref<512x256xbf16, #tpu.memory_space<vmem>>, vector<512x256xbf16>
    %cst = arith.constant dense<0.000000e+00> : vector<8x256xf32>
    %6 = tpu.matmul %4, %5, %cst {dimension_numbers = #tpu.dot_dimension_numbers<[1], [0], [0], [1], [0, 0, 1, 1], [], []>} : vector<8x512xbf16>, vector<512x256xbf16>, vector<8x256xf32> -> vector<8x256xf32>
    %7 = arith.addf %3, %6 : vector<8x256xf32>
    %c0_6 = arith.constant 0 : index
    %c0_7 = arith.constant 0 : index
    %8 = vector.load %arg7[%c0_6, %c0_7] : memref<8x256xf32, #tpu.memory_space<vmem>>, vector<8x256xf32>
    tpu.vector_store %arg7[%c0_6, %c0_7], %7 {strides = array<i32>} : memref<8x256xf32, #tpu.memory_space<vmem>>, vector<8x256xf32>,
    %c0_i32_8 = arith.constant 0 : i32
    %9 = arith.cmpi eq, %arg2, %c0_i32_8 : i32
    %10 = arith.extui %9 : i1 to i32
    %c0_i32_9 = arith.constant 0 : i32
    %11 = arith.cmpi ne, %10, %c0_i32_9 : i32
    scf.if %11 {
      %c0_10 = arith.constant 0 : index
      %c0_11 = arith.constant 0 : index
      %12 = vector.load %arg7[%c0_10, %c0_11] : memref<8x256xf32, #tpu.memory_space<vmem>>, vector<8x256xf32>
      %c0_12 = arith.constant 0 : index
      %c0_13 = arith.constant 0 : index
      %13 = vector.load %arg5[%c0_12, %c0_13] : memref<1x256xf32, #tpu.memory_space<vmem>>, vector<1x256xf32>
      %14 = vector.broadcast %13 : vector<1x256xf32> to vector<8x256xf32>
      %15 = arith.addf %12, %14 : vector<8x256xf32>
      %cst_14 = arith.constant 0.000000e+00 : f32
      %16 = vector.broadcast %cst_14 : f32 to vector<8x256xf32>
      %17 = arith.maximumf %15, %16 : vector<8x256xf32>
      %c0_15 = arith.constant 0 : index
      %c0_16 = arith.constant 0 : index
      %18 = vector.load %arg6[%c0_15, %c0_16] : memref<8x256xf32, #tpu.memory_space<vmem>>, vector<8x256xf32>
      tpu.vector_store %arg6[%c0_15, %c0_16], %17 {strides = array<i32>} : memref<8x256xf32, #tpu.memory_space<vmem>>, vector<8x256xf32>,
    } else {
    }
    return
  }
  func.func @transform_0(%arg0: i32, %arg1: i32, %arg2: i32) -> (i32, i32) {
    %c0_i32 = arith.constant 0 : i32
    return %arg0, %arg2 : i32, i32
  }
  func.func @transform_1(%arg0: i32, %arg1: i32, %arg2: i32) -> (i32, i32) {
    %c0_i32 = arith.constant 0 : i32
    return %arg2, %arg1 : i32, i32
  }
  func.func @transform_2(%arg0: i32, %arg1: i32, %arg2: i32) -> (i32, i32) {
    %c0_i32 = arith.constant 0 : i32
    %c0_i32_0 = arith.constant 0 : i32
    return %c0_i32, %arg1 : i32, i32
  }
  func.func @transform_3(%arg0: i32, %arg1: i32, %arg2: i32) -> (i32, i32) {
    %c0_i32 = arith.constant 0 : i32
    return %arg0, %arg1 : i32, i32
  }
}

module attributes {stable_mosaic.version = 11 : i64} {
  func.func @_matmul_bias_act_kernel(%arg0: i32, %arg1: i32, %arg2: i32, %arg3: memref<8x256xbf16, #tpu.memory_space<vmem>>, %arg4: memref<256x128xbf16, #tpu.memory_space<vmem>>, %arg5: memref<1x128xf32, #tpu.memory_space<vmem>>, %arg6: memref<8x128xf32, #tpu.memory_space<vmem>>, %arg7: memref<8x128xf32, #tpu.memory_space<vmem>>) attributes {dimension_semantics = [#tpu.dimension_semantics<parallel>, #tpu.dimension_semantics<parallel>, #tpu.dimension_semantics<arbitrary>], iteration_bounds = array<i64: 1, 1, 1>, scalar_prefetch = 0 : i64, scratch_operands = 1 : i64, tpu.core_type = #tpu.core_type<tc>, window_params = [{transform_indices = @transform_0, window_bounds = array<i64: 8, 256>}, {transform_indices = @transform_1, window_bounds = array<i64: 256, 128>}, {transform_indices = @transform_2, window_bounds = array<i64: 1, 128>}, {transform_indices = @transform_3, window_bounds = array<i64: 8, 128>}]} {
    %c0_i32 = arith.constant 0 : i32
    %0 = arith.cmpi eq, %arg2, %c0_i32 : i32
    %1 = arith.extui %0 : i1 to i32
    %c0_i32_0 = arith.constant 0 : i32
    %2 = arith.cmpi ne, %1, %c0_i32_0 : i32
    scf.if %2 {
      %cst_10 = arith.constant 0.000000e+00 : f32
      %12 = vector.broadcast %cst_10 : f32 to vector<8x128xf32>
      %c0_11 = arith.constant 0 : index
      %c0_12 = arith.constant 0 : index
      %13 = vector.load %arg7[%c0_11, %c0_12] : memref<8x128xf32, #tpu.memory_space<vmem>>, vector<8x128xf32>
      tpu.vector_store %arg7[%c0_11, %c0_12], %12 {strides = array<i32>} : memref<8x128xf32, #tpu.memory_space<vmem>>, vector<8x128xf32>,
    } else {
    }
    %c0 = arith.constant 0 : index
    %c0_1 = arith.constant 0 : index
    %3 = vector.load %arg7[%c0, %c0_1] : memref<8x128xf32, #tpu.memory_space<vmem>>, vector<8x128xf32>
    %c0_2 = arith.constant 0 : index
    %c0_3 = arith.constant 0 : index
    %4 = vector.load %arg3[%c0_2, %c0_3] : memref<8x256xbf16, #tpu.memory_space<vmem>>, vector<8x256xbf16>
    %c0_4 = arith.constant 0 : index
    %c0_5 = arith.constant 0 : index
    %5 = vector.load %arg4[%c0_4, %c0_5] : memref<256x128xbf16, #tpu.memory_space<vmem>>, vector<256x128xbf16>
    %cst = arith.constant dense<0.000000e+00> : vector<8x128xf32>
    %6 = tpu.matmul %4, %5, %cst {dimension_numbers = #tpu.dot_dimension_numbers<[1], [0], [0], [1], [0, 0, 1, 1], [], []>} : vector<8x256xbf16>, vector<256x128xbf16>, vector<8x128xf32> -> vector<8x128xf32>
    %7 = arith.addf %3, %6 : vector<8x128xf32>
    %c0_6 = arith.constant 0 : index
    %c0_7 = arith.constant 0 : index
    %8 = vector.load %arg7[%c0_6, %c0_7] : memref<8x128xf32, #tpu.memory_space<vmem>>, vector<8x128xf32>
    tpu.vector_store %arg7[%c0_6, %c0_7], %7 {strides = array<i32>} : memref<8x128xf32, #tpu.memory_space<vmem>>, vector<8x128xf32>,
    %c0_i32_8 = arith.constant 0 : i32
    %9 = arith.cmpi eq, %arg2, %c0_i32_8 : i32
    %10 = arith.extui %9 : i1 to i32
    %c0_i32_9 = arith.constant 0 : i32
    %11 = arith.cmpi ne, %10, %c0_i32_9 : i32
    scf.if %11 {
      %c0_10 = arith.constant 0 : index
      %c0_11 = arith.constant 0 : index
      %12 = vector.load %arg7[%c0_10, %c0_11] : memref<8x128xf32, #tpu.memory_space<vmem>>, vector<8x128xf32>
      %c0_12 = arith.constant 0 : index
      %c0_13 = arith.constant 0 : index
      %13 = vector.load %arg5[%c0_12, %c0_13] : memref<1x128xf32, #tpu.memory_space<vmem>>, vector<1x128xf32>
      %14 = vector.broadcast %13 : vector<1x128xf32> to vector<8x128xf32>
      %15 = arith.addf %12, %14 : vector<8x128xf32>
      %cst_14 = arith.constant 0.000000e+00 : f32
      %16 = vector.broadcast %cst_14 : f32 to vector<8x128xf32>
      %17 = arith.maximumf %15, %16 : vector<8x128xf32>
      %c0_15 = arith.constant 0 : index
      %c0_16 = arith.constant 0 : index
      %18 = vector.load %arg6[%c0_15, %c0_16] : memref<8x128xf32, #tpu.memory_space<vmem>>, vector<8x128xf32>
      tpu.vector_store %arg6[%c0_15, %c0_16], %17 {strides = array<i32>} : memref<8x128xf32, #tpu.memory_space<vmem>>, vector<8x128xf32>,
    } else {
    }
    return
  }
  func.func @transform_0(%arg0: i32, %arg1: i32, %arg2: i32) -> (i32, i32) {
    %c0_i32 = arith.constant 0 : i32
    return %arg0, %arg2 : i32, i32
  }
  func.func @transform_1(%arg0: i32, %arg1: i32, %arg2: i32) -> (i32, i32) {
    %c0_i32 = arith.constant 0 : i32
    return %arg2, %arg1 : i32, i32
  }
  func.func @transform_2(%arg0: i32, %arg1: i32, %arg2: i32) -> (i32, i32) {
    %c0_i32 = arith.constant 0 : i32
    %c0_i32_0 = arith.constant 0 : i32
    return %c0_i32, %arg1 : i32, i32
  }
  func.func @transform_3(%arg0: i32, %arg1: i32, %arg2: i32) -> (i32, i32) {
    %c0_i32 = arith.constant 0 : i32
    return %arg0, %arg1 : i32, i32
  }
}

module attributes {stable_mosaic.version = 11 : i64} {
  func.func @_matmul_bias_act_kernel(%arg0: i32, %arg1: i32, %arg2: i32, %arg3: memref<32x128xbf16, #tpu.memory_space<vmem>>, %arg4: memref<128x128xbf16, #tpu.memory_space<vmem>>, %arg5: memref<1x128xf32, #tpu.memory_space<vmem>>, %arg6: memref<32x128xf32, #tpu.memory_space<vmem>>, %arg7: memref<32x128xf32, #tpu.memory_space<vmem>>) attributes {dimension_semantics = [#tpu.dimension_semantics<parallel>, #tpu.dimension_semantics<parallel>, #tpu.dimension_semantics<arbitrary>], iteration_bounds = array<i64: 1, 1, 1>, scalar_prefetch = 0 : i64, scratch_operands = 1 : i64, tpu.core_type = #tpu.core_type<tc>, window_params = [{transform_indices = @transform_0, window_bounds = array<i64: 32, 128>}, {transform_indices = @transform_1, window_bounds = array<i64: 128, 128>}, {transform_indices = @transform_2, window_bounds = array<i64: 1, 128>}, {transform_indices = @transform_3, window_bounds = array<i64: 32, 128>}]} {
    %c0_i32 = arith.constant 0 : i32
    %0 = arith.cmpi eq, %arg2, %c0_i32 : i32
    %1 = arith.extui %0 : i1 to i32
    %c0_i32_0 = arith.constant 0 : i32
    %2 = arith.cmpi ne, %1, %c0_i32_0 : i32
    scf.if %2 {
      %cst_10 = arith.constant 0.000000e+00 : f32
      %12 = vector.broadcast %cst_10 : f32 to vector<32x128xf32>
      %c0_11 = arith.constant 0 : index
      %c0_12 = arith.constant 0 : index
      %13 = vector.load %arg7[%c0_11, %c0_12] : memref<32x128xf32, #tpu.memory_space<vmem>>, vector<32x128xf32>
      tpu.vector_store %arg7[%c0_11, %c0_12], %12 {strides = array<i32>} : memref<32x128xf32, #tpu.memory_space<vmem>>, vector<32x128xf32>,
    } else {
    }
    %c0 = arith.constant 0 : index
    %c0_1 = arith.constant 0 : index
    %3 = vector.load %arg7[%c0, %c0_1] : memref<32x128xf32, #tpu.memory_space<vmem>>, vector<32x128xf32>
    %c0_2 = arith.constant 0 : index
    %c0_3 = arith.constant 0 : index
    %4 = vector.load %arg3[%c0_2, %c0_3] : memref<32x128xbf16, #tpu.memory_space<vmem>>, vector<32x128xbf16>
    %c0_4 = arith.constant 0 : index
    %c0_5 = arith.constant 0 : index
    %5 = vector.load %arg4[%c0_4, %c0_5] : memref<128x128xbf16, #tpu.memory_space<vmem>>, vector<128x128xbf16>
    %cst = arith.constant dense<0.000000e+00> : vector<32x128xf32>
    %6 = tpu.matmul %4, %5, %cst {dimension_numbers = #tpu.dot_dimension_numbers<[1], [0], [0], [1], [0, 0, 1, 1], [], []>} : vector<32x128xbf16>, vector<128x128xbf16>, vector<32x128xf32> -> vector<32x128xf32>
    %7 = arith.addf %3, %6 : vector<32x128xf32>
    %c0_6 = arith.constant 0 : index
    %c0_7 = arith.constant 0 : index
    %8 = vector.load %arg7[%c0_6, %c0_7] : memref<32x128xf32, #tpu.memory_space<vmem>>, vector<32x128xf32>
    tpu.vector_store %arg7[%c0_6, %c0_7], %7 {strides = array<i32>} : memref<32x128xf32, #tpu.memory_space<vmem>>, vector<32x128xf32>,
    %c0_i32_8 = arith.constant 0 : i32
    %9 = arith.cmpi eq, %arg2, %c0_i32_8 : i32
    %10 = arith.extui %9 : i1 to i32
    %c0_i32_9 = arith.constant 0 : i32
    %11 = arith.cmpi ne, %10, %c0_i32_9 : i32
    scf.if %11 {
      %c0_10 = arith.constant 0 : index
      %c0_11 = arith.constant 0 : index
      %12 = vector.load %arg7[%c0_10, %c0_11] : memref<32x128xf32, #tpu.memory_space<vmem>>, vector<32x128xf32>
      %c0_12 = arith.constant 0 : index
      %c0_13 = arith.constant 0 : index
      %13 = vector.load %arg5[%c0_12, %c0_13] : memref<1x128xf32, #tpu.memory_space<vmem>>, vector<1x128xf32>
      %14 = vector.broadcast %13 : vector<1x128xf32> to vector<32x128xf32>
      %15 = arith.addf %12, %14 : vector<32x128xf32>
      %cst_14 = arith.constant 0.000000e+00 : f32
      %16 = vector.broadcast %cst_14 : f32 to vector<32x128xf32>
      %17 = arith.maximumf %15, %16 : vector<32x128xf32>
      %c0_15 = arith.constant 0 : index
      %c0_16 = arith.constant 0 : index
      %18 = vector.load %arg6[%c0_15, %c0_16] : memref<32x128xf32, #tpu.memory_space<vmem>>, vector<32x128xf32>
      tpu.vector_store %arg6[%c0_15, %c0_16], %17 {strides = array<i32>} : memref<32x128xf32, #tpu.memory_space<vmem>>, vector<32x128xf32>,
    } else {
    }
    return
  }
  func.func @transform_0(%arg0: i32, %arg1: i32, %arg2: i32) -> (i32, i32) {
    %c0_i32 = arith.constant 0 : i32
    return %arg0, %arg2 : i32, i32
  }
  func.func @transform_1(%arg0: i32, %arg1: i32, %arg2: i32) -> (i32, i32) {
    %c0_i32 = arith.constant 0 : i32
    return %arg2, %arg1 : i32, i32
  }
  func.func @transform_2(%arg0: i32, %arg1: i32, %arg2: i32) -> (i32, i32) {
    %c0_i32 = arith.constant 0 : i32
    %c0_i32_0 = arith.constant 0 : i32
    return %c0_i32, %arg1 : i32, i32
  }
  func.func @transform_3(%arg0: i32, %arg1: i32, %arg2: i32) -> (i32, i32) {
    %c0_i32 = arith.constant 0 : i32
    return %arg0, %arg1 : i32, i32
  }
}

module attributes {stable_mosaic.version = 11 : i64} {
  func.func @_matmul_bias_act_kernel(%arg0: i32, %arg1: i32, %arg2: i32, %arg3: memref<128x128xbf16, #tpu.memory_space<vmem>>, %arg4: memref<128x128xbf16, #tpu.memory_space<vmem>>, %arg5: memref<1x128xf32, #tpu.memory_space<vmem>>, %arg6: memref<128x128xf32, #tpu.memory_space<vmem>>, %arg7: memref<128x128xf32, #tpu.memory_space<vmem>>) attributes {dimension_semantics = [#tpu.dimension_semantics<parallel>, #tpu.dimension_semantics<parallel>, #tpu.dimension_semantics<arbitrary>], iteration_bounds = array<i64: 1, 1, 1>, scalar_prefetch = 0 : i64, scratch_operands = 1 : i64, tpu.core_type = #tpu.core_type<tc>, window_params = [{transform_indices = @transform_0, window_bounds = array<i64: 128, 128>}, {transform_indices = @transform_1, window_bounds = array<i64: 128, 128>}, {transform_indices = @transform_2, window_bounds = array<i64: 1, 128>}, {transform_indices = @transform_3, window_bounds = array<i64: 128, 128>}]} {
    %c0_i32 = arith.constant 0 : i32
    %0 = arith.cmpi eq, %arg2, %c0_i32 : i32
    %1 = arith.extui %0 : i1 to i32
    %c0_i32_0 = arith.constant 0 : i32
    %2 = arith.cmpi ne, %1, %c0_i32_0 : i32
    scf.if %2 {
      %cst_10 = arith.constant 0.000000e+00 : f32
      %12 = vector.broadcast %cst_10 : f32 to vector<128x128xf32>
      %c0_11 = arith.constant 0 : index
      %c0_12 = arith.constant 0 : index
      %13 = vector.load %arg7[%c0_11, %c0_12] : memref<128x128xf32, #tpu.memory_space<vmem>>, vector<128x128xf32>
      tpu.vector_store %arg7[%c0_11, %c0_12], %12 {strides = array<i32>} : memref<128x128xf32, #tpu.memory_space<vmem>>, vector<128x128xf32>,
    } else {
    }
    %c0 = arith.constant 0 : index
    %c0_1 = arith.constant 0 : index
    %3 = vector.load %arg7[%c0, %c0_1] : memref<128x128xf32, #tpu.memory_space<vmem>>, vector<128x128xf32>
    %c0_2 = arith.constant 0 : index
    %c0_3 = arith.constant 0 : index
    %4 = vector.load %arg3[%c0_2, %c0_3] : memref<128x128xbf16, #tpu.memory_space<vmem>>, vector<128x128xbf16>
    %c0_4 = arith.constant 0 : index
    %c0_5 = arith.constant 0 : index
    %5 = vector.load %arg4[%c0_4, %c0_5] : memref<128x128xbf16, #tpu.memory_space<vmem>>, vector<128x128xbf16>
    %cst = arith.constant dense<0.000000e+00> : vector<128x128xf32>
    %6 = tpu.matmul %4, %5, %cst {dimension_numbers = #tpu.dot_dimension_numbers<[1], [0], [0], [1], [0, 0, 1, 1], [], []>} : vector<128x128xbf16>, vector<128x128xbf16>, vector<128x128xf32> -> vector<128x128xf32>
    %7 = arith.addf %3, %6 : vector<128x128xf32>
    %c0_6 = arith.constant 0 : index
    %c0_7 = arith.constant 0 : index
    %8 = vector.load %arg7[%c0_6, %c0_7] : memref<128x128xf32, #tpu.memory_space<vmem>>, vector<128x128xf32>
    tpu.vector_store %arg7[%c0_6, %c0_7], %7 {strides = array<i32>} : memref<128x128xf32, #tpu.memory_space<vmem>>, vector<128x128xf32>,
    %c0_i32_8 = arith.constant 0 : i32
    %9 = arith.cmpi eq, %arg2, %c0_i32_8 : i32
    %10 = arith.extui %9 : i1 to i32
    %c0_i32_9 = arith.constant 0 : i32
    %11 = arith.cmpi ne, %10, %c0_i32_9 : i32
    scf.if %11 {
      %c0_10 = arith.constant 0 : index
      %c0_11 = arith.constant 0 : index
      %12 = vector.load %arg7[%c0_10, %c0_11] : memref<128x128xf32, #tpu.memory_space<vmem>>, vector<128x128xf32>
      %c0_12 = arith.constant 0 : index
      %c0_13 = arith.constant 0 : index
      %13 = vector.load %arg5[%c0_12, %c0_13] : memref<1x128xf32, #tpu.memory_space<vmem>>, vector<1x128xf32>
      %14 = vector.broadcast %13 : vector<1x128xf32> to vector<128x128xf32>
      %15 = arith.addf %12, %14 : vector<128x128xf32>
      %16 = arith.negf %15 : vector<128x128xf32>
      %17 = math.exp %16 : vector<128x128xf32>
      %cst_14 = arith.constant 1.000000e+00 : f32
      %18 = vector.broadcast %cst_14 : f32 to vector<128x128xf32>
      %19 = arith.addf %18, %17 : vector<128x128xf32>
      %20 = arith.divf %18, %19 : vector<128x128xf32>
      %c0_15 = arith.constant 0 : index
      %c0_16 = arith.constant 0 : index
      %21 = vector.load %arg6[%c0_15, %c0_16] : memref<128x128xf32, #tpu.memory_space<vmem>>, vector<128x128xf32>
      tpu.vector_store %arg6[%c0_15, %c0_16], %20 {strides = array<i32>} : memref<128x128xf32, #tpu.memory_space<vmem>>, vector<128x128xf32>,
    } else {
    }
    return
  }
  func.func @transform_0(%arg0: i32, %arg1: i32, %arg2: i32) -> (i32, i32) {
    %c0_i32 = arith.constant 0 : i32
    return %arg0, %arg2 : i32, i32
  }
  func.func @transform_1(%arg0: i32, %arg1: i32, %arg2: i32) -> (i32, i32) {
    %c0_i32 = arith.constant 0 : i32
    return %arg2, %arg1 : i32, i32
  }
  func.func @transform_2(%arg0: i32, %arg1: i32, %arg2: i32) -> (i32, i32) {
    %c0_i32 = arith.constant 0 : i32
    %c0_i32_0 = arith.constant 0 : i32
    return %c0_i32, %arg1 : i32, i32
  }
  func.func @transform_3(%arg0: i32, %arg1: i32, %arg2: i32) -> (i32, i32) {
    %c0_i32 = arith.constant 0 : i32
    return %arg0, %arg1 : i32, i32
  }
}

</mosaic_0001>

<llo_original>
// kernel: tile.22
$region0: #{tile.22}
  #allocation0 [shape = 's32[1]{0}', space=sflag, size = 0x4, scoped, tag = 'scoped memory for tile.22']
  %s0 = inlined_call_operand.vmem [shape: f32[32], index: 0, kind: input, shape index: {}]
  %s1 = inlined_call_operand.vmem [shape: f32[4,32], index: 1, kind: output, shape index: {}]
  // Predicated region
  $region2: #{tile.22} parent=0 // pred_check
    _
  $region3: #{tile.22} parent=0 // pred_check_branch
    %3 = sbr.rel (0) target = $region5
  $region4: #{tile.22} parent=0 // pred_region
    _
  $region5: #{tile.22} parent=0 // pred_fallthru
    _
  %v4 = vld [vmem:[%s0] ss:$0 sm:$0xff]
  %5 = vst [vmem:[%s1] sm:$0xf] %v4

// kernel: tile.18
$region0: #{tile.18}
  #allocation0 [shape = 's32[1]{0}', space=sflag, size = 0x4, scoped, tag = 'scoped memory for tile.18']
  %s0 = inlined_call_operand.vmem [shape: f32[64], index: 0, kind: input, shape index: {}]
  %s1 = inlined_call_operand.vmem [shape: f32[4,64], index: 1, kind: output, shape index: {}]
  // Predicated region
  $region2: #{tile.18} parent=0 // pred_check
    _
  $region3: #{tile.18} parent=0 // pred_check_branch
    %3 = sbr.rel (0) target = $region5
  $region4: #{tile.18} parent=0 // pred_region
    _
  $region5: #{tile.18} parent=0 // pred_fallthru
    _
  %v4 = vld [vmem:[%s0] ss:$0 sm:$0xff]
  %5 = vst [vmem:[%s1] sm:$0xf] %v4

// kernel: tile.26
$region0: #{tile.26}
  #allocation0 [shape = 's32[1]{0}', space=sflag, size = 0x4, scoped, tag = 'scoped memory for tile.26']
  %s0 = inlined_call_operand.vmem [shape: f32[16], index: 0, kind: input, shape index: {}]
  %s1 = inlined_call_operand.vmem [shape: f32[4,16], index: 1, kind: output, shape index: {}]
  // Predicated region
  $region2: #{tile.26} parent=0 // pred_check
    _
  $region3: #{tile.26} parent=0 // pred_check_branch
    %3 = sbr.rel (0) target = $region5
  $region4: #{tile.26} parent=0 // pred_region
    _
  $region5: #{tile.26} parent=0 // pred_fallthru
    _
  %v4 = vld [vmem:[%s0] ss:$0 sm:$0xff]
  %5 = vst [vmem:[%s1] sm:$0xf] %v4

// kernel: tile.27
$region0: #{tile.27}
  %s0 = inlined_call_operand.vmem [shape: f32[4,16], index: 0, kind: input, shape index: {}]
  %s1 = inlined_call_operand.vmem [shape: f32[64], index: 1, kind: output, shape index: {}]
  $region1: #{tile.27} parent=0
    #allocation0 [shape = 'u8[4096]{0}', space=vmem, size = 0x1000, scoped, tag = 'scoped mem for output reshape']
    #allocation1 [shape = 'u8[4096]{0}', space=vmem, size = 0x1000, scoped, tag = 'scoped mem for input reshape']
    %s3 = ssub.s32 16, 1
    %v4 = vld [vmem:[%s0] sm:%s3]
    %5 = vst [vmem:[#allocation1] sm:%s3] %v4
    %v6 = vld [vmem:[#allocation1] sm:$0x1]
    %vm7 = vcmask 130048
    %8 = vst.msk [vmem:[#allocation0] sm:$0x1] %vm7, %v6
    %s9 = scalar_lea.vmem [#allocation1], 3
    %v10 = vld [vmem:[%s9] sm:$0x1]
    %11 = vrot.lane.b32.xlu0 %v10, 48
    %v12 = vpop.permute.xlu0 %11
    %vm13 = vcmask 523648
    %14 = vst.msk [vmem:[#allocation0] sm:$0x1] %vm13, %v12
    %s15 = scalar_lea.vmem [#allocation1], 2
    %v16 = vld [vmem:[%s15] sm:$0x1]
    %17 = vrot.lane.b32.xlu0 %v16, 32
    %v18 = vpop.permute.xlu0 %17
    %vm19 = vcmask 392448
    %20 = vst.msk [vmem:[#allocation0] sm:$0x1] %vm19, %v18
    %s21 = scalar_lea.vmem [#allocation1], 1
    %v22 = vld [vmem:[%s21] sm:$0x1]
    %23 = vrot.lane.b32.xlu0 %v22, 16
    %v24 = vpop.permute.xlu0 %23
    %vm25 = vcmask 261248
    %26 = vst.msk [vmem:[#allocation0] sm:$0x1] %vm25, %v24
    %s28 = ssub.s32 2, 1
    %v29 = vld [vmem:[#allocation0] sm:%s28]
    %s31 = ssub.s32 2, 1
    %32 = vst [vmem:[%s1] sm:%s31] %v29

// kernel: tile.30
$region0: #{tile.30}
  #allocation0 [shape = 's32[1]{0}', space=sflag, size = 0x4, scoped, tag = 'scoped memory for tile.30']
  %s0 = inlined_call_operand.vmem [shape: f32[3], index: 0, kind: input, shape index: {}]
  %s1 = inlined_call_operand.vmem [shape: f32[4,3], index: 1, kind: output, shape index: {}]
  // Predicated region
  $region2: #{tile.30} parent=0 // pred_check
    _
  $region3: #{tile.30} parent=0 // pred_check_branch
    %3 = sbr.rel (0) target = $region5
  $region4: #{tile.30} parent=0 // pred_region
    _
  $region5: #{tile.30} parent=0 // pred_fallthru
    _
  %v4 = vld [vmem:[%s0] ss:$0 sm:$0xff]
  %5 = vst [vmem:[%s1] sm:$0xf] %v4

// kernel: tile.31
$region0: #{tile.31}
  %s0 = inlined_call_operand.vmem [shape: f32[4,3], index: 0, kind: input, shape index: {}]
  %s1 = inlined_call_operand.vmem [shape: f32[12], index: 1, kind: output, shape index: {}]
  $region1: #{tile.31} parent=0
    #allocation0 [shape = 'u8[4096]{0}', space=vmem, size = 0x1000, scoped, tag = 'scoped mem for output reshape']
    #allocation1 [shape = 'u8[4096]{0}', space=vmem, size = 0x1000, scoped, tag = 'scoped mem for input reshape']
    %s3 = ssub.s32 16, 1
    %v4 = vld [vmem:[%s0] sm:%s3]
    %5 = vst [vmem:[#allocation1] sm:%s3] %v4
    %v6 = vld [vmem:[#allocation1] sm:$0x1]
    %vm7 = vcmask 23552
    %8 = vst.msk [vmem:[#allocation0] sm:$0x1] %vm7, %v6
    %s9 = scalar_lea.vmem [#allocation1], 3
    %v10 = vld [vmem:[%s9] sm:$0x1]
    %11 = vrot.lane.b32.xlu0 %v10, 9
    %v12 = vpop.permute.xlu0 %11
    %vm13 = vcmask 97352
    %14 = vst.msk [vmem:[#allocation0] sm:$0x1] %vm13, %v12
    %s15 = scalar_lea.vmem [#allocation1], 2
    %v16 = vld [vmem:[%s15] sm:$0x1]
    %17 = vrot.lane.b32.xlu0 %v16, 6
    %v18 = vpop.permute.xlu0 %17
    %vm19 = vcmask 72752
    %20 = vst.msk [vmem:[#allocation0] sm:$0x1] %vm19, %v18
    %s21 = scalar_lea.vmem [#allocation1], 1
    %v22 = vld [vmem:[%s21] sm:$0x1]
    %23 = vrot.lane.b32.xlu0 %v22, 3
    %v24 = vpop.permute.xlu0 %23
    %vm25 = vcmask 48152
    %26 = vst.msk [vmem:[#allocation0] sm:$0x1] %vm25, %v24
    %s28 = ssub.s32 2, 1
    %v29 = vld [vmem:[#allocation0] sm:%s28]
    %s31 = ssub.s32 2, 1
    %32 = vst [vmem:[%s1] sm:%s31] %v29

// kernel: _lambda_.10
$region0: #{_lambda_.10}
  #allocation0 [shape = 'u32[]', space=smem, size = 0x4, offset = 0x4, fixed_abs, tag = 'smem constant byte address 0x4 - core index']
  #allocation1 [shape = 'u32[72,128]{1,0:T(1,128)}', space=vmem, size = 0x9000, scoped, tag = 'internal scratch']
  #allocation2 [shape = 'f32[128,128]{1,0:T(8,128)}', space=vmem, size = 0x10000, scoped, tag = 'scratch operand']
  %s0 = inlined_call_operand.vmem [shape: bf16[128,128], index: 0, kind: input, shape index: {}]
  %s1 = inlined_call_operand.vmem [shape: bf16[128,128], index: 1, kind: input, shape index: {}]
  %s2 = inlined_call_operand.vmem [shape: f32[1,128], index: 2, kind: input, shape index: {}]
  %s3 = inlined_call_operand.vmem [shape: f32[128,128], index: 3, kind: output, shape index: {}]
  %s4 = sld [smem:[#allocation0]]
  $region30: #{_lambda_.10} parent=0
    _
  %s6 = ssub.s32 1, %s4
  %s7 = scalar_select 0, %s6, %s4
  // Predicated region
  $region2: #{_lambda_.10} parent=0 // pred_check
    _
  $region3: #{_lambda_.10} parent=0 // pred_check_branch
    %9 = sbr.rel (0) target = $region5
  $region4: #{_lambda_.10} parent=0 // pred_region
    _
  $region5: #{_lambda_.10} parent=0 // pred_fallthru
    _
  // Predicated region
  $region6: #{_lambda_.10} parent=0 // pred_check
    _
  $region7: #{_lambda_.10} parent=0 // pred_check_branch
    %11 = sbr.rel (0) target = $region9
  $region8: #{_lambda_.10} parent=0 // pred_region
    _
  $region9: #{_lambda_.10} parent=0 // pred_fallthru
    _
  // Predicated region
  $region10: #{_lambda_.10} parent=0 // pred_check
    _
  $region11: #{_lambda_.10} parent=0 // pred_check_branch
    %13 = sbr.rel (0) target = $region13
  $region12: #{_lambda_.10} parent=0 // pred_region
    _
  $region13: #{_lambda_.10} parent=0 // pred_fallthru
    _
  %p14 = scmp.eq.s32.totalorder 0, 0
  // Predicated region
  $region14: #{_lambda_.10} parent=0 // pred_check
    %p15 = pneg %p14
  $region15: #{_lambda_.10} parent=0 // pred_check_branch
    %17 = sbr.rel (%p15) target = $region17
  $region16: #{_lambda_.10} parent=0 // pred_region
    %18 = vst [vmem:[#allocation2] sm:$0xff] 0.0
    %19 = vst [vmem:[#allocation2 + $0x8] sm:$0xff] 0.0
    %20 = vst [vmem:[#allocation2 + $0x10] sm:$0xff] 0.0
    %21 = vst [vmem:[#allocation2 + $0x18] sm:$0xff] 0.0
    %22 = vst [vmem:[#allocation2 + $0x20] sm:$0xff] 0.0
    %23 = vst [vmem:[#allocation2 + $0x28] sm:$0xff] 0.0
    %24 = vst [vmem:[#allocation2 + $0x30] sm:$0xff] 0.0
    %25 = vst [vmem:[#allocation2 + $0x38] sm:$0xff] 0.0
    %26 = vst [vmem:[#allocation2 + $0x40] sm:$0xff] 0.0
    %27 = vst [vmem:[#allocation2 + $0x48] sm:$0xff] 0.0
    %28 = vst [vmem:[#allocation2 + $0x50] sm:$0xff] 0.0
    %29 = vst [vmem:[#allocation2 + $0x58] sm:$0xff] 0.0
    %30 = vst [vmem:[#allocation2 + $0x60] sm:$0xff] 0.0
    %31 = vst [vmem:[#allocation2 + $0x68] sm:$0xff] 0.0
    %32 = vst [vmem:[#allocation2 + $0x70] sm:$0xff] 0.0
    %33 = vst [vmem:[#allocation2 + $0x78] sm:$0xff] 0.0
  $region17: #{_lambda_.10} parent=0 // pred_fallthru
    _
  %v34 = vld [vmem:[#allocation2] sm:$0xff]
  %v35 = vld [vmem:[#allocation2 + $0x8] sm:$0xff]
  %v36 = vld [vmem:[#allocation2 + $0x10] sm:$0xff]
  %v37 = vld [vmem:[#allocation2 + $0x18] sm:$0xff]
  %v38 = vld [vmem:[#allocation2 + $0x20] sm:$0xff]
  %v39 = vld [vmem:[#allocation2 + $0x28] sm:$0xff]
  %v40 = vld [vmem:[#allocation2 + $0x30] sm:$0xff]
  %v41 = vld [vmem:[#allocation2 + $0x38] sm:$0xff]
  %v42 = vld [vmem:[#allocation2 + $0x40] sm:$0xff]
  %v43 = vld [vmem:[#allocation2 + $0x48] sm:$0xff]
  %v44 = vld [vmem:[#allocation2 + $0x50] sm:$0xff]
  %v45 = vld [vmem:[#allocation2 + $0x58] sm:$0xff]
  %v46 = vld [vmem:[#allocation2 + $0x60] sm:$0xff]
  %v47 = vld [vmem:[#allocation2 + $0x68] sm:$0xff]
  %v48 = vld [vmem:[#allocation2 + $0x70] sm:$0xff]
  %v49 = vld [vmem:[#allocation2 + $0x78] sm:$0xff]
  %v50 = vld [vmem:[%s0] sm:$0xf]
  %v51 = vld [vmem:[%s0 + $0x4] sm:$0xf]
  %v52 = vld [vmem:[%s0 + $0x8] sm:$0xf]
  %v53 = vld [vmem:[%s0 + $0xc] sm:$0xf]
  %v54 = vld [vmem:[%s0 + $0x10] sm:$0xf]
  %v55 = vld [vmem:[%s0 + $0x14] sm:$0xf]
  %v56 = vld [vmem:[%s0 + $0x18] sm:$0xf]
  %v57 = vld [vmem:[%s0 + $0x1c] sm:$0xf]
  %v58 = vld [vmem:[%s0 + $0x20] sm:$0xf]
  %v59 = vld [vmem:[%s0 + $0x24] sm:$0xf]
  %v60 = vld [vmem:[%s0 + $0x28] sm:$0xf]
  %v61 = vld [vmem:[%s0 + $0x2c] sm:$0xf]
  %v62 = vld [vmem:[%s0 + $0x30] sm:$0xf]
  %v63 = vld [vmem:[%s0 + $0x34] sm:$0xf]
  %v64 = vld [vmem:[%s0 + $0x38] sm:$0xf]
  %v65 = vld [vmem:[%s0 + $0x3c] sm:$0xf]
  %v66 = vld [vmem:[%s1] sm:$0xf]
  %v67 = vld [vmem:[%s1 + $0x4] sm:$0xf]
  %v68 = vld [vmem:[%s1 + $0x8] sm:$0xf]
  %v69 = vld [vmem:[%s1 + $0xc] sm:$0xf]
  %v70 = vld [vmem:[%s1 + $0x10] sm:$0xf]
  %v71 = vld [vmem:[%s1 + $0x14] sm:$0xf]
  %v72 = vld [vmem:[%s1 + $0x18] sm:$0xf]
  %v73 = vld [vmem:[%s1 + $0x1c] sm:$0xf]
  %v74 = vld [vmem:[%s1 + $0x20] sm:$0xf]
  %v75 = vld [vmem:[%s1 + $0x24] sm:$0xf]
  %v76 = vld [vmem:[%s1 + $0x28] sm:$0xf]
  %v77 = vld [vmem:[%s1 + $0x2c] sm:$0xf]
  %v78 = vld [vmem:[%s1 + $0x30] sm:$0xf]
  %v79 = vld [vmem:[%s1 + $0x34] sm:$0xf]
  %v80 = vld [vmem:[%s1 + $0x38] sm:$0xf]
  %v81 = vld [vmem:[%s1 + $0x3c] sm:$0xf]
  %v98 = vunpack.c.l.b16 %v50
  %v99 = vunpack.c.l.b16 %v51
  %v100 = vunpack.c.l.b16 %v52
  %v101 = vunpack.c.l.b16 %v53
  %v102 = vunpack.c.l.b16 %v54
  %v103 = vunpack.c.l.b16 %v55
  %v104 = vunpack.c.l.b16 %v56
  %v105 = vunpack.c.l.b16 %v57
  %v106 = vunpack.c.l.b16 %v58
  %v107 = vunpack.c.l.b16 %v59
  %v108 = vunpack.c.l.b16 %v60
  %v109 = vunpack.c.l.b16 %v61
  %v110 = vunpack.c.l.b16 %v62
  %v111 = vunpack.c.l.b16 %v63
  %v112 = vunpack.c.l.b16 %v64
  %v113 = vunpack.c.l.b16 %v65
  %v114 = vpack.c.b16 %v99, %v98
  %v115 = vpack.c.b16 %v101, %v100
  %v116 = vpack.c.b16 %v103, %v102
  %v117 = vpack.c.b16 %v105, %v104
  %v118 = vpack.c.b16 %v107, %v106
  %v119 = vpack.c.b16 %v109, %v108
  %v120 = vpack.c.b16 %v111, %v110
  %v121 = vpack.c.b16 %v113, %v112
  %v146 = vunpack.c.l.b16 %v66
  %v147 = vunpack.c.l.b16 %v67
  %v148 = vunpack.c.l.b16 %v68
  %v149 = vunpack.c.l.b16 %v69
  %v150 = vunpack.c.l.b16 %v70
  %v151 = vunpack.c.l.b16 %v71
  %v152 = vunpack.c.l.b16 %v72
  %v153 = vunpack.c.l.b16 %v73
  %v154 = vunpack.c.l.b16 %v74
  %v155 = vunpack.c.l.b16 %v75
  %v156 = vunpack.c.l.b16 %v76
  %v157 = vunpack.c.l.b16 %v77
  %v158 = vunpack.c.l.b16 %v78
  %v159 = vunpack.c.l.b16 %v79
  %v160 = vunpack.c.l.b16 %v80
  %v161 = vunpack.c.l.b16 %v81
  %v162 = vpack.c.b16 %v147, %v146
  %v163 = vpack.c.b16 %v149, %v148
  %v164 = vpack.c.b16 %v151, %v150
  %v165 = vpack.c.b16 %v153, %v152
  %v166 = vpack.c.b16 %v155, %v154
  %v167 = vpack.c.b16 %v157, %v156
  %v168 = vpack.c.b16 %v159, %v158
  %v169 = vpack.c.b16 %v161, %v160
  %178 = vmatpush.bf16.msra.mxu0 %v169
  %179 = vmatpush.bf16.msra.mxu0 %v168
  %180 = vmatpush.bf16.msra.mxu0 %v167
  %181 = vmatpush.bf16.msra.mxu0 %v166
  %182 = vmatpush.bf16.msra.mxu0 %v165
  %183 = vmatpush.bf16.msra.mxu0 %v164
  %184 = vmatpush.bf16.msra.mxu0 %v163
  %185 = vmatpush.bf16.msra.mxu0 %v162
  %186 = vmatmul.bf16.gmra.mxu0 %v114
  %v187 = vpop.f32.mrf.mxu0
  %v188 = vadd.f32 0.0, %v187
  %v189 = vpop.f32.mrf.mxu0
  %v190 = vadd.f32 0.0, %v189
  %191 = vmatmul.bf16.gmra.mxu0 %v115
  %v192 = vpop.f32.mrf.mxu0
  %v193 = vadd.f32 0.0, %v192
  %v194 = vpop.f32.mrf.mxu0
  %v195 = vadd.f32 0.0, %v194
  %196 = vmatmul.bf16.gmra.mxu0 %v116
  %v197 = vpop.f32.mrf.mxu0
  %v198 = vadd.f32 0.0, %v197
  %v199 = vpop.f32.mrf.mxu0
  %v200 = vadd.f32 0.0, %v199
  %201 = vmatmul.bf16.gmra.mxu0 %v117
  %v202 = vpop.f32.mrf.mxu0
  %v203 = vadd.f32 0.0, %v202
  %v204 = vpop.f32.mrf.mxu0
  %v205 = vadd.f32 0.0, %v204
  %206 = vmatmul.bf16.gmra.mxu0 %v118
  %v207 = vpop.f32.mrf.mxu0
  %v208 = vadd.f32 0.0, %v207
  %v209 = vpop.f32.mrf.mxu0
  %v210 = vadd.f32 0.0, %v209
  %211 = vmatmul.bf16.gmra.mxu0 %v119
  %v212 = vpop.f32.mrf.mxu0
  %v213 = vadd.f32 0.0, %v212
  %v214 = vpop.f32.mrf.mxu0
  %v215 = vadd.f32 0.0, %v214
  %216 = vmatmul.bf16.gmra.mxu0 %v120
  %v217 = vpop.f32.mrf.mxu0
  %v218 = vadd.f32 0.0, %v217
  %v219 = vpop.f32.mrf.mxu0
  %v220 = vadd.f32 0.0, %v219
  %221 = vmatmul.bf16.gmra.mxu0 %v121
  %v222 = vpop.f32.mrf.mxu0
  %v223 = vadd.f32 0.0, %v222
  %v224 = vpop.f32.mrf.mxu0
  %v225 = vadd.f32 0.0, %v224
  %226 = vdwg.mxu0
  %v227 = vadd.f32 %v34, %v188
  %v228 = vadd.f32 %v35, %v190
  %v229 = vadd.f32 %v36, %v193
  %v230 = vadd.f32 %v37, %v195
  %v231 = vadd.f32 %v38, %v198
  %v232 = vadd.f32 %v39, %v200
  %v233 = vadd.f32 %v40, %v203
  %v234 = vadd.f32 %v41, %v205
  %v235 = vadd.f32 %v42, %v208
  %v236 = vadd.f32 %v43, %v210
  %v237 = vadd.f32 %v44, %v213
  %v238 = vadd.f32 %v45, %v215
  %v239 = vadd.f32 %v46, %v218
  %v240 = vadd.f32 %v47, %v220
  %v241 = vadd.f32 %v48, %v223
  %v242 = vadd.f32 %v49, %v225
  %243 = vst [vmem:[#allocation2] sm:$0xff] %v227
  %244 = vst [vmem:[#allocation2 + $0x8] sm:$0xff] %v228
  %245 = vst [vmem:[#allocation2 + $0x10] sm:$0xff] %v229
  %246 = vst [vmem:[#allocation2 + $0x18] sm:$0xff] %v230
  %247 = vst [vmem:[#allocation2 + $0x20] sm:$0xff] %v231
  %248 = vst [vmem:[#allocation2 + $0x28] sm:$0xff] %v232
  %249 = vst [vmem:[#allocation2 + $0x30] sm:$0xff] %v233
  %250 = vst [vmem:[#allocation2 + $0x38] sm:$0xff] %v234
  %251 = vst [vmem:[#allocation2 + $0x40] sm:$0xff] %v235
  %252 = vst [vmem:[#allocation2 + $0x48] sm:$0xff] %v236
  %253 = vst [vmem:[#allocation2 + $0x50] sm:$0xff] %v237
  %254 = vst [vmem:[#allocation2 + $0x58] sm:$0xff] %v238
  %255 = vst [vmem:[#allocation2 + $0x60] sm:$0xff] %v239
  %256 = vst [vmem:[#allocation2 + $0x68] sm:$0xff] %v240
  %257 = vst [vmem:[#allocation2 + $0x70] sm:$0xff] %v241
  %258 = vst [vmem:[#allocation2 + $0x78] sm:$0xff] %v242
  // Predicated region
  $region18: #{_lambda_.10} parent=0 // pred_check
    %p259 = pneg %p14
  $region19: #{_lambda_.10} parent=0 // pred_check_branch
    %261 = sbr.rel (%p259) target = $region21
  $region20: #{_lambda_.10} parent=0 // pred_region
    %v262 = vld [vmem:[#allocation2] sm:$0xff]
    %v263 = vld [vmem:[#allocation2 + $0x8] sm:$0xff]
    %v264 = vld [vmem:[#allocation2 + $0x10] sm:$0xff]
    %v265 = vld [vmem:[#allocation2 + $0x18] sm:$0xff]
    %v266 = vld [vmem:[#allocation2 + $0x20] sm:$0xff]
    %v267 = vld [vmem:[#allocation2 + $0x28] sm:$0xff]
    %v268 = vld [vmem:[#allocation2 + $0x30] sm:$0xff]
    %v269 = vld [vmem:[#allocation2 + $0x38] sm:$0xff]
    %v270 = vld [vmem:[#allocation2 + $0x40] sm:$0xff]
    %v271 = vld [vmem:[#allocation2 + $0x48] sm:$0xff]
    %v272 = vld [vmem:[#allocation2 + $0x50] sm:$0xff]
    %v273 = vld [vmem:[#allocation2 + $0x58] sm:$0xff]
    %v274 = vld [vmem:[#allocation2 + $0x60] sm:$0xff]
    %v275 = vld [vmem:[#allocation2 + $0x68] sm:$0xff]
    %v276 = vld [vmem:[#allocation2 + $0x70] sm:$0xff]
    %v277 = vld [vmem:[#allocation2 + $0x78] sm:$0xff]
    %v278 = vld [vmem:[%s2] sm:$0x1]
    %v280 = vperm.slane %v278, 0
    %v282 = vadd.f32 %v262, %v280
    %v283 = vadd.f32 %v263, %v280
    %v284 = vadd.f32 %v264, %v280
    %v285 = vadd.f32 %v265, %v280
    %v286 = vadd.f32 %v266, %v280
    %v287 = vadd.f32 %v267, %v280
    %v288 = vadd.f32 %v268, %v280
    %v289 = vadd.f32 %v269, %v280
    %v290 = vadd.f32 %v270, %v280
    %v291 = vadd.f32 %v271, %v280
    %v292 = vadd.f32 %v272, %v280
    %v293 = vadd.f32 %v273, %v280
    %v294 = vadd.f32 %v274, %v280
    %v295 = vadd.f32 %v275, %v280
    %v296 = vadd.f32 %v276, %v280
    %v297 = vadd.f32 %v277, %v280
    %v298 = vmax.f32 %v282, 0.0
    %v299 = vmax.f32 %v283, 0.0
    %v300 = vmax.f32 %v284, 0.0
    %v301 = vmax.f32 %v285, 0.0
    %v302 = vmax.f32 %v286, 0.0
    %v303 = vmax.f32 %v287, 0.0
    %v304 = vmax.f32 %v288, 0.0
    %v305 = vmax.f32 %v289, 0.0
    %v306 = vmax.f32 %v290, 0.0
    %v307 = vmax.f32 %v291, 0.0
    %v308 = vmax.f32 %v292, 0.0
    %v309 = vmax.f32 %v293, 0.0
    %v310 = vmax.f32 %v294, 0.0
    %v311 = vmax.f32 %v295, 0.0
    %v312 = vmax.f32 %v296, 0.0
    %v313 = vmax.f32 %v297, 0.0
    %314 = vst [vmem:[%s3] sm:$0xff] %v298
    %315 = vst [vmem:[%s3 + $0x8] sm:$0xff] %v299
    %316 = vst [vmem:[%s3 + $0x10] sm:$0xff] %v300
    %317 = vst [vmem:[%s3 + $0x18] sm:$0xff] %v301
    %318 = vst [vmem:[%s3 + $0x20] sm:$0xff] %v302
    %319 = vst [vmem:[%s3 + $0x28] sm:$0xff] %v303
    %320 = vst [vmem:[%s3 + $0x30] sm:$0xff] %v304
    %321 = vst [vmem:[%s3 + $0x38] sm:$0xff] %v305
    %322 = vst [vmem:[%s3 + $0x40] sm:$0xff] %v306
    %323 = vst [vmem:[%s3 + $0x48] sm:$0xff] %v307
    %324 = vst [vmem:[%s3 + $0x50] sm:$0xff] %v308
    %325 = vst [vmem:[%s3 + $0x58] sm:$0xff] %v309
    %326 = vst [vmem:[%s3 + $0x60] sm:$0xff] %v310
    %327 = vst [vmem:[%s3 + $0x68] sm:$0xff] %v311
    %328 = vst [vmem:[%s3 + $0x70] sm:$0xff] %v312
    %329 = vst [vmem:[%s3 + $0x78] sm:$0xff] %v313
  $region21: #{_lambda_.10} parent=0 // pred_fallthru
    _
  // Predicated region
  $region22: #{_lambda_.10} parent=0 // pred_check
    _
  $region23: #{_lambda_.10} parent=0 // pred_check_branch
    %331 = sbr.rel (0) target = $region25
  $region24: #{_lambda_.10} parent=0 // pred_region
    _
  $region25: #{_lambda_.10} parent=0 // pred_fallthru
    _
  // Predicated region
  $region26: #{_lambda_.10} parent=0 // pred_check
    _
  $region27: #{_lambda_.10} parent=0 // pred_check_branch
    %333 = sbr.rel (0) target = $region29
  $region28: #{_lambda_.10} parent=0 // pred_region
    _
  $region29: #{_lambda_.10} parent=0 // pred_fallthru
    _

// kernel: _lambda_.11
$region0: #{_lambda_.11}
  #allocation0 [shape = 'u32[]', space=smem, size = 0x4, offset = 0x4, fixed_abs, tag = 'smem constant byte address 0x4 - core index']
  #allocation1 [shape = 'u32[72,128]{1,0:T(1,128)}', space=vmem, size = 0x9000, scoped, tag = 'internal scratch']
  #allocation2 [shape = 'f32[32,128]{1,0:T(8,128)}', space=vmem, size = 0x4000, scoped, tag = 'scratch operand']
  %s0 = inlined_call_operand.vmem [shape: bf16[32,256], index: 0, kind: input, shape index: {}]
  %s1 = inlined_call_operand.vmem [shape: bf16[256,128], index: 1, kind: input, shape index: {}]
  %s2 = inlined_call_operand.vmem [shape: f32[1,128], index: 2, kind: input, shape index: {}]
  %s3 = inlined_call_operand.vmem [shape: f32[32,128], index: 3, kind: output, shape index: {}]
  %s4 = sld [smem:[#allocation0]]
  $region30: #{_lambda_.11} parent=0
    _
  %s6 = ssub.s32 1, %s4
  %s7 = scalar_select 0, %s6, %s4
  // Predicated region
  $region2: #{_lambda_.11} parent=0 // pred_check
    _
  $region3: #{_lambda_.11} parent=0 // pred_check_branch
    %9 = sbr.rel (0) target = $region5
  $region4: #{_lambda_.11} parent=0 // pred_region
    _
  $region5: #{_lambda_.11} parent=0 // pred_fallthru
    _
  // Predicated region
  $region6: #{_lambda_.11} parent=0 // pred_check
    _
  $region7: #{_lambda_.11} parent=0 // pred_check_branch
    %11 = sbr.rel (0) target = $region9
  $region8: #{_lambda_.11} parent=0 // pred_region
    _
  $region9: #{_lambda_.11} parent=0 // pred_fallthru
    _
  // Predicated region
  $region10: #{_lambda_.11} parent=0 // pred_check
    _
  $region11: #{_lambda_.11} parent=0 // pred_check_branch
    %13 = sbr.rel (0) target = $region13
  $region12: #{_lambda_.11} parent=0 // pred_region
    _
  $region13: #{_lambda_.11} parent=0 // pred_fallthru
    _
  %p14 = scmp.eq.s32.totalorder 0, 0
  // Predicated region
  $region14: #{_lambda_.11} parent=0 // pred_check
    %p15 = pneg %p14
  $region15: #{_lambda_.11} parent=0 // pred_check_branch
    %17 = sbr.rel (%p15) target = $region17
  $region16: #{_lambda_.11} parent=0 // pred_region
    %18 = vst [vmem:[#allocation2] sm:$0xff] 0.0
    %19 = vst [vmem:[#allocation2 + $0x8] sm:$0xff] 0.0
    %20 = vst [vmem:[#allocation2 + $0x10] sm:$0xff] 0.0
    %21 = vst [vmem:[#allocation2 + $0x18] sm:$0xff] 0.0
  $region17: #{_lambda_.11} parent=0 // pred_fallthru
    _
  %v22 = vld [vmem:[#allocation2] sm:$0xff]
  %v23 = vld [vmem:[#allocation2 + $0x8] sm:$0xff]
  %v24 = vld [vmem:[#allocation2 + $0x10] sm:$0xff]
  %v25 = vld [vmem:[#allocation2 + $0x18] sm:$0xff]
  %v26 = vld [vmem:[%s0] sm:$0xff]
  %v27 = vld [vmem:[%s0 + $0x8] sm:$0xff]
  %v28 = vld [vmem:[%s0 + $0x10] sm:$0xff]
  %v29 = vld [vmem:[%s0 + $0x18] sm:$0xff]
  %v30 = vld [vmem:[%s1] sm:$0xf]
  %v31 = vld [vmem:[%s1 + $0x4] sm:$0xf]
  %v32 = vld [vmem:[%s1 + $0x8] sm:$0xf]
  %v33 = vld [vmem:[%s1 + $0xc] sm:$0xf]
  %v34 = vld [vmem:[%s1 + $0x10] sm:$0xf]
  %v35 = vld [vmem:[%s1 + $0x14] sm:$0xf]
  %v36 = vld [vmem:[%s1 + $0x18] sm:$0xf]
  %v37 = vld [vmem:[%s1 + $0x1c] sm:$0xf]
  %v38 = vld [vmem:[%s1 + $0x20] sm:$0xf]
  %v39 = vld [vmem:[%s1 + $0x24] sm:$0xf]
  %v40 = vld [vmem:[%s1 + $0x28] sm:$0xf]
  %v41 = vld [vmem:[%s1 + $0x2c] sm:$0xf]
  %v42 = vld [vmem:[%s1 + $0x30] sm:$0xf]
  %v43 = vld [vmem:[%s1 + $0x34] sm:$0xf]
  %v44 = vld [vmem:[%s1 + $0x38] sm:$0xf]
  %v45 = vld [vmem:[%s1 + $0x3c] sm:$0xf]
  %v46 = vld [vmem:[%s1 + $0x40] sm:$0xf]
  %v47 = vld [vmem:[%s1 + $0x44] sm:$0xf]
  %v48 = vld [vmem:[%s1 + $0x48] sm:$0xf]
  %v49 = vld [vmem:[%s1 + $0x4c] sm:$0xf]
  %v50 = vld [vmem:[%s1 + $0x50] sm:$0xf]
  %v51 = vld [vmem:[%s1 + $0x54] sm:$0xf]
  %v52 = vld [vmem:[%s1 + $0x58] sm:$0xf]
  %v53 = vld [vmem:[%s1 + $0x5c] sm:$0xf]
  %v54 = vld [vmem:[%s1 + $0x60] sm:$0xf]
  %v55 = vld [vmem:[%s1 + $0x64] sm:$0xf]
  %v56 = vld [vmem:[%s1 + $0x68] sm:$0xf]
  %v57 = vld [vmem:[%s1 + $0x6c] sm:$0xf]
  %v58 = vld [vmem:[%s1 + $0x70] sm:$0xf]
  %v59 = vld [vmem:[%s1 + $0x74] sm:$0xf]
  %v60 = vld [vmem:[%s1 + $0x78] sm:$0xf]
  %v61 = vld [vmem:[%s1 + $0x7c] sm:$0xf]
  %v66 = vunpack.c.l.b16 %v26
  %v67 = vunpack.c.h.b16 %v26
  %v68 = vunpack.c.l.b16 %v27
  %v69 = vunpack.c.h.b16 %v27
  %v70 = vunpack.c.l.b16 %v28
  %v71 = vunpack.c.h.b16 %v28
  %v72 = vunpack.c.l.b16 %v29
  %v73 = vunpack.c.h.b16 %v29
  %v74 = vpack.c.b16 %v68, %v66
  %v75 = vpack.c.b16 %v69, %v67
  %v76 = vpack.c.b16 %v72, %v70
  %v77 = vpack.c.b16 %v73, %v71
  %v114 = vunpack.c.l.b16 %v30
  %v115 = vunpack.c.l.b16 %v31
  %v116 = vunpack.c.l.b16 %v32
  %v117 = vunpack.c.l.b16 %v33
  %v118 = vunpack.c.l.b16 %v34
  %v119 = vunpack.c.l.b16 %v35
  %v120 = vunpack.c.l.b16 %v36
  %v121 = vunpack.c.l.b16 %v37
  %v122 = vunpack.c.l.b16 %v38
  %v123 = vunpack.c.l.b16 %v39
  %v124 = vunpack.c.l.b16 %v40
  %v125 = vunpack.c.l.b16 %v41
  %v126 = vunpack.c.l.b16 %v42
  %v127 = vunpack.c.l.b16 %v43
  %v128 = vunpack.c.l.b16 %v44
  %v129 = vunpack.c.l.b16 %v45
  %v130 = vunpack.c.l.b16 %v46
  %v131 = vunpack.c.l.b16 %v47
  %v132 = vunpack.c.l.b16 %v48
  %v133 = vunpack.c.l.b16 %v49
  %v134 = vunpack.c.l.b16 %v50
  %v135 = vunpack.c.l.b16 %v51
  %v136 = vunpack.c.l.b16 %v52
  %v137 = vunpack.c.l.b16 %v53
  %v138 = vunpack.c.l.b16 %v54
  %v139 = vunpack.c.l.b16 %v55
  %v140 = vunpack.c.l.b16 %v56
  %v141 = vunpack.c.l.b16 %v57
  %v142 = vunpack.c.l.b16 %v58
  %v143 = vunpack.c.l.b16 %v59
  %v144 = vunpack.c.l.b16 %v60
  %v145 = vunpack.c.l.b16 %v61
  %v146 = vpack.c.b16 %v115, %v114
  %v147 = vpack.c.b16 %v117, %v116
  %v148 = vpack.c.b16 %v119, %v118
  %v149 = vpack.c.b16 %v121, %v120
  %v150 = vpack.c.b16 %v123, %v122
  %v151 = vpack.c.b16 %v125, %v124
  %v152 = vpack.c.b16 %v127, %v126
  %v153 = vpack.c.b16 %v129, %v128
  %v154 = vpack.c.b16 %v131, %v130
  %v155 = vpack.c.b16 %v133, %v132
  %v156 = vpack.c.b16 %v135, %v134
  %v157 = vpack.c.b16 %v137, %v136
  %v158 = vpack.c.b16 %v139, %v138
  %v159 = vpack.c.b16 %v141, %v140
  %v160 = vpack.c.b16 %v143, %v142
  %v161 = vpack.c.b16 %v145, %v144
  %178 = vmatpush.bf16.msra.mxu0 %v153
  %179 = vmatpush.bf16.msra.mxu0 %v152
  %180 = vmatpush.bf16.msra.mxu0 %v151
  %181 = vmatpush.bf16.msra.mxu0 %v150
  %182 = vmatpush.bf16.msra.mxu0 %v149
  %183 = vmatpush.bf16.msra.mxu0 %v148
  %184 = vmatpush.bf16.msra.mxu0 %v147
  %185 = vmatpush.bf16.msra.mxu0 %v146
  %186 = vmatmul.bf16.gmra.mxu0 %v74
  %v187 = vpop.f32.mrf.mxu0
  %v188 = vadd.f32 0.0, %v187
  %v189 = vpop.f32.mrf.mxu0
  %v190 = vadd.f32 0.0, %v189
  %191 = vmatmul.bf16.gmra.mxu0 %v76
  %v192 = vpop.f32.mrf.mxu0
  %v193 = vadd.f32 0.0, %v192
  %v194 = vpop.f32.mrf.mxu0
  %v195 = vadd.f32 0.0, %v194
  %196 = vdwg.mxu0
  %197 = vmatpush.bf16.msra.mxu0 %v161
  %198 = vmatpush.bf16.msra.mxu0 %v160
  %199 = vmatpush.bf16.msra.mxu0 %v159
  %200 = vmatpush.bf16.msra.mxu0 %v158
  %201 = vmatpush.bf16.msra.mxu0 %v157
  %202 = vmatpush.bf16.msra.mxu0 %v156
  %203 = vmatpush.bf16.msra.mxu0 %v155
  %204 = vmatpush.bf16.msra.mxu0 %v154
  %205 = vmatmul.bf16.gmra.mxu0 %v75
  %v206 = vpop.f32.mrf.mxu0
  %v207 = vadd.f32 %v188, %v206
  %v208 = vpop.f32.mrf.mxu0
  %v209 = vadd.f32 %v190, %v208
  %210 = vmatmul.bf16.gmra.mxu0 %v77
  %v211 = vpop.f32.mrf.mxu0
  %v212 = vadd.f32 %v193, %v211
  %v213 = vpop.f32.mrf.mxu0
  %v214 = vadd.f32 %v195, %v213
  %215 = vdwg.mxu0
  %v216 = vadd.f32 %v22, %v207
  %v217 = vadd.f32 %v23, %v209
  %v218 = vadd.f32 %v24, %v212
  %v219 = vadd.f32 %v25, %v214
  %220 = vst [vmem:[#allocation2] sm:$0xff] %v216
  %221 = vst [vmem:[#allocation2 + $0x8] sm:$0xff] %v217
  %222 = vst [vmem:[#allocation2 + $0x10] sm:$0xff] %v218
  %223 = vst [vmem:[#allocation2 + $0x18] sm:$0xff] %v219
  // Predicated region
  $region18: #{_lambda_.11} parent=0 // pred_check
    %p224 = pneg %p14
  $region19: #{_lambda_.11} parent=0 // pred_check_branch
    %226 = sbr.rel (%p224) target = $region21
  $region20: #{_lambda_.11} parent=0 // pred_region
    %v227 = vld [vmem:[#allocation2] sm:$0xff]
    %v228 = vld [vmem:[#allocation2 + $0x8] sm:$0xff]
    %v229 = vld [vmem:[#allocation2 + $0x10] sm:$0xff]
    %v230 = vld [vmem:[#allocation2 + $0x18] sm:$0xff]
    %v231 = vld [vmem:[%s2] sm:$0x1]
    %v233 = vperm.slane %v231, 0
    %v235 = vadd.f32 %v227, %v233
    %v236 = vadd.f32 %v228, %v233
    %v237 = vadd.f32 %v229, %v233
    %v238 = vadd.f32 %v230, %v233
    %v239 = vmax.f32 %v235, 0.0
    %v240 = vmax.f32 %v236, 0.0
    %v241 = vmax.f32 %v237, 0.0
    %v242 = vmax.f32 %v238, 0.0
    %243 = vst [vmem:[%s3] sm:$0xff] %v239
    %244 = vst [vmem:[%s3 + $0x8] sm:$0xff] %v240
    %245 = vst [vmem:[%s3 + $0x10] sm:$0xff] %v241
    %246 = vst [vmem:[%s3 + $0x18] sm:$0xff] %v242
  $region21: #{_lambda_.11} parent=0 // pred_fallthru
    _
  // Predicated region
  $region22: #{_lambda_.11} parent=0 // pred_check
    _
  $region23: #{_lambda_.11} parent=0 // pred_check_branch
    %248 = sbr.rel (0) target = $region25
  $region24: #{_lambda_.11} parent=0 // pred_region
    _
  $region25: #{_lambda_.11} parent=0 // pred_fallthru
    _
  // Predicated region
  $region26: #{_lambda_.11} parent=0 // pred_check
    _
  $region27: #{_lambda_.11} parent=0 // pred_check_branch
    %250 = sbr.rel (0) target = $region29
  $region28: #{_lambda_.11} parent=0 // pred_region
    _
  $region29: #{_lambda_.11} parent=0 // pred_fallthru
    _

// kernel: _lambda_.12
$region0: #{_lambda_.12}
  #allocation0 [shape = 'u32[]', space=smem, size = 0x4, offset = 0x4, fixed_abs, tag = 'smem constant byte address 0x4 - core index']
  #allocation1 [shape = 'u32[72,128]{1,0:T(1,128)}', space=vmem, size = 0x9000, scoped, tag = 'internal scratch']
  #allocation2 [shape = 'f32[8,128]{1,0:T(8,128)}', space=vmem, size = 0x1000, scoped, tag = 'scratch operand']
  %s0 = inlined_call_operand.vmem [shape: bf16[8,384], index: 0, kind: input, shape index: {}]
  %s1 = inlined_call_operand.vmem [shape: bf16[384,128], index: 1, kind: input, shape index: {}]
  %s2 = inlined_call_operand.vmem [shape: f32[1,128], index: 2, kind: input, shape index: {}]
  %s3 = inlined_call_operand.vmem [shape: f32[8,128], index: 3, kind: output, shape index: {}]
  %s4 = sld [smem:[#allocation0]]
  $region30: #{_lambda_.12} parent=0
    _
  %s6 = ssub.s32 1, %s4
  %s7 = scalar_select 0, %s6, %s4
  // Predicated region
  $region2: #{_lambda_.12} parent=0 // pred_check
    _
  $region3: #{_lambda_.12} parent=0 // pred_check_branch
    %9 = sbr.rel (0) target = $region5
  $region4: #{_lambda_.12} parent=0 // pred_region
    _
  $region5: #{_lambda_.12} parent=0 // pred_fallthru
    _
  // Predicated region
  $region6: #{_lambda_.12} parent=0 // pred_check
    _
  $region7: #{_lambda_.12} parent=0 // pred_check_branch
    %11 = sbr.rel (0) target = $region9
  $region8: #{_lambda_.12} parent=0 // pred_region
    _
  $region9: #{_lambda_.12} parent=0 // pred_fallthru
    _
  // Predicated region
  $region10: #{_lambda_.12} parent=0 // pred_check
    _
  $region11: #{_lambda_.12} parent=0 // pred_check_branch
    %13 = sbr.rel (0) target = $region13
  $region12: #{_lambda_.12} parent=0 // pred_region
    _
  $region13: #{_lambda_.12} parent=0 // pred_fallthru
    _
  %p14 = scmp.eq.s32.totalorder 0, 0
  // Predicated region
  $region14: #{_lambda_.12} parent=0 // pred_check
    %p15 = pneg %p14
  $region15: #{_lambda_.12} parent=0 // pred_check_branch
    %17 = sbr.rel (%p15) target = $region17
  $region16: #{_lambda_.12} parent=0 // pred_region
    %18 = vst [vmem:[#allocation2] sm:$0xff] 0.0
  $region17: #{_lambda_.12} parent=0 // pred_fallthru
    _
  %v19 = vld [vmem:[#allocation2] sm:$0xff]
  %v20 = vld [vmem:[%s0] sm:$0xff]
  %v21 = vld [vmem:[%s0 + $0x8] sm:$0xf]
  %v22 = vld [vmem:[%s1] sm:$0xf]
  %v23 = vld [vmem:[%s1 + $0x4] sm:$0xf]
  %v24 = vld [vmem:[%s1 + $0x8] sm:$0xf]
  %v25 = vld [vmem:[%s1 + $0xc] sm:$0xf]
  %v26 = vld [vmem:[%s1 + $0x10] sm:$0xf]
  %v27 = vld [vmem:[%s1 + $0x14] sm:$0xf]
  %v28 = vld [vmem:[%s1 + $0x18] sm:$0xf]
  %v29 = vld [vmem:[%s1 + $0x1c] sm:$0xf]
  %v30 = vld [vmem:[%s1 + $0x20] sm:$0xf]
  %v31 = vld [vmem:[%s1 + $0x24] sm:$0xf]
  %v32 = vld [vmem:[%s1 + $0x28] sm:$0xf]
  %v33 = vld [vmem:[%s1 + $0x2c] sm:$0xf]
  %v34 = vld [vmem:[%s1 + $0x30] sm:$0xf]
  %v35 = vld [vmem:[%s1 + $0x34] sm:$0xf]
  %v36 = vld [vmem:[%s1 + $0x38] sm:$0xf]
  %v37 = vld [vmem:[%s1 + $0x3c] sm:$0xf]
  %v38 = vld [vmem:[%s1 + $0x40] sm:$0xf]
  %v39 = vld [vmem:[%s1 + $0x44] sm:$0xf]
  %v40 = vld [vmem:[%s1 + $0x48] sm:$0xf]
  %v41 = vld [vmem:[%s1 + $0x4c] sm:$0xf]
  %v42 = vld [vmem:[%s1 + $0x50] sm:$0xf]
  %v43 = vld [vmem:[%s1 + $0x54] sm:$0xf]
  %v44 = vld [vmem:[%s1 + $0x58] sm:$0xf]
  %v45 = vld [vmem:[%s1 + $0x5c] sm:$0xf]
  %v46 = vld [vmem:[%s1 + $0x60] sm:$0xf]
  %v47 = vld [vmem:[%s1 + $0x64] sm:$0xf]
  %v48 = vld [vmem:[%s1 + $0x68] sm:$0xf]
  %v49 = vld [vmem:[%s1 + $0x6c] sm:$0xf]
  %v50 = vld [vmem:[%s1 + $0x70] sm:$0xf]
  %v51 = vld [vmem:[%s1 + $0x74] sm:$0xf]
  %v52 = vld [vmem:[%s1 + $0x78] sm:$0xf]
  %v53 = vld [vmem:[%s1 + $0x7c] sm:$0xf]
  %v54 = vld [vmem:[%s1 + $0x80] sm:$0xf]
  %v55 = vld [vmem:[%s1 + $0x84] sm:$0xf]
  %v56 = vld [vmem:[%s1 + $0x88] sm:$0xf]
  %v57 = vld [vmem:[%s1 + $0x8c] sm:$0xf]
  %v58 = vld [vmem:[%s1 + $0x90] sm:$0xf]
  %v59 = vld [vmem:[%s1 + $0x94] sm:$0xf]
  %v60 = vld [vmem:[%s1 + $0x98] sm:$0xf]
  %v61 = vld [vmem:[%s1 + $0x9c] sm:$0xf]
  %v62 = vld [vmem:[%s1 + $0xa0] sm:$0xf]
  %v63 = vld [vmem:[%s1 + $0xa4] sm:$0xf]
  %v64 = vld [vmem:[%s1 + $0xa8] sm:$0xf]
  %v65 = vld [vmem:[%s1 + $0xac] sm:$0xf]
  %v66 = vld [vmem:[%s1 + $0xb0] sm:$0xf]
  %v67 = vld [vmem:[%s1 + $0xb4] sm:$0xf]
  %v68 = vld [vmem:[%s1 + $0xb8] sm:$0xf]
  %v69 = vld [vmem:[%s1 + $0xbc] sm:$0xf]
  %v72 = vunpack.c.l.b16 %v20
  %v73 = vunpack.c.h.b16 %v20
  %v74 = vunpack.c.l.b16 %v21
  %v75 = vpack.c.b16 %v72, %v72
  %v76 = vpack.c.b16 %v73, %v73
  %v77 = vpack.c.b16 %v74, %v74
  %v129 = vunpack.c.l.b16 %v22
  %v130 = vunpack.c.l.b16 %v23
  %v131 = vunpack.c.l.b16 %v24
  %v132 = vunpack.c.l.b16 %v25
  %v133 = vunpack.c.l.b16 %v26
  %v134 = vunpack.c.l.b16 %v27
  %v135 = vunpack.c.l.b16 %v28
  %v136 = vunpack.c.l.b16 %v29
  %v137 = vunpack.c.l.b16 %v30
  %v138 = vunpack.c.l.b16 %v31
  %v139 = vunpack.c.l.b16 %v32
  %v140 = vunpack.c.l.b16 %v33
  %v141 = vunpack.c.l.b16 %v34
  %v142 = vunpack.c.l.b16 %v35
  %v143 = vunpack.c.l.b16 %v36
  %v144 = vunpack.c.l.b16 %v37
  %v145 = vunpack.c.l.b16 %v38
  %v146 = vunpack.c.l.b16 %v39
  %v147 = vunpack.c.l.b16 %v40
  %v148 = vunpack.c.l.b16 %v41
  %v149 = vunpack.c.l.b16 %v42
  %v150 = vunpack.c.l.b16 %v43
  %v151 = vunpack.c.l.b16 %v44
  %v152 = vunpack.c.l.b16 %v45
  %v153 = vunpack.c.l.b16 %v46
  %v154 = vunpack.c.l.b16 %v47
  %v155 = vunpack.c.l.b16 %v48
  %v156 = vunpack.c.l.b16 %v49
  %v157 = vunpack.c.l.b16 %v50
  %v158 = vunpack.c.l.b16 %v51
  %v159 = vunpack.c.l.b16 %v52
  %v160 = vunpack.c.l.b16 %v53
  %v161 = vunpack.c.l.b16 %v54
  %v162 = vunpack.c.l.b16 %v55
  %v163 = vunpack.c.l.b16 %v56
  %v164 = vunpack.c.l.b16 %v57
  %v165 = vunpack.c.l.b16 %v58
  %v166 = vunpack.c.l.b16 %v59
  %v167 = vunpack.c.l.b16 %v60
  %v168 = vunpack.c.l.b16 %v61
  %v169 = vunpack.c.l.b16 %v62
  %v170 = vunpack.c.l.b16 %v63
  %v171 = vunpack.c.l.b16 %v64
  %v172 = vunpack.c.l.b16 %v65
  %v173 = vunpack.c.l.b16 %v66
  %v174 = vunpack.c.l.b16 %v67
  %v175 = vunpack.c.l.b16 %v68
  %v176 = vunpack.c.l.b16 %v69
  %v177 = vpack.c.b16 %v130, %v129
  %v178 = vpack.c.b16 %v132, %v131
  %v179 = vpack.c.b16 %v134, %v133
  %v180 = vpack.c.b16 %v136, %v135
  %v181 = vpack.c.b16 %v138, %v137
  %v182 = vpack.c.b16 %v140, %v139
  %v183 = vpack.c.b16 %v142, %v141
  %v184 = vpack.c.b16 %v144, %v143
  %v185 = vpack.c.b16 %v146, %v145
  %v186 = vpack.c.b16 %v148, %v147
  %v187 = vpack.c.b16 %v150, %v149
  %v188 = vpack.c.b16 %v152, %v151
  %v189 = vpack.c.b16 %v154, %v153
  %v190 = vpack.c.b16 %v156, %v155
  %v191 = vpack.c.b16 %v158, %v157
  %v192 = vpack.c.b16 %v160, %v159
  %v193 = vpack.c.b16 %v162, %v161
  %v194 = vpack.c.b16 %v164, %v163
  %v195 = vpack.c.b16 %v166, %v165
  %v196 = vpack.c.b16 %v168, %v167
  %v197 = vpack.c.b16 %v170, %v169
  %v198 = vpack.c.b16 %v172, %v171
  %v199 = vpack.c.b16 %v174, %v173
  %v200 = vpack.c.b16 %v176, %v175
  %225 = vmatpush.bf16.msra.mxu0 %v184
  %226 = vmatpush.bf16.msra.mxu0 %v183
  %227 = vmatpush.bf16.msra.mxu0 %v182
  %228 = vmatpush.bf16.msra.mxu0 %v181
  %229 = vmatpush.bf16.msra.mxu0 %v180
  %230 = vmatpush.bf16.msra.mxu0 %v179
  %231 = vmatpush.bf16.msra.mxu0 %v178
  %232 = vmatpush.bf16.msra.mxu0 %v177
  %233 = vmatmul.bf16.gmra.mxu0 %v75
  %v234 = vpop.f32.mrf.mxu0
  %v235 = vadd.f32 0.0, %v234
  %v236 = vpop.f32.mrf.mxu0
  %237 = vdwg.mxu0
  %238 = vmatpush.bf16.msra.mxu0 %v192
  %239 = vmatpush.bf16.msra.mxu0 %v191
  %240 = vmatpush.bf16.msra.mxu0 %v190
  %241 = vmatpush.bf16.msra.mxu0 %v189
  %242 = vmatpush.bf16.msra.mxu0 %v188
  %243 = vmatpush.bf16.msra.mxu0 %v187
  %244 = vmatpush.bf16.msra.mxu0 %v186
  %245 = vmatpush.bf16.msra.mxu0 %v185
  %246 = vmatmul.bf16.gmra.mxu0 %v76
  %v247 = vpop.f32.mrf.mxu0
  %v248 = vadd.f32 %v235, %v247
  %v249 = vpop.f32.mrf.mxu0
  %250 = vdwg.mxu0
  %251 = vmatpush.bf16.msra.mxu0 %v200
  %252 = vmatpush.bf16.msra.mxu0 %v199
  %253 = vmatpush.bf16.msra.mxu0 %v198
  %254 = vmatpush.bf16.msra.mxu0 %v197
  %255 = vmatpush.bf16.msra.mxu0 %v196
  %256 = vmatpush.bf16.msra.mxu0 %v195
  %257 = vmatpush.bf16.msra.mxu0 %v194
  %258 = vmatpush.bf16.msra.mxu0 %v193
  %259 = vmatmul.bf16.gmra.mxu0 %v77
  %v260 = vpop.f32.mrf.mxu0
  %v261 = vadd.f32 %v248, %v260
  %v262 = vpop.f32.mrf.mxu0
  %263 = vdwg.mxu0
  %v264 = vadd.f32 %v19, %v261
  %265 = vst [vmem:[#allocation2] sm:$0xff] %v264
  // Predicated region
  $region18: #{_lambda_.12} parent=0 // pred_check
    %p266 = pneg %p14
  $region19: #{_lambda_.12} parent=0 // pred_check_branch
    %268 = sbr.rel (%p266) target = $region21
  $region20: #{_lambda_.12} parent=0 // pred_region
    %v269 = vld [vmem:[#allocation2] sm:$0xff]
    %v270 = vld [vmem:[%s2] sm:$0x1]
    %v272 = vperm.slane %v270, 0
    %v274 = vadd.f32 %v269, %v272
    %v275 = vmax.f32 %v274, 0.0
    %276 = vst [vmem:[%s3] sm:$0xff] %v275
  $region21: #{_lambda_.12} parent=0 // pred_fallthru
    _
  // Predicated region
  $region22: #{_lambda_.12} parent=0 // pred_check
    _
  $region23: #{_lambda_.12} parent=0 // pred_check_branch
    %278 = sbr.rel (0) target = $region25
  $region24: #{_lambda_.12} parent=0 // pred_region
    _
  $region25: #{_lambda_.12} parent=0 // pred_fallthru
    _
  // Predicated region
  $region26: #{_lambda_.12} parent=0 // pred_check
    _
  $region27: #{_lambda_.12} parent=0 // pred_check_branch
    %280 = sbr.rel (0) target = $region29
  $region28: #{_lambda_.12} parent=0 // pred_region
    _
  $region29: #{_lambda_.12} parent=0 // pred_fallthru
    _

// kernel: _lambda_.14
$region0: #{_lambda_.14}
  #allocation0 [shape = 'u32[]', space=smem, size = 0x4, offset = 0x4, fixed_abs, tag = 'smem constant byte address 0x4 - core index']
  #allocation1 [shape = 'u32[72,128]{1,0:T(1,128)}', space=vmem, size = 0x9000, scoped, tag = 'internal scratch']
  #allocation2 [shape = 'f32[8,128]{1,0:T(8,128)}', space=vmem, size = 0x1000, scoped, tag = 'scratch operand']
  %s0 = inlined_call_operand.vmem [shape: bf16[8,128], index: 0, kind: input, shape index: {}]
  %s1 = inlined_call_operand.vmem [shape: bf16[128,128], index: 1, kind: input, shape index: {}]
  %s2 = inlined_call_operand.vmem [shape: f32[1,128], index: 2, kind: input, shape index: {}]
  %s3 = inlined_call_operand.vmem [shape: f32[8,128], index: 3, kind: output, shape index: {}]
  %s4 = sld [smem:[#allocation0]]
  $region30: #{_lambda_.14} parent=0
    _
  %s6 = ssub.s32 1, %s4
  %s7 = scalar_select 0, %s6, %s4
  // Predicated region
  $region2: #{_lambda_.14} parent=0 // pred_check
    _
  $region3: #{_lambda_.14} parent=0 // pred_check_branch
    %9 = sbr.rel (0) target = $region5
  $region4: #{_lambda_.14} parent=0 // pred_region
    _
  $region5: #{_lambda_.14} parent=0 // pred_fallthru
    _
  // Predicated region
  $region6: #{_lambda_.14} parent=0 // pred_check
    _
  $region7: #{_lambda_.14} parent=0 // pred_check_branch
    %11 = sbr.rel (0) target = $region9
  $region8: #{_lambda_.14} parent=0 // pred_region
    _
  $region9: #{_lambda_.14} parent=0 // pred_fallthru
    _
  // Predicated region
  $region10: #{_lambda_.14} parent=0 // pred_check
    _
  $region11: #{_lambda_.14} parent=0 // pred_check_branch
    %13 = sbr.rel (0) target = $region13
  $region12: #{_lambda_.14} parent=0 // pred_region
    _
  $region13: #{_lambda_.14} parent=0 // pred_fallthru
    _
  %p14 = scmp.eq.s32.totalorder 0, 0
  // Predicated region
  $region14: #{_lambda_.14} parent=0 // pred_check
    %p15 = pneg %p14
  $region15: #{_lambda_.14} parent=0 // pred_check_branch
    %17 = sbr.rel (%p15) target = $region17
  $region16: #{_lambda_.14} parent=0 // pred_region
    %18 = vst [vmem:[#allocation2] sm:$0xff] 0.0
  $region17: #{_lambda_.14} parent=0 // pred_fallthru
    _
  %v19 = vld [vmem:[#allocation2] sm:$0xff]
  %v20 = vld [vmem:[%s0] sm:$0xf]
  %v21 = vld [vmem:[%s1] sm:$0xf]
  %v22 = vld [vmem:[%s1 + $0x4] sm:$0xf]
  %v23 = vld [vmem:[%s1 + $0x8] sm:$0xf]
  %v24 = vld [vmem:[%s1 + $0xc] sm:$0xf]
  %v25 = vld [vmem:[%s1 + $0x10] sm:$0xf]
  %v26 = vld [vmem:[%s1 + $0x14] sm:$0xf]
  %v27 = vld [vmem:[%s1 + $0x18] sm:$0xf]
  %v28 = vld [vmem:[%s1 + $0x1c] sm:$0xf]
  %v29 = vld [vmem:[%s1 + $0x20] sm:$0xf]
  %v30 = vld [vmem:[%s1 + $0x24] sm:$0xf]
  %v31 = vld [vmem:[%s1 + $0x28] sm:$0xf]
  %v32 = vld [vmem:[%s1 + $0x2c] sm:$0xf]
  %v33 = vld [vmem:[%s1 + $0x30] sm:$0xf]
  %v34 = vld [vmem:[%s1 + $0x34] sm:$0xf]
  %v35 = vld [vmem:[%s1 + $0x38] sm:$0xf]
  %v36 = vld [vmem:[%s1 + $0x3c] sm:$0xf]
  %v53 = vunpack.c.l.b16 %v21
  %v54 = vunpack.c.l.b16 %v22
  %v55 = vunpack.c.l.b16 %v23
  %v56 = vunpack.c.l.b16 %v24
  %v57 = vunpack.c.l.b16 %v25
  %v58 = vunpack.c.l.b16 %v26
  %v59 = vunpack.c.l.b16 %v27
  %v60 = vunpack.c.l.b16 %v28
  %v61 = vunpack.c.l.b16 %v29
  %v62 = vunpack.c.l.b16 %v30
  %v63 = vunpack.c.l.b16 %v31
  %v64 = vunpack.c.l.b16 %v32
  %v65 = vunpack.c.l.b16 %v33
  %v66 = vunpack.c.l.b16 %v34
  %v67 = vunpack.c.l.b16 %v35
  %v68 = vunpack.c.l.b16 %v36
  %v69 = vpack.c.b16 %v54, %v53
  %v70 = vpack.c.b16 %v56, %v55
  %v71 = vpack.c.b16 %v58, %v57
  %v72 = vpack.c.b16 %v60, %v59
  %v73 = vpack.c.b16 %v62, %v61
  %v74 = vpack.c.b16 %v64, %v63
  %v75 = vpack.c.b16 %v66, %v65
  %v76 = vpack.c.b16 %v68, %v67
  %85 = vmatpush.bf16.msra.mxu0 %v76
  %86 = vmatpush.bf16.msra.mxu0 %v75
  %87 = vmatpush.bf16.msra.mxu0 %v74
  %88 = vmatpush.bf16.msra.mxu0 %v73
  %89 = vmatpush.bf16.msra.mxu0 %v72
  %90 = vmatpush.bf16.msra.mxu0 %v71
  %91 = vmatpush.bf16.msra.mxu0 %v70
  %92 = vmatpush.bf16.msra.mxu0 %v69
  %93 = vmatmul.bf16.gmra.mxu0 %v20
  %v94 = vpop.f32.mrf.mxu0
  %v95 = vadd.f32 0.0, %v94
  %v96 = vpop.f32.mrf.mxu0
  %97 = vdwg.mxu0
  %v98 = vadd.f32 %v19, %v95
  %99 = vst [vmem:[#allocation2] sm:$0xff] %v98
  // Predicated region
  $region18: #{_lambda_.14} parent=0 // pred_check
    %p100 = pneg %p14
  $region19: #{_lambda_.14} parent=0 // pred_check_branch
    %102 = sbr.rel (%p100) target = $region21
  $region20: #{_lambda_.14} parent=0 // pred_region
    %v103 = vld [vmem:[#allocation2] sm:$0xff]
    %v104 = vld [vmem:[%s2] sm:$0x1]
    %v106 = vperm.slane %v104, 0
    %v108 = vadd.f32 %v103, %v106
    %v109 = vmax.f32 %v108, 0.0
    %110 = vst [vmem:[%s3] sm:$0xff] %v109
  $region21: #{_lambda_.14} parent=0 // pred_fallthru
    _
  // Predicated region
  $region22: #{_lambda_.14} parent=0 // pred_check
    _
  $region23: #{_lambda_.14} parent=0 // pred_check_branch
    %112 = sbr.rel (0) target = $region25
  $region24: #{_lambda_.14} parent=0 // pred_region
    _
  $region25: #{_lambda_.14} parent=0 // pred_fallthru
    _
  // Predicated region
  $region26: #{_lambda_.14} parent=0 // pred_check
    _
  $region27: #{_lambda_.14} parent=0 // pred_check_branch
    %114 = sbr.rel (0) target = $region29
  $region28: #{_lambda_.14} parent=0 // pred_region
    _
  $region29: #{_lambda_.14} parent=0 // pred_fallthru
    _

// kernel: _lambda_.13
$region0: #{_lambda_.13}
  #allocation0 [shape = 'u32[]', space=smem, size = 0x4, offset = 0x4, fixed_abs, tag = 'smem constant byte address 0x4 - core index']
  #allocation1 [shape = 'u32[72,128]{1,0:T(1,128)}', space=vmem, size = 0x9000, scoped, tag = 'internal scratch']
  #allocation2 [shape = 'f32[8,128]{1,0:T(8,128)}', space=vmem, size = 0x1000, scoped, tag = 'scratch operand']
  %s0 = inlined_call_operand.vmem [shape: bf16[8,1024], index: 0, kind: input, shape index: {}]
  %s1 = inlined_call_operand.vmem [shape: bf16[1024,128], index: 1, kind: input, shape index: {}]
  %s2 = inlined_call_operand.vmem [shape: f32[1,128], index: 2, kind: input, shape index: {}]
  %s3 = inlined_call_operand.vmem [shape: f32[8,128], index: 3, kind: output, shape index: {}]
  %s4 = sld [smem:[#allocation0]]
  $region53: #{_lambda_.13} parent=0
    _
  %s6 = ssub.s32 1, %s4
  %s7 = scalar_select 0, %s6, %s4
  loop: start=0, step=1, limit=4
  $region2: #{_lambda_.13} parent=0 // loop_pre_header
    _
  $region3: #{_lambda_.13} parent=0 // loop_header
    %s9 = sphi 0, %s13
    %p10 = scmp.ge.s32.totalorder %s9, 4
    %s16 = sphi 0, %s35
    %s17 = sphi 0, %s31
    %s18 = sphi 0, %s27
    %s19 = sphi 0, %s16
    %s20 = sphi 0, %s17
    %s21 = sphi 0, %s18
    %s22 = sphi 0, %s19
    %s23 = sphi 0, %s20
    %s24 = sphi 0, %s21
    %s40 = sphi 0, %s42
    %s43 = sphi 0, %s40
    %s44 = sphi 0, %s43
    %s60 = sphi 0, %s44
    %s68 = sphi 0, %s70
    %s71 = sphi 0, %s68
    %s72 = sphi 0, %s71
    %s88 = sphi 0, %s72
    %s94 = sphi 0, %s96
    %s97 = sphi 0, %s94
    %s98 = sphi 0, %s97
    %s114 = sphi 0, %s98
    %s122 = sphi 0, %s124
    %s125 = sphi 0, %s122
    %s126 = sphi 0, %s125
    %s142 = sphi 0, %s126
  $region4: #{_lambda_.13} parent=0 // loop_header_branch
    %12 = sbr.rel (%p10) target = $region8
  $region5: #{_lambda_.13} parent=0 // loop_body
    %s14 = ssub.s32 %s9, 1
    %s15 = ssub.s32 %s9, 2
    %s25 = sadd.s32 1, %s18
    %p26 = scmp.ge.s32.totalorder %s25, 2
    %s27 = scalar_select %p26, 0, %s25
    %s28 = sadd.s32 1, %s17
    %s29 = scalar_select %p26, %s28, %s17
    %p30 = scmp.ge.s32.totalorder %s29, 1
    %s31 = scalar_select %p30, 0, %s29
    %s32 = sadd.s32 1, %s16
    %s33 = scalar_select %p30, %s32, %s16
    %p34 = scmp.ge.s32.totalorder %s33, 1
    %s35 = scalar_select %p34, 0, %s33
    %s36 = ssub.s32 %s16, %s35
    %s37 = ssub.s32 %s18, %s27
    %s38 = sor.u32 %s36, %s37
    %p39 = scmp.eq.s32.totalorder %s38, 0
    %s41 = sadd.s32 %s40, 1
    %s42 = scalar_select %p39, %s40, %s41
    %p45 = pneg %p39
    %p46 = scmp.eq.s32.totalorder %s9, 1
    %p47 = por %p45, %p46
    %p48 = scmp.ne.s32.totalorder %s40, %s43
    %p49 = scmp.eq.s32.totalorder %s9, 0
    %p50 = por %p48, %p49
    %p51 = scmp.ne.s32.totalorder %s40, %s43
    %p52 = scmp.eq.s32.totalorder %s14, 1
    %p53 = por %p51, %p52
    %p54 = scmp.ne.s32.totalorder %s43, %s44
    %p55 = scmp.eq.s32.totalorder %s14, 0
    %p56 = por %p54, %p55
    %p57 = scmp.ne.s32.totalorder %s43, %s44
    %p58 = scmp.eq.s32.totalorder %s15, 1
    %p59 = por %p57, %p58
    %p61 = scmp.ne.s32.totalorder %s44, %s60
    %p62 = scmp.eq.s32.totalorder %s15, 0
    %p63 = por %p61, %p62
    %s64 = ssub.s32 %s18, %s27
    %s65 = ssub.s32 %s17, %s31
    %s66 = sor.u32 %s64, %s65
    %p67 = scmp.eq.s32.totalorder %s66, 0
    %s69 = sadd.s32 %s68, 1
    %s70 = scalar_select %p67, %s68, %s69
    %p73 = pneg %p67
    %p74 = scmp.eq.s32.totalorder %s9, 1
    %p75 = por %p73, %p74
    %p76 = scmp.ne.s32.totalorder %s68, %s71
    %p77 = scmp.eq.s32.totalorder %s9, 0
    %p78 = por %p76, %p77
    %p79 = scmp.ne.s32.totalorder %s68, %s71
    %p80 = scmp.eq.s32.totalorder %s14, 1
    %p81 = por %p79, %p80
    %p82 = scmp.ne.s32.totalorder %s71, %s72
    %p83 = scmp.eq.s32.totalorder %s14, 0
    %p84 = por %p82, %p83
    %p85 = scmp.ne.s32.totalorder %s71, %s72
    %p86 = scmp.eq.s32.totalorder %s15, 1
    %p87 = por %p85, %p86
    %p89 = scmp.ne.s32.totalorder %s72, %s88
    %p90 = scmp.eq.s32.totalorder %s15, 0
    %p91 = por %p89, %p90
    %s92 = ssub.s32 %s17, %s31
    %p93 = scmp.eq.s32.totalorder %s92, 0
    %s95 = sadd.s32 %s94, 1
    %s96 = scalar_select %p93, %s94, %s95
    %p99 = pneg %p93
    %p100 = scmp.eq.s32.totalorder %s9, 1
    %p101 = por %p99, %p100
    %p102 = scmp.ne.s32.totalorder %s94, %s97
    %p103 = scmp.eq.s32.totalorder %s9, 0
    %p104 = por %p102, %p103
    %p105 = scmp.ne.s32.totalorder %s94, %s97
    %p106 = scmp.eq.s32.totalorder %s14, 1
    %p107 = por %p105, %p106
    %p108 = scmp.ne.s32.totalorder %s97, %s98
    %p109 = scmp.eq.s32.totalorder %s14, 0
    %p110 = por %p108, %p109
    %p111 = scmp.ne.s32.totalorder %s97, %s98
    %p112 = scmp.eq.s32.totalorder %s15, 1
    %p113 = por %p111, %p112
    %p115 = scmp.ne.s32.totalorder %s98, %s114
    %p116 = scmp.eq.s32.totalorder %s15, 0
    %p117 = por %p115, %p116
    %s118 = ssub.s32 %s16, %s35
    %s119 = ssub.s32 %s17, %s31
    %s120 = sor.u32 %s118, %s119
    %p121 = scmp.eq.s32.totalorder %s120, 0
    %s123 = sadd.s32 %s122, 1
    %s124 = scalar_select %p121, %s122, %s123
    %p127 = pneg %p121
    %p128 = scmp.eq.s32.totalorder %s9, 1
    %p129 = por %p127, %p128
    %p130 = scmp.ne.s32.totalorder %s122, %s125
    %p131 = scmp.eq.s32.totalorder %s9, 0
    %p132 = por %p130, %p131
    %p133 = scmp.ne.s32.totalorder %s122, %s125
    %p134 = scmp.eq.s32.totalorder %s14, 1
    %p135 = por %p133, %p134
    %p136 = scmp.ne.s32.totalorder %s125, %s126
    %p137 = scmp.eq.s32.totalorder %s14, 0
    %p138 = por %p136, %p137
    %p139 = scmp.ne.s32.totalorder %s125, %s126
    %p140 = scmp.eq.s32.totalorder %s15, 1
    %p141 = por %p139, %p140
    %p143 = scmp.ne.s32.totalorder %s126, %s142
    %p144 = scmp.eq.s32.totalorder %s15, 0
    %p145 = por %p143, %p144
    %p146 = scmp.le.s32.totalorder 1, %s9
    %p147 = scmp.lt.s32.totalorder %s9, 3
    %p148 = pnand %p146, %p147
    %p149 = pneg %p148
    // Predicated region
    $region9: #{_lambda_.13} parent=5 // pred_check
      _
    $region10: #{_lambda_.13} parent=5 // pred_check_branch
      %151 = sbr.rel (%p148) target = $region12
    $region11: #{_lambda_.13} parent=5 // pred_region
      %s152 = ssub.s32 %s9, 1
      // Predicated region
      $region13: #{_lambda_.13} parent=11 // pred_check
        %p153 = pneg %p110
      $region14: #{_lambda_.13} parent=11 // pred_check_branch
        %155 = sbr.rel (%p153) target = $region16
      $region15: #{_lambda_.13} parent=11 // pred_region
        %p156 = scmp.lt.s32.totalorder %s20, 0
        %s157 = scalar_select %p156, %s20, 0
        %s158 = scalar_lea.vmem %s2, %s157
      $region16: #{_lambda_.13} parent=11 // pred_fallthru
        _
    $region12: #{_lambda_.13} parent=5 // pred_fallthru
      _
    %p159 = scmp.lt.s32.totalorder %s9, 2
    // Predicated region
    $region17: #{_lambda_.13} parent=5 // pred_check
      %p160 = pneg %p159
    $region18: #{_lambda_.13} parent=5 // pred_check_branch
      %162 = sbr.rel (%p160) target = $region20
    $region19: #{_lambda_.13} parent=5 // pred_region
      // Predicated region
      $region21: #{_lambda_.13} parent=19 // pred_check
        %p163 = pneg %p50
      $region22: #{_lambda_.13} parent=19 // pred_check_branch
        %165 = sbr.rel (%p163) target = $region24
      $region23: #{_lambda_.13} parent=19 // pred_region
        %s166 = smul.u32 4, %s18
        %p167 = scmp.lt.s32.totalorder %s16, 0
        %s168 = scalar_select %p167, %s16, 0
        %p169 = scmp.lt.s32.totalorder %s166, 7
        %s170 = scalar_select %p169, %s166, 7
        %s171 = smul.addr %s168, 8
        %s172 = sadd.s32 %s170, %s171
        %s173 = smul.addr %s172, 4
        %s174 = scalar_lea.vmem %s0, %s173
        %s175 = smul.u32 4, %s18
      $region24: #{_lambda_.13} parent=19 // pred_fallthru
        _
      // Predicated region
      $region25: #{_lambda_.13} parent=19 // pred_check
        %p176 = pneg %p78
      $region26: #{_lambda_.13} parent=19 // pred_check_branch
        %178 = sbr.rel (%p176) target = $region28
      $region27: #{_lambda_.13} parent=19 // pred_region
        %s179 = smul.u32 64, %s18
        %p180 = scmp.lt.s32.totalorder %s179, 127
        %s181 = scalar_select %p180, %s179, 127
        %p182 = scmp.lt.s32.totalorder %s17, 0
        %s183 = scalar_select %p182, %s17, 0
        %s184 = sadd.s32 %s183, %s181
        %s185 = smul.addr %s184, 4
        %s186 = scalar_lea.vmem %s1, %s185
        %s187 = smul.u32 64, %s18
      $region28: #{_lambda_.13} parent=19 // pred_fallthru
        _
    $region20: #{_lambda_.13} parent=5 // pred_fallthru
      _
    %p188 = scmp.le.s32.totalorder 1, %s9
    %p189 = scmp.lt.s32.totalorder %s9, 3
    %p190 = pnand %p188, %p189
    %p191 = pneg %p190
    // Predicated region
    $region29: #{_lambda_.13} parent=5 // pred_check
      _
    $region30: #{_lambda_.13} parent=5 // pred_check_branch
      %193 = sbr.rel (%p190) target = $region32
    $region31: #{_lambda_.13} parent=5 // pred_region
      %s194 = ssub.s32 %s9, 1
      %s195 = smul.u32 4, %s21
      %p196 = scmp.lt.s32.totalorder %s19, 0
      %s197 = scalar_select %p196, %s19, 0
      %p198 = scmp.lt.s32.totalorder %s195, 7
      %s199 = scalar_select %p198, %s195, 7
      %s200 = smul.addr %s197, 8
      %s201 = sadd.s32 %s199, %s200
      %s202 = smul.addr %s201, 4
      %s203 = scalar_lea.vmem %s0, %s202
      %p204 = pneg %p56
      %p205 = pneg %p53
      %s206 = smul.u32 64, %s21
      %p207 = scmp.lt.s32.totalorder %s206, 127
      %s208 = scalar_select %p207, %s206, 127
      %p209 = scmp.lt.s32.totalorder %s20, 0
      %s210 = scalar_select %p209, %s20, 0
      %s211 = sadd.s32 %s210, %s208
      %s212 = smul.addr %s211, 4
      %s213 = scalar_lea.vmem %s1, %s212
      %p214 = pneg %p84
      %p215 = pneg %p81
      %p216 = scmp.lt.s32.totalorder %s20, 0
      %s217 = scalar_select %p216, %s20, 0
      %s218 = scalar_lea.vmem %s2, %s217
      %p219 = pneg %p110
      %p220 = pneg %p107
      %p221 = pneg %p138
      %p222 = pneg %p135
      %p223 = scmp.lt.s32.totalorder %s19, 0
      %s224 = scalar_select %p223, %s19, 0
      %p225 = scmp.lt.s32.totalorder %s20, 0
      %s226 = scalar_select %p225, %s20, 0
      %s227 = sadd.s32 %s226, %s224
      %s228 = smul.addr %s227, 8
      %s229 = scalar_lea.vmem %s3, %s228
      %s230 = smul.u32 4, %s21
      %p231 = scmp.lt.s32.totalorder %s19, 0
      %s232 = scalar_select %p231, %s19, 0
      %p233 = scmp.lt.s32.totalorder %s230, 7
      %s234 = scalar_select %p233, %s230, 7
      %s235 = smul.addr %s232, 8
      %s236 = sadd.s32 %s234, %s235
      %s237 = smul.addr %s236, 4
      %s238 = scalar_lea.vmem %s0, %s237
      %s239 = smul.u32 4, %s21
      %s240 = smul.u32 64, %s21
      %p241 = scmp.lt.s32.totalorder %s240, 127
      %s242 = scalar_select %p241, %s240, 127
      %p243 = scmp.lt.s32.totalorder %s20, 0
      %s244 = scalar_select %p243, %s20, 0
      %s245 = sadd.s32 %s244, %s242
      %s246 = smul.addr %s245, 4
      %s247 = scalar_lea.vmem %s1, %s246
      %s248 = smul.u32 64, %s21
      %p249 = scmp.lt.s32.totalorder %s20, 0
      %s250 = scalar_select %p249, %s20, 0
      %s251 = scalar_lea.vmem %s2, %s250
      %p252 = scmp.lt.s32.totalorder %s19, 0
      %s253 = scalar_select %p252, %s19, 0
      %p254 = scmp.lt.s32.totalorder %s20, 0
      %s255 = scalar_select %p254, %s20, 0
      %s256 = sadd.s32 %s255, %s253
      %s257 = smul.addr %s256, 8
      %s258 = scalar_lea.vmem %s3, %s257
      %p259 = scmp.eq.s32.totalorder %s21, 0
      // Predicated region
      $region33: #{_lambda_.13} parent=31 // pred_check
        %p260 = pneg %p259
      $region34: #{_lambda_.13} parent=31 // pred_check_branch
        %262 = sbr.rel (%p260) target = $region36
      $region35: #{_lambda_.13} parent=31 // pred_region
        %263 = vst [vmem:[#allocation2] sm:$0xff] 0.0
      $region36: #{_lambda_.13} parent=31 // pred_fallthru
        _
      %v264 = vld [vmem:[#allocation2] sm:$0xff]
      %v265 = vld [vmem:[%s238] sm:$0xff]
      %v266 = vld [vmem:[%s238 + $0x8] sm:$0xff]
      %v267 = vld [vmem:[%s247] sm:$0xf]
      %v268 = vld [vmem:[%s247 + $0x4] sm:$0xf]
      %v269 = vld [vmem:[%s247 + $0x8] sm:$0xf]
      %v270 = vld [vmem:[%s247 + $0xc] sm:$0xf]
      %v271 = vld [vmem:[%s247 + $0x10] sm:$0xf]
      %v272 = vld [vmem:[%s247 + $0x14] sm:$0xf]
      %v273 = vld [vmem:[%s247 + $0x18] sm:$0xf]
      %v274 = vld [vmem:[%s247 + $0x1c] sm:$0xf]
      %v275 = vld [vmem:[%s247 + $0x20] sm:$0xf]
      %v276 = vld [vmem:[%s247 + $0x24] sm:$0xf]
      %v277 = vld [vmem:[%s247 + $0x28] sm:$0xf]
      %v278 = vld [vmem:[%s247 + $0x2c] sm:$0xf]
      %v279 = vld [vmem:[%s247 + $0x30] sm:$0xf]
      %v280 = vld [vmem:[%s247 + $0x34] sm:$0xf]
      %v281 = vld [vmem:[%s247 + $0x38] sm:$0xf]
      %v282 = vld [vmem:[%s247 + $0x3c] sm:$0xf]
      %v283 = vld [vmem:[%s247 + $0x40] sm:$0xf]
      %v284 = vld [vmem:[%s247 + $0x44] sm:$0xf]
      %v285 = vld [vmem:[%s247 + $0x48] sm:$0xf]
      %v286 = vld [vmem:[%s247 + $0x4c] sm:$0xf]
      %v287 = vld [vmem:[%s247 + $0x50] sm:$0xf]
      %v288 = vld [vmem:[%s247 + $0x54] sm:$0xf]
      %v289 = vld [vmem:[%s247 + $0x58] sm:$0xf]
      %v290 = vld [vmem:[%s247 + $0x5c] sm:$0xf]
      %v291 = vld [vmem:[%s247 + $0x60] sm:$0xf]
      %v292 = vld [vmem:[%s247 + $0x64] sm:$0xf]
      %v293 = vld [vmem:[%s247 + $0x68] sm:$0xf]
      %v294 = vld [vmem:[%s247 + $0x6c] sm:$0xf]
      %v295 = vld [vmem:[%s247 + $0x70] sm:$0xf]
      %v296 = vld [vmem:[%s247 + $0x74] sm:$0xf]
      %v297 = vld [vmem:[%s247 + $0x78] sm:$0xf]
      %v298 = vld [vmem:[%s247 + $0x7c] sm:$0xf]
      %v299 = vld [vmem:[%s247 + $0x80] sm:$0xf]
      %v300 = vld [vmem:[%s247 + $0x84] sm:$0xf]
      %v301 = vld [vmem:[%s247 + $0x88] sm:$0xf]
      %v302 = vld [vmem:[%s247 + $0x8c] sm:$0xf]
      %v303 = vld [vmem:[%s247 + $0x90] sm:$0xf]
      %v304 = vld [vmem:[%s247 + $0x94] sm:$0xf]
      %v305 = vld [vmem:[%s247 + $0x98] sm:$0xf]
      %v306 = vld [vmem:[%s247 + $0x9c] sm:$0xf]
      %v307 = vld [vmem:[%s247 + $0xa0] sm:$0xf]
      %v308 = vld [vmem:[%s247 + $0xa4] sm:$0xf]
      %v309 = vld [vmem:[%s247 + $0xa8] sm:$0xf]
      %v310 = vld [vmem:[%s247 + $0xac] sm:$0xf]
      %v311 = vld [vmem:[%s247 + $0xb0] sm:$0xf]
      %v312 = vld [vmem:[%s247 + $0xb4] sm:$0xf]
      %v313 = vld [vmem:[%s247 + $0xb8] sm:$0xf]
      %v314 = vld [vmem:[%s247 + $0xbc] sm:$0xf]
      %v315 = vld [vmem:[%s247 + $0xc0] sm:$0xf]
      %v316 = vld [vmem:[%s247 + $0xc4] sm:$0xf]
      %v317 = vld [vmem:[%s247 + $0xc8] sm:$0xf]
      %v318 = vld [vmem:[%s247 + $0xcc] sm:$0xf]
      %v319 = vld [vmem:[%s247 + $0xd0] sm:$0xf]
      %v320 = vld [vmem:[%s247 + $0xd4] sm:$0xf]
      %v321 = vld [vmem:[%s247 + $0xd8] sm:$0xf]
      %v322 = vld [vmem:[%s247 + $0xdc] sm:$0xf]
      %v323 = vld [vmem:[%s247 + $0xe0] sm:$0xf]
      %v324 = vld [vmem:[%s247 + $0xe4] sm:$0xf]
      %v325 = vld [vmem:[%s247 + $0xe8] sm:$0xf]
      %v326 = vld [vmem:[%s247 + $0xec] sm:$0xf]
      %v327 = vld [vmem:[%s247 + $0xf0] sm:$0xf]
      %v328 = vld [vmem:[%s247 + $0xf4] sm:$0xf]
      %v329 = vld [vmem:[%s247 + $0xf8] sm:$0xf]
      %v330 = vld [vmem:[%s247 + $0xfc] sm:$0xf]
      %v333 = vunpack.c.l.b16 %v265
      %v334 = vunpack.c.h.b16 %v265
      %v335 = vunpack.c.l.b16 %v266
      %v336 = vunpack.c.h.b16 %v266
      %v337 = vpack.c.b16 %v333, %v333
      %v338 = vpack.c.b16 %v334, %v334
      %v339 = vpack.c.b16 %v335, %v335
      %v340 = vpack.c.b16 %v336, %v336
      %v409 = vunpack.c.l.b16 %v267
      %v410 = vunpack.c.l.b16 %v268
      %v411 = vunpack.c.l.b16 %v269
      %v412 = vunpack.c.l.b16 %v270
      %v413 = vunpack.c.l.b16 %v271
      %v414 = vunpack.c.l.b16 %v272
      %v415 = vunpack.c.l.b16 %v273
      %v416 = vunpack.c.l.b16 %v274
      %v417 = vunpack.c.l.b16 %v275
      %v418 = vunpack.c.l.b16 %v276
      %v419 = vunpack.c.l.b16 %v277
      %v420 = vunpack.c.l.b16 %v278
      %v421 = vunpack.c.l.b16 %v279
      %v422 = vunpack.c.l.b16 %v280
      %v423 = vunpack.c.l.b16 %v281
      %v424 = vunpack.c.l.b16 %v282
      %v425 = vunpack.c.l.b16 %v283
      %v426 = vunpack.c.l.b16 %v284
      %v427 = vunpack.c.l.b16 %v285
      %v428 = vunpack.c.l.b16 %v286
      %v429 = vunpack.c.l.b16 %v287
      %v430 = vunpack.c.l.b16 %v288
      %v431 = vunpack.c.l.b16 %v289
      %v432 = vunpack.c.l.b16 %v290
      %v433 = vunpack.c.l.b16 %v291
      %v434 = vunpack.c.l.b16 %v292
      %v435 = vunpack.c.l.b16 %v293
      %v436 = vunpack.c.l.b16 %v294
      %v437 = vunpack.c.l.b16 %v295
      %v438 = vunpack.c.l.b16 %v296
      %v439 = vunpack.c.l.b16 %v297
      %v440 = vunpack.c.l.b16 %v298
      %v441 = vunpack.c.l.b16 %v299
      %v442 = vunpack.c.l.b16 %v300
      %v443 = vunpack.c.l.b16 %v301
      %v444 = vunpack.c.l.b16 %v302
      %v445 = vunpack.c.l.b16 %v303
      %v446 = vunpack.c.l.b16 %v304
      %v447 = vunpack.c.l.b16 %v305
      %v448 = vunpack.c.l.b16 %v306
      %v449 = vunpack.c.l.b16 %v307
      %v450 = vunpack.c.l.b16 %v308
      %v451 = vunpack.c.l.b16 %v309
      %v452 = vunpack.c.l.b16 %v310
      %v453 = vunpack.c.l.b16 %v311
      %v454 = vunpack.c.l.b16 %v312
      %v455 = vunpack.c.l.b16 %v313
      %v456 = vunpack.c.l.b16 %v314
      %v457 = vunpack.c.l.b16 %v315
      %v458 = vunpack.c.l.b16 %v316
      %v459 = vunpack.c.l.b16 %v317
      %v460 = vunpack.c.l.b16 %v318
      %v461 = vunpack.c.l.b16 %v319
      %v462 = vunpack.c.l.b16 %v320
      %v463 = vunpack.c.l.b16 %v321
      %v464 = vunpack.c.l.b16 %v322
      %v465 = vunpack.c.l.b16 %v323
      %v466 = vunpack.c.l.b16 %v324
      %v467 = vunpack.c.l.b16 %v325
      %v468 = vunpack.c.l.b16 %v326
      %v469 = vunpack.c.l.b16 %v327
      %v470 = vunpack.c.l.b16 %v328
      %v471 = vunpack.c.l.b16 %v329
      %v472 = vunpack.c.l.b16 %v330
      %v473 = vpack.c.b16 %v410, %v409
      %v474 = vpack.c.b16 %v412, %v411
      %v475 = vpack.c.b16 %v414, %v413
      %v476 = vpack.c.b16 %v416, %v415
      %v477 = vpack.c.b16 %v418, %v417
      %v478 = vpack.c.b16 %v420, %v419
      %v479 = vpack.c.b16 %v422, %v421
      %v480 = vpack.c.b16 %v424, %v423
      %v481 = vpack.c.b16 %v426, %v425
      %v482 = vpack.c.b16 %v428, %v427
      %v483 = vpack.c.b16 %v430, %v429
      %v484 = vpack.c.b16 %v432, %v431
      %v485 = vpack.c.b16 %v434, %v433
      %v486 = vpack.c.b16 %v436, %v435
      %v487 = vpack.c.b16 %v438, %v437
      %v488 = vpack.c.b16 %v440, %v439
      %v489 = vpack.c.b16 %v442, %v441
      %v490 = vpack.c.b16 %v444, %v443
      %v491 = vpack.c.b16 %v446, %v445
      %v492 = vpack.c.b16 %v448, %v447
      %v493 = vpack.c.b16 %v450, %v449
      %v494 = vpack.c.b16 %v452, %v451
      %v495 = vpack.c.b16 %v454, %v453
      %v496 = vpack.c.b16 %v456, %v455
      %v497 = vpack.c.b16 %v458, %v457
      %v498 = vpack.c.b16 %v460, %v459
      %v499 = vpack.c.b16 %v462, %v461
      %v500 = vpack.c.b16 %v464, %v463
      %v501 = vpack.c.b16 %v466, %v465
      %v502 = vpack.c.b16 %v468, %v467
      %v503 = vpack.c.b16 %v470, %v469
      %v504 = vpack.c.b16 %v472, %v471
      %537 = vmatpush.bf16.msra.mxu0 %v480
      %538 = vmatpush.bf16.msra.mxu0 %v479
      %539 = vmatpush.bf16.msra.mxu0 %v478
      %540 = vmatpush.bf16.msra.mxu0 %v477
      %541 = vmatpush.bf16.msra.mxu0 %v476
      %542 = vmatpush.bf16.msra.mxu0 %v475
      %543 = vmatpush.bf16.msra.mxu0 %v474
      %544 = vmatpush.bf16.msra.mxu0 %v473
      %545 = vmatmul.bf16.gmra.mxu0 %v337
      %v546 = vpop.f32.mrf.mxu0
      %v547 = vadd.f32 0.0, %v546
      %v548 = vpop.f32.mrf.mxu0
      %549 = vdwg.mxu0
      %550 = vmatpush.bf16.msra.mxu0 %v488
      %551 = vmatpush.bf16.msra.mxu0 %v487
      %552 = vmatpush.bf16.msra.mxu0 %v486
      %553 = vmatpush.bf16.msra.mxu0 %v485
      %554 = vmatpush.bf16.msra.mxu0 %v484
      %555 = vmatpush.bf16.msra.mxu0 %v483
      %556 = vmatpush.bf16.msra.mxu0 %v482
      %557 = vmatpush.bf16.msra.mxu0 %v481
      %558 = vmatmul.bf16.gmra.mxu0 %v338
      %v559 = vpop.f32.mrf.mxu0
      %v560 = vadd.f32 %v547, %v559
      %v561 = vpop.f32.mrf.mxu0
      %562 = vdwg.mxu0
      %563 = vmatpush.bf16.msra.mxu0 %v496
      %564 = vmatpush.bf16.msra.mxu0 %v495
      %565 = vmatpush.bf16.msra.mxu0 %v494
      %566 = vmatpush.bf16.msra.mxu0 %v493
      %567 = vmatpush.bf16.msra.mxu0 %v492
      %568 = vmatpush.bf16.msra.mxu0 %v491
      %569 = vmatpush.bf16.msra.mxu0 %v490
      %570 = vmatpush.bf16.msra.mxu0 %v489
      %571 = vmatmul.bf16.gmra.mxu0 %v339
      %v572 = vpop.f32.mrf.mxu0
      %v573 = vadd.f32 %v560, %v572
      %v574 = vpop.f32.mrf.mxu0
      %575 = vdwg.mxu0
      %576 = vmatpush.bf16.msra.mxu0 %v504
      %577 = vmatpush.bf16.msra.mxu0 %v503
      %578 = vmatpush.bf16.msra.mxu0 %v502
      %579 = vmatpush.bf16.msra.mxu0 %v501
      %580 = vmatpush.bf16.msra.mxu0 %v500
      %581 = vmatpush.bf16.msra.mxu0 %v499
      %582 = vmatpush.bf16.msra.mxu0 %v498
      %583 = vmatpush.bf16.msra.mxu0 %v497
      %584 = vmatmul.bf16.gmra.mxu0 %v340
      %v585 = vpop.f32.mrf.mxu0
      %v586 = vadd.f32 %v573, %v585
      %v587 = vpop.f32.mrf.mxu0
      %588 = vdwg.mxu0
      %v589 = vadd.f32 %v264, %v586
      %590 = vst [vmem:[#allocation2] sm:$0xff] %v589
      %p591 = scmp.eq.s32.totalorder %s21, 1
      // Predicated region
      $region37: #{_lambda_.13} parent=31 // pred_check
        %p592 = pneg %p591
      $region38: #{_lambda_.13} parent=31 // pred_check_branch
        %594 = sbr.rel (%p592) target = $region40
      $region39: #{_lambda_.13} parent=31 // pred_region
        %v595 = vld [vmem:[#allocation2] sm:$0xff]
        %v596 = vld [vmem:[%s251] sm:$0x1]
        %v598 = vperm.slane %v596, 0
        %v600 = vadd.f32 %v595, %v598
        %v601 = vmax.f32 %v600, 0.0
        %602 = vst [vmem:[%s258] sm:$0xff] %v601
      $region40: #{_lambda_.13} parent=31 // pred_fallthru
        _
      %p603 = scmp.lt.s32.totalorder %s19, 0
      %s604 = scalar_select %p603, %s19, 0
      %p605 = scmp.lt.s32.totalorder %s20, 0
      %s606 = scalar_select %p605, %s20, 0
      %s607 = sadd.s32 %s606, %s604
      %s608 = smul.addr %s607, 8
      %s609 = scalar_lea.vmem %s3, %s608
      // Predicated region
      $region41: #{_lambda_.13} parent=31 // pred_check
        %p610 = pneg %p135
      $region42: #{_lambda_.13} parent=31 // pred_check_branch
        %612 = sbr.rel (%p610) target = $region44
      $region43: #{_lambda_.13} parent=31 // pred_region
        _
      $region44: #{_lambda_.13} parent=31 // pred_fallthru
        _
      // Predicated region
      $region45: #{_lambda_.13} parent=31 // pred_check
        %p613 = pneg %p135
      $region46: #{_lambda_.13} parent=31 // pred_check_branch
        %615 = sbr.rel (%p613) target = $region48
      $region47: #{_lambda_.13} parent=31 // pred_region
        %p616 = scmp.lt.s32.totalorder %s19, 0
        %s617 = scalar_select %p616, %s19, 0
        %p618 = scmp.lt.s32.totalorder %s20, 0
        %s619 = scalar_select %p618, %s20, 0
        %s620 = sadd.s32 %s619, %s617
        %s621 = smul.addr %s620, 8
        %s622 = scalar_lea.vmem %s3, %s621
      $region48: #{_lambda_.13} parent=31 // pred_fallthru
        _
    $region32: #{_lambda_.13} parent=5 // pred_fallthru
      _
    %p623 = scmp.le.s32.totalorder 2, %s9
    // Predicated region
    $region49: #{_lambda_.13} parent=5 // pred_check
      %p624 = pneg %p623
    $region50: #{_lambda_.13} parent=5 // pred_check_branch
      %626 = sbr.rel (%p624) target = $region52
    $region51: #{_lambda_.13} parent=5 // pred_region
      %s627 = ssub.s32 %s9, 2
    $region52: #{_lambda_.13} parent=5 // pred_fallthru
      _
  $region6: #{_lambda_.13} parent=0 // loop_footer
    %s13 = sadd.s32 1, %s9
  $region7: #{_lambda_.13} parent=0 // loop_footer_branch
    %8 = sbr.rel target = $region3
  $region8: #{_lambda_.13} parent=0 // loop_exit
    _

// kernel: _lambda_.17
$region0: #{_lambda_.17}
  #allocation0 [shape = 'u32[]', space=smem, size = 0x4, offset = 0x4, fixed_abs, tag = 'smem constant byte address 0x4 - core index']
  #allocation1 [shape = 'u32[72,128]{1,0:T(1,128)}', space=vmem, size = 0x9000, scoped, tag = 'internal scratch']
  #allocation2 [shape = 'f32[8,128]{1,0:T(8,128)}', space=vmem, size = 0x1000, scoped, tag = 'scratch operand']
  %s0 = inlined_call_operand.vmem [shape: bf16[8,256], index: 0, kind: input, shape index: {}]
  %s1 = inlined_call_operand.vmem [shape: bf16[256,128], index: 1, kind: input, shape index: {}]
  %s2 = inlined_call_operand.vmem [shape: f32[1,128], index: 2, kind: input, shape index: {}]
  %s3 = inlined_call_operand.vmem [shape: f32[8,128], index: 3, kind: output, shape index: {}]
  %s4 = sld [smem:[#allocation0]]
  $region30: #{_lambda_.17} parent=0
    _
  %s6 = ssub.s32 1, %s4
  %s7 = scalar_select 0, %s6, %s4
  // Predicated region
  $region2: #{_lambda_.17} parent=0 // pred_check
    _
  $region3: #{_lambda_.17} parent=0 // pred_check_branch
    %9 = sbr.rel (0) target = $region5
  $region4: #{_lambda_.17} parent=0 // pred_region
    _
  $region5: #{_lambda_.17} parent=0 // pred_fallthru
    _
  // Predicated region
  $region6: #{_lambda_.17} parent=0 // pred_check
    _
  $region7: #{_lambda_.17} parent=0 // pred_check_branch
    %11 = sbr.rel (0) target = $region9
  $region8: #{_lambda_.17} parent=0 // pred_region
    _
  $region9: #{_lambda_.17} parent=0 // pred_fallthru
    _
  // Predicated region
  $region10: #{_lambda_.17} parent=0 // pred_check
    _
  $region11: #{_lambda_.17} parent=0 // pred_check_branch
    %13 = sbr.rel (0) target = $region13
  $region12: #{_lambda_.17} parent=0 // pred_region
    _
  $region13: #{_lambda_.17} parent=0 // pred_fallthru
    _
  %p14 = scmp.eq.s32.totalorder 0, 0
  // Predicated region
  $region14: #{_lambda_.17} parent=0 // pred_check
    %p15 = pneg %p14
  $region15: #{_lambda_.17} parent=0 // pred_check_branch
    %17 = sbr.rel (%p15) target = $region17
  $region16: #{_lambda_.17} parent=0 // pred_region
    %18 = vst [vmem:[#allocation2] sm:$0xff] 0.0
  $region17: #{_lambda_.17} parent=0 // pred_fallthru
    _
  %v19 = vld [vmem:[#allocation2] sm:$0xff]
  %v20 = vld [vmem:[%s0] sm:$0xff]
  %v21 = vld [vmem:[%s1] sm:$0xf]
  %v22 = vld [vmem:[%s1 + $0x4] sm:$0xf]
  %v23 = vld [vmem:[%s1 + $0x8] sm:$0xf]
  %v24 = vld [vmem:[%s1 + $0xc] sm:$0xf]
  %v25 = vld [vmem:[%s1 + $0x10] sm:$0xf]
  %v26 = vld [vmem:[%s1 + $0x14] sm:$0xf]
  %v27 = vld [vmem:[%s1 + $0x18] sm:$0xf]
  %v28 = vld [vmem:[%s1 + $0x1c] sm:$0xf]
  %v29 = vld [vmem:[%s1 + $0x20] sm:$0xf]
  %v30 = vld [vmem:[%s1 + $0x24] sm:$0xf]
  %v31 = vld [vmem:[%s1 + $0x28] sm:$0xf]
  %v32 = vld [vmem:[%s1 + $0x2c] sm:$0xf]
  %v33 = vld [vmem:[%s1 + $0x30] sm:$0xf]
  %v34 = vld [vmem:[%s1 + $0x34] sm:$0xf]
  %v35 = vld [vmem:[%s1 + $0x38] sm:$0xf]
  %v36 = vld [vmem:[%s1 + $0x3c] sm:$0xf]
  %v37 = vld [vmem:[%s1 + $0x40] sm:$0xf]
  %v38 = vld [vmem:[%s1 + $0x44] sm:$0xf]
  %v39 = vld [vmem:[%s1 + $0x48] sm:$0xf]
  %v40 = vld [vmem:[%s1 + $0x4c] sm:$0xf]
  %v41 = vld [vmem:[%s1 + $0x50] sm:$0xf]
  %v42 = vld [vmem:[%s1 + $0x54] sm:$0xf]
  %v43 = vld [vmem:[%s1 + $0x58] sm:$0xf]
  %v44 = vld [vmem:[%s1 + $0x5c] sm:$0xf]
  %v45 = vld [vmem:[%s1 + $0x60] sm:$0xf]
  %v46 = vld [vmem:[%s1 + $0x64] sm:$0xf]
  %v47 = vld [vmem:[%s1 + $0x68] sm:$0xf]
  %v48 = vld [vmem:[%s1 + $0x6c] sm:$0xf]
  %v49 = vld [vmem:[%s1 + $0x70] sm:$0xf]
  %v50 = vld [vmem:[%s1 + $0x74] sm:$0xf]
  %v51 = vld [vmem:[%s1 + $0x78] sm:$0xf]
  %v52 = vld [vmem:[%s1 + $0x7c] sm:$0xf]
  %v54 = vunpack.c.l.b16 %v20
  %v55 = vunpack.c.h.b16 %v20
  %v56 = vpack.c.b16 %v54, %v54
  %v57 = vpack.c.b16 %v55, %v55
  %v92 = vunpack.c.l.b16 %v21
  %v93 = vunpack.c.l.b16 %v22
  %v94 = vunpack.c.l.b16 %v23
  %v95 = vunpack.c.l.b16 %v24
  %v96 = vunpack.c.l.b16 %v25
  %v97 = vunpack.c.l.b16 %v26
  %v98 = vunpack.c.l.b16 %v27
  %v99 = vunpack.c.l.b16 %v28
  %v100 = vunpack.c.l.b16 %v29
  %v101 = vunpack.c.l.b16 %v30
  %v102 = vunpack.c.l.b16 %v31
  %v103 = vunpack.c.l.b16 %v32
  %v104 = vunpack.c.l.b16 %v33
  %v105 = vunpack.c.l.b16 %v34
  %v106 = vunpack.c.l.b16 %v35
  %v107 = vunpack.c.l.b16 %v36
  %v108 = vunpack.c.l.b16 %v37
  %v109 = vunpack.c.l.b16 %v38
  %v110 = vunpack.c.l.b16 %v39
  %v111 = vunpack.c.l.b16 %v40
  %v112 = vunpack.c.l.b16 %v41
  %v113 = vunpack.c.l.b16 %v42
  %v114 = vunpack.c.l.b16 %v43
  %v115 = vunpack.c.l.b16 %v44
  %v116 = vunpack.c.l.b16 %v45
  %v117 = vunpack.c.l.b16 %v46
  %v118 = vunpack.c.l.b16 %v47
  %v119 = vunpack.c.l.b16 %v48
  %v120 = vunpack.c.l.b16 %v49
  %v121 = vunpack.c.l.b16 %v50
  %v122 = vunpack.c.l.b16 %v51
  %v123 = vunpack.c.l.b16 %v52
  %v124 = vpack.c.b16 %v93, %v92
  %v125 = vpack.c.b16 %v95, %v94
  %v126 = vpack.c.b16 %v97, %v96
  %v127 = vpack.c.b16 %v99, %v98
  %v128 = vpack.c.b16 %v101, %v100
  %v129 = vpack.c.b16 %v103, %v102
  %v130 = vpack.c.b16 %v105, %v104
  %v131 = vpack.c.b16 %v107, %v106
  %v132 = vpack.c.b16 %v109, %v108
  %v133 = vpack.c.b16 %v111, %v110
  %v134 = vpack.c.b16 %v113, %v112
  %v135 = vpack.c.b16 %v115, %v114
  %v136 = vpack.c.b16 %v117, %v116
  %v137 = vpack.c.b16 %v119, %v118
  %v138 = vpack.c.b16 %v121, %v120
  %v139 = vpack.c.b16 %v123, %v122
  %156 = vmatpush.bf16.msra.mxu0 %v131
  %157 = vmatpush.bf16.msra.mxu0 %v130
  %158 = vmatpush.bf16.msra.mxu0 %v129
  %159 = vmatpush.bf16.msra.mxu0 %v128
  %160 = vmatpush.bf16.msra.mxu0 %v127
  %161 = vmatpush.bf16.msra.mxu0 %v126
  %162 = vmatpush.bf16.msra.mxu0 %v125
  %163 = vmatpush.bf16.msra.mxu0 %v124
  %164 = vmatmul.bf16.gmra.mxu0 %v56
  %v165 = vpop.f32.mrf.mxu0
  %v166 = vadd.f32 0.0, %v165
  %v167 = vpop.f32.mrf.mxu0
  %168 = vdwg.mxu0
  %169 = vmatpush.bf16.msra.mxu0 %v139
  %170 = vmatpush.bf16.msra.mxu0 %v138
  %171 = vmatpush.bf16.msra.mxu0 %v137
  %172 = vmatpush.bf16.msra.mxu0 %v136
  %173 = vmatpush.bf16.msra.mxu0 %v135
  %174 = vmatpush.bf16.msra.mxu0 %v134
  %175 = vmatpush.bf16.msra.mxu0 %v133
  %176 = vmatpush.bf16.msra.mxu0 %v132
  %177 = vmatmul.bf16.gmra.mxu0 %v57
  %v178 = vpop.f32.mrf.mxu0
  %v179 = vadd.f32 %v166, %v178
  %v180 = vpop.f32.mrf.mxu0
  %181 = vdwg.mxu0
  %v182 = vadd.f32 %v19, %v179
  %183 = vst [vmem:[#allocation2] sm:$0xff] %v182
  // Predicated region
  $region18: #{_lambda_.17} parent=0 // pred_check
    %p184 = pneg %p14
  $region19: #{_lambda_.17} parent=0 // pred_check_branch
    %186 = sbr.rel (%p184) target = $region21
  $region20: #{_lambda_.17} parent=0 // pred_region
    %v187 = vld [vmem:[#allocation2] sm:$0xff]
    %v188 = vld [vmem:[%s2] sm:$0x1]
    %v190 = vperm.slane %v188, 0
    %v192 = vadd.f32 %v187, %v190
    %v193 = vmax.f32 %v192, 0.0
    %194 = vst [vmem:[%s3] sm:$0xff] %v193
  $region21: #{_lambda_.17} parent=0 // pred_fallthru
    _
  // Predicated region
  $region22: #{_lambda_.17} parent=0 // pred_check
    _
  $region23: #{_lambda_.17} parent=0 // pred_check_branch
    %196 = sbr.rel (0) target = $region25
  $region24: #{_lambda_.17} parent=0 // pred_region
    _
  $region25: #{_lambda_.17} parent=0 // pred_fallthru
    _
  // Predicated region
  $region26: #{_lambda_.17} parent=0 // pred_check
    _
  $region27: #{_lambda_.17} parent=0 // pred_check_branch
    %198 = sbr.rel (0) target = $region29
  $region28: #{_lambda_.17} parent=0 // pred_region
    _
  $region29: #{_lambda_.17} parent=0 // pred_fallthru
    _

// kernel: _lambda_.16
$region0: #{_lambda_.16}
  #allocation0 [shape = 'u32[]', space=smem, size = 0x4, offset = 0x4, fixed_abs, tag = 'smem constant byte address 0x4 - core index']
  #allocation1 [shape = 'u32[72,128]{1,0:T(1,128)}', space=vmem, size = 0x9000, scoped, tag = 'internal scratch']
  #allocation2 [shape = 'f32[8,256]{1,0:T(8,128)}', space=vmem, size = 0x2000, scoped, tag = 'scratch operand']
  %s0 = inlined_call_operand.vmem [shape: bf16[8,512], index: 0, kind: input, shape index: {}]
  %s1 = inlined_call_operand.vmem [shape: bf16[512,256], index: 1, kind: input, shape index: {}]
  %s2 = inlined_call_operand.vmem [shape: f32[1,256], index: 2, kind: input, shape index: {}]
  %s3 = inlined_call_operand.vmem [shape: f32[8,256], index: 3, kind: output, shape index: {}]
  %s4 = sld [smem:[#allocation0]]
  $region30: #{_lambda_.16} parent=0
    _
  %s6 = ssub.s32 1, %s4
  %s7 = scalar_select 0, %s6, %s4
  // Predicated region
  $region2: #{_lambda_.16} parent=0 // pred_check
    _
  $region3: #{_lambda_.16} parent=0 // pred_check_branch
    %9 = sbr.rel (0) target = $region5
  $region4: #{_lambda_.16} parent=0 // pred_region
    _
  $region5: #{_lambda_.16} parent=0 // pred_fallthru
    _
  // Predicated region
  $region6: #{_lambda_.16} parent=0 // pred_check
    _
  $region7: #{_lambda_.16} parent=0 // pred_check_branch
    %11 = sbr.rel (0) target = $region9
  $region8: #{_lambda_.16} parent=0 // pred_region
    _
  $region9: #{_lambda_.16} parent=0 // pred_fallthru
    _
  // Predicated region
  $region10: #{_lambda_.16} parent=0 // pred_check
    _
  $region11: #{_lambda_.16} parent=0 // pred_check_branch
    %13 = sbr.rel (0) target = $region13
  $region12: #{_lambda_.16} parent=0 // pred_region
    _
  $region13: #{_lambda_.16} parent=0 // pred_fallthru
    _
  %p14 = scmp.eq.s32.totalorder 0, 0
  // Predicated region
  $region14: #{_lambda_.16} parent=0 // pred_check
    %p15 = pneg %p14
  $region15: #{_lambda_.16} parent=0 // pred_check_branch
    %17 = sbr.rel (%p15) target = $region17
  $region16: #{_lambda_.16} parent=0 // pred_region
    %18 = vst [vmem:[#allocation2] sm:$0xff] 0.0
    %19 = vst [vmem:[#allocation2 + $0x8] sm:$0xff] 0.0
  $region17: #{_lambda_.16} parent=0 // pred_fallthru
    _
  %v20 = vld [vmem:[#allocation2] sm:$0xff]
  %v21 = vld [vmem:[#allocation2 + $0x8] sm:$0xff]
  %v22 = vld [vmem:[%s0] sm:$0xff]
  %v23 = vld [vmem:[%s0 + $0x8] sm:$0xff]
  %v24 = vld [vmem:[%s1] sm:$0xff]
  %v25 = vld [vmem:[%s1 + $0x8] sm:$0xff]
  %v26 = vld [vmem:[%s1 + $0x10] sm:$0xff]
  %v27 = vld [vmem:[%s1 + $0x18] sm:$0xff]
  %v28 = vld [vmem:[%s1 + $0x20] sm:$0xff]
  %v29 = vld [vmem:[%s1 + $0x28] sm:$0xff]
  %v30 = vld [vmem:[%s1 + $0x30] sm:$0xff]
  %v31 = vld [vmem:[%s1 + $0x38] sm:$0xff]
  %v32 = vld [vmem:[%s1 + $0x40] sm:$0xff]
  %v33 = vld [vmem:[%s1 + $0x48] sm:$0xff]
  %v34 = vld [vmem:[%s1 + $0x50] sm:$0xff]
  %v35 = vld [vmem:[%s1 + $0x58] sm:$0xff]
  %v36 = vld [vmem:[%s1 + $0x60] sm:$0xff]
  %v37 = vld [vmem:[%s1 + $0x68] sm:$0xff]
  %v38 = vld [vmem:[%s1 + $0x70] sm:$0xff]
  %v39 = vld [vmem:[%s1 + $0x78] sm:$0xff]
  %v40 = vld [vmem:[%s1 + $0x80] sm:$0xff]
  %v41 = vld [vmem:[%s1 + $0x88] sm:$0xff]
  %v42 = vld [vmem:[%s1 + $0x90] sm:$0xff]
  %v43 = vld [vmem:[%s1 + $0x98] sm:$0xff]
  %v44 = vld [vmem:[%s1 + $0xa0] sm:$0xff]
  %v45 = vld [vmem:[%s1 + $0xa8] sm:$0xff]
  %v46 = vld [vmem:[%s1 + $0xb0] sm:$0xff]
  %v47 = vld [vmem:[%s1 + $0xb8] sm:$0xff]
  %v48 = vld [vmem:[%s1 + $0xc0] sm:$0xff]
  %v49 = vld [vmem:[%s1 + $0xc8] sm:$0xff]
  %v50 = vld [vmem:[%s1 + $0xd0] sm:$0xff]
  %v51 = vld [vmem:[%s1 + $0xd8] sm:$0xff]
  %v52 = vld [vmem:[%s1 + $0xe0] sm:$0xff]
  %v53 = vld [vmem:[%s1 + $0xe8] sm:$0xff]
  %v54 = vld [vmem:[%s1 + $0xf0] sm:$0xff]
  %v55 = vld [vmem:[%s1 + $0xf8] sm:$0xff]
  %v56 = vld [vmem:[%s1 + $0x100] sm:$0xff]
  %v57 = vld [vmem:[%s1 + $0x108] sm:$0xff]
  %v58 = vld [vmem:[%s1 + $0x110] sm:$0xff]
  %v59 = vld [vmem:[%s1 + $0x118] sm:$0xff]
  %v60 = vld [vmem:[%s1 + $0x120] sm:$0xff]
  %v61 = vld [vmem:[%s1 + $0x128] sm:$0xff]
  %v62 = vld [vmem:[%s1 + $0x130] sm:$0xff]
  %v63 = vld [vmem:[%s1 + $0x138] sm:$0xff]
  %v64 = vld [vmem:[%s1 + $0x140] sm:$0xff]
  %v65 = vld [vmem:[%s1 + $0x148] sm:$0xff]
  %v66 = vld [vmem:[%s1 + $0x150] sm:$0xff]
  %v67 = vld [vmem:[%s1 + $0x158] sm:$0xff]
  %v68 = vld [vmem:[%s1 + $0x160] sm:$0xff]
  %v69 = vld [vmem:[%s1 + $0x168] sm:$0xff]
  %v70 = vld [vmem:[%s1 + $0x170] sm:$0xff]
  %v71 = vld [vmem:[%s1 + $0x178] sm:$0xff]
  %v72 = vld [vmem:[%s1 + $0x180] sm:$0xff]
  %v73 = vld [vmem:[%s1 + $0x188] sm:$0xff]
  %v74 = vld [vmem:[%s1 + $0x190] sm:$0xff]
  %v75 = vld [vmem:[%s1 + $0x198] sm:$0xff]
  %v76 = vld [vmem:[%s1 + $0x1a0] sm:$0xff]
  %v77 = vld [vmem:[%s1 + $0x1a8] sm:$0xff]
  %v78 = vld [vmem:[%s1 + $0x1b0] sm:$0xff]
  %v79 = vld [vmem:[%s1 + $0x1b8] sm:$0xff]
  %v80 = vld [vmem:[%s1 + $0x1c0] sm:$0xff]
  %v81 = vld [vmem:[%s1 + $0x1c8] sm:$0xff]
  %v82 = vld [vmem:[%s1 + $0x1d0] sm:$0xff]
  %v83 = vld [vmem:[%s1 + $0x1d8] sm:$0xff]
  %v84 = vld [vmem:[%s1 + $0x1e0] sm:$0xff]
  %v85 = vld [vmem:[%s1 + $0x1e8] sm:$0xff]
  %v86 = vld [vmem:[%s1 + $0x1f0] sm:$0xff]
  %v87 = vld [vmem:[%s1 + $0x1f8] sm:$0xff]
  %v90 = vunpack.c.l.b16 %v22
  %v91 = vunpack.c.h.b16 %v22
  %v92 = vunpack.c.l.b16 %v23
  %v93 = vunpack.c.h.b16 %v23
  %v94 = vpack.c.b16 %v90, %v90
  %v95 = vpack.c.b16 %v91, %v91
  %v96 = vpack.c.b16 %v92, %v92
  %v97 = vpack.c.b16 %v93, %v93
  %v166 = vunpack.c.l.b16 %v24
  %v167 = vunpack.c.h.b16 %v24
  %v168 = vunpack.c.l.b16 %v25
  %v169 = vunpack.c.h.b16 %v25
  %v170 = vunpack.c.l.b16 %v26
  %v171 = vunpack.c.h.b16 %v26
  %v172 = vunpack.c.l.b16 %v27
  %v173 = vunpack.c.h.b16 %v27
  %v174 = vunpack.c.l.b16 %v28
  %v175 = vunpack.c.h.b16 %v28
  %v176 = vunpack.c.l.b16 %v29
  %v177 = vunpack.c.h.b16 %v29
  %v178 = vunpack.c.l.b16 %v30
  %v179 = vunpack.c.h.b16 %v30
  %v180 = vunpack.c.l.b16 %v31
  %v181 = vunpack.c.h.b16 %v31
  %v182 = vunpack.c.l.b16 %v32
  %v183 = vunpack.c.h.b16 %v32
  %v184 = vunpack.c.l.b16 %v33
  %v185 = vunpack.c.h.b16 %v33
  %v186 = vunpack.c.l.b16 %v34
  %v187 = vunpack.c.h.b16 %v34
  %v188 = vunpack.c.l.b16 %v35
  %v189 = vunpack.c.h.b16 %v35
  %v190 = vunpack.c.l.b16 %v36
  %v191 = vunpack.c.h.b16 %v36
  %v192 = vunpack.c.l.b16 %v37
  %v193 = vunpack.c.h.b16 %v37
  %v194 = vunpack.c.l.b16 %v38
  %v195 = vunpack.c.h.b16 %v38
  %v196 = vunpack.c.l.b16 %v39
  %v197 = vunpack.c.h.b16 %v39
  %v198 = vunpack.c.l.b16 %v40
  %v199 = vunpack.c.h.b16 %v40
  %v200 = vunpack.c.l.b16 %v41
  %v201 = vunpack.c.h.b16 %v41
  %v202 = vunpack.c.l.b16 %v42
  %v203 = vunpack.c.h.b16 %v42
  %v204 = vunpack.c.l.b16 %v43
  %v205 = vunpack.c.h.b16 %v43
  %v206 = vunpack.c.l.b16 %v44
  %v207 = vunpack.c.h.b16 %v44
  %v208 = vunpack.c.l.b16 %v45
  %v209 = vunpack.c.h.b16 %v45
  %v210 = vunpack.c.l.b16 %v46
  %v211 = vunpack.c.h.b16 %v46
  %v212 = vunpack.c.l.b16 %v47
  %v213 = vunpack.c.h.b16 %v47
  %v214 = vunpack.c.l.b16 %v48
  %v215 = vunpack.c.h.b16 %v48
  %v216 = vunpack.c.l.b16 %v49
  %v217 = vunpack.c.h.b16 %v49
  %v218 = vunpack.c.l.b16 %v50
  %v219 = vunpack.c.h.b16 %v50
  %v220 = vunpack.c.l.b16 %v51
  %v221 = vunpack.c.h.b16 %v51
  %v222 = vunpack.c.l.b16 %v52
  %v223 = vunpack.c.h.b16 %v52
  %v224 = vunpack.c.l.b16 %v53
  %v225 = vunpack.c.h.b16 %v53
  %v226 = vunpack.c.l.b16 %v54
  %v227 = vunpack.c.h.b16 %v54
  %v228 = vunpack.c.l.b16 %v55
  %v229 = vunpack.c.h.b16 %v55
  %v230 = vunpack.c.l.b16 %v56
  %v231 = vunpack.c.h.b16 %v56
  %v232 = vunpack.c.l.b16 %v57
  %v233 = vunpack.c.h.b16 %v57
  %v234 = vunpack.c.l.b16 %v58
  %v235 = vunpack.c.h.b16 %v58
  %v236 = vunpack.c.l.b16 %v59
  %v237 = vunpack.c.h.b16 %v59
  %v238 = vunpack.c.l.b16 %v60
  %v239 = vunpack.c.h.b16 %v60
  %v240 = vunpack.c.l.b16 %v61
  %v241 = vunpack.c.h.b16 %v61
  %v242 = vunpack.c.l.b16 %v62
  %v243 = vunpack.c.h.b16 %v62
  %v244 = vunpack.c.l.b16 %v63
  %v245 = vunpack.c.h.b16 %v63
  %v246 = vunpack.c.l.b16 %v64
  %v247 = vunpack.c.h.b16 %v64
  %v248 = vunpack.c.l.b16 %v65
  %v249 = vunpack.c.h.b16 %v65
  %v250 = vunpack.c.l.b16 %v66
  %v251 = vunpack.c.h.b16 %v66
  %v252 = vunpack.c.l.b16 %v67
  %v253 = vunpack.c.h.b16 %v67
  %v254 = vunpack.c.l.b16 %v68
  %v255 = vunpack.c.h.b16 %v68
  %v256 = vunpack.c.l.b16 %v69
  %v257 = vunpack.c.h.b16 %v69
  %v258 = vunpack.c.l.b16 %v70
  %v259 = vunpack.c.h.b16 %v70
  %v260 = vunpack.c.l.b16 %v71
  %v261 = vunpack.c.h.b16 %v71
  %v262 = vunpack.c.l.b16 %v72
  %v263 = vunpack.c.h.b16 %v72
  %v264 = vunpack.c.l.b16 %v73
  %v265 = vunpack.c.h.b16 %v73
  %v266 = vunpack.c.l.b16 %v74
  %v267 = vunpack.c.h.b16 %v74
  %v268 = vunpack.c.l.b16 %v75
  %v269 = vunpack.c.h.b16 %v75
  %v270 = vunpack.c.l.b16 %v76
  %v271 = vunpack.c.h.b16 %v76
  %v272 = vunpack.c.l.b16 %v77
  %v273 = vunpack.c.h.b16 %v77
  %v274 = vunpack.c.l.b16 %v78
  %v275 = vunpack.c.h.b16 %v78
  %v276 = vunpack.c.l.b16 %v79
  %v277 = vunpack.c.h.b16 %v79
  %v278 = vunpack.c.l.b16 %v80
  %v279 = vunpack.c.h.b16 %v80
  %v280 = vunpack.c.l.b16 %v81
  %v281 = vunpack.c.h.b16 %v81
  %v282 = vunpack.c.l.b16 %v82
  %v283 = vunpack.c.h.b16 %v82
  %v284 = vunpack.c.l.b16 %v83
  %v285 = vunpack.c.h.b16 %v83
  %v286 = vunpack.c.l.b16 %v84
  %v287 = vunpack.c.h.b16 %v84
  %v288 = vunpack.c.l.b16 %v85
  %v289 = vunpack.c.h.b16 %v85
  %v290 = vunpack.c.l.b16 %v86
  %v291 = vunpack.c.h.b16 %v86
  %v292 = vunpack.c.l.b16 %v87
  %v293 = vunpack.c.h.b16 %v87
  %v294 = vpack.c.b16 %v168, %v166
  %v295 = vpack.c.b16 %v169, %v167
  %v296 = vpack.c.b16 %v172, %v170
  %v297 = vpack.c.b16 %v173, %v171
  %v298 = vpack.c.b16 %v176, %v174
  %v299 = vpack.c.b16 %v177, %v175
  %v300 = vpack.c.b16 %v180, %v178
  %v301 = vpack.c.b16 %v181, %v179
  %v302 = vpack.c.b16 %v184, %v182
  %v303 = vpack.c.b16 %v185, %v183
  %v304 = vpack.c.b16 %v188, %v186
  %v305 = vpack.c.b16 %v189, %v187
  %v306 = vpack.c.b16 %v192, %v190
  %v307 = vpack.c.b16 %v193, %v191
  %v308 = vpack.c.b16 %v196, %v194
  %v309 = vpack.c.b16 %v197, %v195
  %v310 = vpack.c.b16 %v200, %v198
  %v311 = vpack.c.b16 %v201, %v199
  %v312 = vpack.c.b16 %v204, %v202
  %v313 = vpack.c.b16 %v205, %v203
  %v314 = vpack.c.b16 %v208, %v206
  %v315 = vpack.c.b16 %v209, %v207
  %v316 = vpack.c.b16 %v212, %v210
  %v317 = vpack.c.b16 %v213, %v211
  %v318 = vpack.c.b16 %v216, %v214
  %v319 = vpack.c.b16 %v217, %v215
  %v320 = vpack.c.b16 %v220, %v218
  %v321 = vpack.c.b16 %v221, %v219
  %v322 = vpack.c.b16 %v224, %v222
  %v323 = vpack.c.b16 %v225, %v223
  %v324 = vpack.c.b16 %v228, %v226
  %v325 = vpack.c.b16 %v229, %v227
  %v326 = vpack.c.b16 %v232, %v230
  %v327 = vpack.c.b16 %v233, %v231
  %v328 = vpack.c.b16 %v236, %v234
  %v329 = vpack.c.b16 %v237, %v235
  %v330 = vpack.c.b16 %v240, %v238
  %v331 = vpack.c.b16 %v241, %v239
  %v332 = vpack.c.b16 %v244, %v242
  %v333 = vpack.c.b16 %v245, %v243
  %v334 = vpack.c.b16 %v248, %v246
  %v335 = vpack.c.b16 %v249, %v247
  %v336 = vpack.c.b16 %v252, %v250
  %v337 = vpack.c.b16 %v253, %v251
  %v338 = vpack.c.b16 %v256, %v254
  %v339 = vpack.c.b16 %v257, %v255
  %v340 = vpack.c.b16 %v260, %v258
  %v341 = vpack.c.b16 %v261, %v259
  %v342 = vpack.c.b16 %v264, %v262
  %v343 = vpack.c.b16 %v265, %v263
  %v344 = vpack.c.b16 %v268, %v266
  %v345 = vpack.c.b16 %v269, %v267
  %v346 = vpack.c.b16 %v272, %v270
  %v347 = vpack.c.b16 %v273, %v271
  %v348 = vpack.c.b16 %v276, %v274
  %v349 = vpack.c.b16 %v277, %v275
  %v350 = vpack.c.b16 %v280, %v278
  %v351 = vpack.c.b16 %v281, %v279
  %v352 = vpack.c.b16 %v284, %v282
  %v353 = vpack.c.b16 %v285, %v283
  %v354 = vpack.c.b16 %v288, %v286
  %v355 = vpack.c.b16 %v289, %v287
  %v356 = vpack.c.b16 %v292, %v290
  %v357 = vpack.c.b16 %v293, %v291
  %422 = vmatpush.bf16.msra.mxu0 %v308
  %423 = vmatpush.bf16.msra.mxu0 %v306
  %424 = vmatpush.bf16.msra.mxu0 %v304
  %425 = vmatpush.bf16.msra.mxu0 %v302
  %426 = vmatpush.bf16.msra.mxu0 %v300
  %427 = vmatpush.bf16.msra.mxu0 %v298
  %428 = vmatpush.bf16.msra.mxu0 %v296
  %429 = vmatpush.bf16.msra.mxu0 %v294
  %430 = vmatmul.bf16.gmra.mxu0 %v94
  %v431 = vpop.f32.mrf.mxu0
  %v432 = vadd.f32 0.0, %v431
  %v433 = vpop.f32.mrf.mxu0
  %434 = vdwg.mxu0
  %435 = vmatpush.bf16.msra.mxu0 %v324
  %436 = vmatpush.bf16.msra.mxu0 %v322
  %437 = vmatpush.bf16.msra.mxu0 %v320
  %438 = vmatpush.bf16.msra.mxu0 %v318
  %439 = vmatpush.bf16.msra.mxu0 %v316
  %440 = vmatpush.bf16.msra.mxu0 %v314
  %441 = vmatpush.bf16.msra.mxu0 %v312
  %442 = vmatpush.bf16.msra.mxu0 %v310
  %443 = vmatmul.bf16.gmra.mxu0 %v95
  %v444 = vpop.f32.mrf.mxu0
  %v445 = vadd.f32 %v432, %v444
  %v446 = vpop.f32.mrf.mxu0
  %447 = vdwg.mxu0
  %448 = vmatpush.bf16.msra.mxu0 %v340
  %449 = vmatpush.bf16.msra.mxu0 %v338
  %450 = vmatpush.bf16.msra.mxu0 %v336
  %451 = vmatpush.bf16.msra.mxu0 %v334
  %452 = vmatpush.bf16.msra.mxu0 %v332
  %453 = vmatpush.bf16.msra.mxu0 %v330
  %454 = vmatpush.bf16.msra.mxu0 %v328
  %455 = vmatpush.bf16.msra.mxu0 %v326
  %456 = vmatmul.bf16.gmra.mxu0 %v96
  %v457 = vpop.f32.mrf.mxu0
  %v458 = vadd.f32 %v445, %v457
  %v459 = vpop.f32.mrf.mxu0
  %460 = vdwg.mxu0
  %461 = vmatpush.bf16.msra.mxu0 %v356
  %462 = vmatpush.bf16.msra.mxu0 %v354
  %463 = vmatpush.bf16.msra.mxu0 %v352
  %464 = vmatpush.bf16.msra.mxu0 %v350
  %465 = vmatpush.bf16.msra.mxu0 %v348
  %466 = vmatpush.bf16.msra.mxu0 %v346
  %467 = vmatpush.bf16.msra.mxu0 %v344
  %468 = vmatpush.bf16.msra.mxu0 %v342
  %469 = vmatmul.bf16.gmra.mxu0 %v97
  %v470 = vpop.f32.mrf.mxu0
  %v471 = vadd.f32 %v458, %v470
  %v472 = vpop.f32.mrf.mxu0
  %473 = vdwg.mxu0
  %474 = vmatpush.bf16.msra.mxu0 %v309
  %475 = vmatpush.bf16.msra.mxu0 %v307
  %476 = vmatpush.bf16.msra.mxu0 %v305
  %477 = vmatpush.bf16.msra.mxu0 %v303
  %478 = vmatpush.bf16.msra.mxu0 %v301
  %479 = vmatpush.bf16.msra.mxu0 %v299
  %480 = vmatpush.bf16.msra.mxu0 %v297
  %481 = vmatpush.bf16.msra.mxu0 %v295
  %482 = vmatmul.bf16.gmra.mxu0 %v94
  %v483 = vpop.f32.mrf.mxu0
  %v484 = vadd.f32 0.0, %v483
  %v485 = vpop.f32.mrf.mxu0
  %486 = vdwg.mxu0
  %487 = vmatpush.bf16.msra.mxu0 %v325
  %488 = vmatpush.bf16.msra.mxu0 %v323
  %489 = vmatpush.bf16.msra.mxu0 %v321
  %490 = vmatpush.bf16.msra.mxu0 %v319
  %491 = vmatpush.bf16.msra.mxu0 %v317
  %492 = vmatpush.bf16.msra.mxu0 %v315
  %493 = vmatpush.bf16.msra.mxu0 %v313
  %494 = vmatpush.bf16.msra.mxu0 %v311
  %495 = vmatmul.bf16.gmra.mxu0 %v95
  %v496 = vpop.f32.mrf.mxu0
  %v497 = vadd.f32 %v484, %v496
  %v498 = vpop.f32.mrf.mxu0
  %499 = vdwg.mxu0
  %500 = vmatpush.bf16.msra.mxu0 %v341
  %501 = vmatpush.bf16.msra.mxu0 %v339
  %502 = vmatpush.bf16.msra.mxu0 %v337
  %503 = vmatpush.bf16.msra.mxu0 %v335
  %504 = vmatpush.bf16.msra.mxu0 %v333
  %505 = vmatpush.bf16.msra.mxu0 %v331
  %506 = vmatpush.bf16.msra.mxu0 %v329
  %507 = vmatpush.bf16.msra.mxu0 %v327
  %508 = vmatmul.bf16.gmra.mxu0 %v96
  %v509 = vpop.f32.mrf.mxu0
  %v510 = vadd.f32 %v497, %v509
  %v511 = vpop.f32.mrf.mxu0
  %512 = vdwg.mxu0
  %513 = vmatpush.bf16.msra.mxu0 %v357
  %514 = vmatpush.bf16.msra.mxu0 %v355
  %515 = vmatpush.bf16.msra.mxu0 %v353
  %516 = vmatpush.bf16.msra.mxu0 %v351
  %517 = vmatpush.bf16.msra.mxu0 %v349
  %518 = vmatpush.bf16.msra.mxu0 %v347
  %519 = vmatpush.bf16.msra.mxu0 %v345
  %520 = vmatpush.bf16.msra.mxu0 %v343
  %521 = vmatmul.bf16.gmra.mxu0 %v97
  %v522 = vpop.f32.mrf.mxu0
  %v523 = vadd.f32 %v510, %v522
  %v524 = vpop.f32.mrf.mxu0
  %525 = vdwg.mxu0
  %v526 = vadd.f32 %v20, %v471
  %v527 = vadd.f32 %v21, %v523
  %528 = vst [vmem:[#allocation2] sm:$0xff] %v526
  %529 = vst [vmem:[#allocation2 + $0x8] sm:$0xff] %v527
  // Predicated region
  $region18: #{_lambda_.16} parent=0 // pred_check
    %p530 = pneg %p14
  $region19: #{_lambda_.16} parent=0 // pred_check_branch
    %532 = sbr.rel (%p530) target = $region21
  $region20: #{_lambda_.16} parent=0 // pred_region
    %v533 = vld [vmem:[#allocation2] sm:$0xff]
    %v534 = vld [vmem:[#allocation2 + $0x8] sm:$0xff]
    %v535 = vld [vmem:[%s2] sm:$0x3]
    %v537 = vperm.slane %v535, 0
    %v538 = vperm.slane %v535, 1
    %v541 = vadd.f32 %v533, %v537
    %v542 = vadd.f32 %v534, %v538
    %v543 = vmax.f32 %v541, 0.0
    %v544 = vmax.f32 %v542, 0.0
    %545 = vst [vmem:[%s3] sm:$0xff] %v543
    %546 = vst [vmem:[%s3 + $0x8] sm:$0xff] %v544
  $region21: #{_lambda_.16} parent=0 // pred_fallthru
    _
  // Predicated region
  $region22: #{_lambda_.16} parent=0 // pred_check
    _
  $region23: #{_lambda_.16} parent=0 // pred_check_branch
    %548 = sbr.rel (0) target = $region25
  $region24: #{_lambda_.16} parent=0 // pred_region
    _
  $region25: #{_lambda_.16} parent=0 // pred_fallthru
    _
  // Predicated region
  $region26: #{_lambda_.16} parent=0 // pred_check
    _
  $region27: #{_lambda_.16} parent=0 // pred_check_branch
    %550 = sbr.rel (0) target = $region29
  $region28: #{_lambda_.16} parent=0 // pred_region
    _
  $region29: #{_lambda_.16} parent=0 // pred_fallthru
    _

// kernel: _lambda_.18
$region0: #{_lambda_.18}
  #allocation0 [shape = 'u32[]', space=smem, size = 0x4, offset = 0x4, fixed_abs, tag = 'smem constant byte address 0x4 - core index']
  #allocation1 [shape = 'u32[72,128]{1,0:T(1,128)}', space=vmem, size = 0x9000, scoped, tag = 'internal scratch']
  #allocation2 [shape = 'f32[32,128]{1,0:T(8,128)}', space=vmem, size = 0x4000, scoped, tag = 'scratch operand']
  %s0 = inlined_call_operand.vmem [shape: bf16[32,128], index: 0, kind: input, shape index: {}]
  %s1 = inlined_call_operand.vmem [shape: bf16[128,128], index: 1, kind: input, shape index: {}]
  %s2 = inlined_call_operand.vmem [shape: f32[1,128], index: 2, kind: input, shape index: {}]
  %s3 = inlined_call_operand.vmem [shape: f32[32,128], index: 3, kind: output, shape index: {}]
  %s4 = sld [smem:[#allocation0]]
  $region30: #{_lambda_.18} parent=0
    _
  %s6 = ssub.s32 1, %s4
  %s7 = scalar_select 0, %s6, %s4
  // Predicated region
  $region2: #{_lambda_.18} parent=0 // pred_check
    _
  $region3: #{_lambda_.18} parent=0 // pred_check_branch
    %9 = sbr.rel (0) target = $region5
  $region4: #{_lambda_.18} parent=0 // pred_region
    _
  $region5: #{_lambda_.18} parent=0 // pred_fallthru
    _
  // Predicated region
  $region6: #{_lambda_.18} parent=0 // pred_check
    _
  $region7: #{_lambda_.18} parent=0 // pred_check_branch
    %11 = sbr.rel (0) target = $region9
  $region8: #{_lambda_.18} parent=0 // pred_region
    _
  $region9: #{_lambda_.18} parent=0 // pred_fallthru
    _
  // Predicated region
  $region10: #{_lambda_.18} parent=0 // pred_check
    _
  $region11: #{_lambda_.18} parent=0 // pred_check_branch
    %13 = sbr.rel (0) target = $region13
  $region12: #{_lambda_.18} parent=0 // pred_region
    _
  $region13: #{_lambda_.18} parent=0 // pred_fallthru
    _
  %p14 = scmp.eq.s32.totalorder 0, 0
  // Predicated region
  $region14: #{_lambda_.18} parent=0 // pred_check
    %p15 = pneg %p14
  $region15: #{_lambda_.18} parent=0 // pred_check_branch
    %17 = sbr.rel (%p15) target = $region17
  $region16: #{_lambda_.18} parent=0 // pred_region
    %18 = vst [vmem:[#allocation2] sm:$0xff] 0.0
    %19 = vst [vmem:[#allocation2 + $0x8] sm:$0xff] 0.0
    %20 = vst [vmem:[#allocation2 + $0x10] sm:$0xff] 0.0
    %21 = vst [vmem:[#allocation2 + $0x18] sm:$0xff] 0.0
  $region17: #{_lambda_.18} parent=0 // pred_fallthru
    _
  %v22 = vld [vmem:[#allocation2] sm:$0xff]
  %v23 = vld [vmem:[#allocation2 + $0x8] sm:$0xff]
  %v24 = vld [vmem:[#allocation2 + $0x10] sm:$0xff]
  %v25 = vld [vmem:[#allocation2 + $0x18] sm:$0xff]
  %v26 = vld [vmem:[%s0] sm:$0xf]
  %v27 = vld [vmem:[%s0 + $0x4] sm:$0xf]
  %v28 = vld [vmem:[%s0 + $0x8] sm:$0xf]
  %v29 = vld [vmem:[%s0 + $0xc] sm:$0xf]
  %v30 = vld [vmem:[%s1] sm:$0xf]
  %v31 = vld [vmem:[%s1 + $0x4] sm:$0xf]
  %v32 = vld [vmem:[%s1 + $0x8] sm:$0xf]
  %v33 = vld [vmem:[%s1 + $0xc] sm:$0xf]
  %v34 = vld [vmem:[%s1 + $0x10] sm:$0xf]
  %v35 = vld [vmem:[%s1 + $0x14] sm:$0xf]
  %v36 = vld [vmem:[%s1 + $0x18] sm:$0xf]
  %v37 = vld [vmem:[%s1 + $0x1c] sm:$0xf]
  %v38 = vld [vmem:[%s1 + $0x20] sm:$0xf]
  %v39 = vld [vmem:[%s1 + $0x24] sm:$0xf]
  %v40 = vld [vmem:[%s1 + $0x28] sm:$0xf]
  %v41 = vld [vmem:[%s1 + $0x2c] sm:$0xf]
  %v42 = vld [vmem:[%s1 + $0x30] sm:$0xf]
  %v43 = vld [vmem:[%s1 + $0x34] sm:$0xf]
  %v44 = vld [vmem:[%s1 + $0x38] sm:$0xf]
  %v45 = vld [vmem:[%s1 + $0x3c] sm:$0xf]
  %v50 = vunpack.c.l.b16 %v26
  %v51 = vunpack.c.l.b16 %v27
  %v52 = vunpack.c.l.b16 %v28
  %v53 = vunpack.c.l.b16 %v29
  %v54 = vpack.c.b16 %v51, %v50
  %v55 = vpack.c.b16 %v53, %v52
  %v74 = vunpack.c.l.b16 %v30
  %v75 = vunpack.c.l.b16 %v31
  %v76 = vunpack.c.l.b16 %v32
  %v77 = vunpack.c.l.b16 %v33
  %v78 = vunpack.c.l.b16 %v34
  %v79 = vunpack.c.l.b16 %v35
  %v80 = vunpack.c.l.b16 %v36
  %v81 = vunpack.c.l.b16 %v37
  %v82 = vunpack.c.l.b16 %v38
  %v83 = vunpack.c.l.b16 %v39
  %v84 = vunpack.c.l.b16 %v40
  %v85 = vunpack.c.l.b16 %v41
  %v86 = vunpack.c.l.b16 %v42
  %v87 = vunpack.c.l.b16 %v43
  %v88 = vunpack.c.l.b16 %v44
  %v89 = vunpack.c.l.b16 %v45
  %v90 = vpack.c.b16 %v75, %v74
  %v91 = vpack.c.b16 %v77, %v76
  %v92 = vpack.c.b16 %v79, %v78
  %v93 = vpack.c.b16 %v81, %v80
  %v94 = vpack.c.b16 %v83, %v82
  %v95 = vpack.c.b16 %v85, %v84
  %v96 = vpack.c.b16 %v87, %v86
  %v97 = vpack.c.b16 %v89, %v88
  %106 = vmatpush.bf16.msra.mxu0 %v97
  %107 = vmatpush.bf16.msra.mxu0 %v96
  %108 = vmatpush.bf16.msra.mxu0 %v95
  %109 = vmatpush.bf16.msra.mxu0 %v94
  %110 = vmatpush.bf16.msra.mxu0 %v93
  %111 = vmatpush.bf16.msra.mxu0 %v92
  %112 = vmatpush.bf16.msra.mxu0 %v91
  %113 = vmatpush.bf16.msra.mxu0 %v90
  %114 = vmatmul.bf16.gmra.mxu0 %v54
  %v115 = vpop.f32.mrf.mxu0
  %v116 = vadd.f32 0.0, %v115
  %v117 = vpop.f32.mrf.mxu0
  %v118 = vadd.f32 0.0, %v117
  %119 = vmatmul.bf16.gmra.mxu0 %v55
  %v120 = vpop.f32.mrf.mxu0
  %v121 = vadd.f32 0.0, %v120
  %v122 = vpop.f32.mrf.mxu0
  %v123 = vadd.f32 0.0, %v122
  %124 = vdwg.mxu0
  %v125 = vadd.f32 %v22, %v116
  %v126 = vadd.f32 %v23, %v118
  %v127 = vadd.f32 %v24, %v121
  %v128 = vadd.f32 %v25, %v123
  %129 = vst [vmem:[#allocation2] sm:$0xff] %v125
  %130 = vst [vmem:[#allocation2 + $0x8] sm:$0xff] %v126
  %131 = vst [vmem:[#allocation2 + $0x10] sm:$0xff] %v127
  %132 = vst [vmem:[#allocation2 + $0x18] sm:$0xff] %v128
  // Predicated region
  $region18: #{_lambda_.18} parent=0 // pred_check
    %p133 = pneg %p14
  $region19: #{_lambda_.18} parent=0 // pred_check_branch
    %135 = sbr.rel (%p133) target = $region21
  $region20: #{_lambda_.18} parent=0 // pred_region
    %v136 = vld [vmem:[#allocation2] sm:$0xff]
    %v137 = vld [vmem:[#allocation2 + $0x8] sm:$0xff]
    %v138 = vld [vmem:[#allocation2 + $0x10] sm:$0xff]
    %v139 = vld [vmem:[#allocation2 + $0x18] sm:$0xff]
    %v140 = vld [vmem:[%s2] sm:$0x1]
    %v142 = vperm.slane %v140, 0
    %v144 = vadd.f32 %v136, %v142
    %v145 = vadd.f32 %v137, %v142
    %v146 = vadd.f32 %v138, %v142
    %v147 = vadd.f32 %v139, %v142
    %v148 = vmax.f32 %v144, 0.0
    %v149 = vmax.f32 %v145, 0.0
    %v150 = vmax.f32 %v146, 0.0
    %v151 = vmax.f32 %v147, 0.0
    %152 = vst [vmem:[%s3] sm:$0xff] %v148
    %153 = vst [vmem:[%s3 + $0x8] sm:$0xff] %v149
    %154 = vst [vmem:[%s3 + $0x10] sm:$0xff] %v150
    %155 = vst [vmem:[%s3 + $0x18] sm:$0xff] %v151
  $region21: #{_lambda_.18} parent=0 // pred_fallthru
    _
  // Predicated region
  $region22: #{_lambda_.18} parent=0 // pred_check
    _
  $region23: #{_lambda_.18} parent=0 // pred_check_branch
    %157 = sbr.rel (0) target = $region25
  $region24: #{_lambda_.18} parent=0 // pred_region
    _
  $region25: #{_lambda_.18} parent=0 // pred_fallthru
    _
  // Predicated region
  $region26: #{_lambda_.18} parent=0 // pred_check
    _
  $region27: #{_lambda_.18} parent=0 // pred_check_branch
    %159 = sbr.rel (0) target = $region29
  $region28: #{_lambda_.18} parent=0 // pred_region
    _
  $region29: #{_lambda_.18} parent=0 // pred_fallthru
    _

// kernel: _lambda_.19
$region0: #{_lambda_.19}
  #allocation0 [shape = 'u32[]', space=smem, size = 0x4, offset = 0x4, fixed_abs, tag = 'smem constant byte address 0x4 - core index']
  #allocation1 [shape = 'u32[72,128]{1,0:T(1,128)}', space=vmem, size = 0x9000, scoped, tag = 'internal scratch']
  #allocation2 [shape = 'f32[128,128]{1,0:T(8,128)}', space=vmem, size = 0x10000, scoped, tag = 'scratch operand']
  %s0 = inlined_call_operand.vmem [shape: bf16[128,128], index: 0, kind: input, shape index: {}]
  %s1 = inlined_call_operand.vmem [shape: bf16[128,128], index: 1, kind: input, shape index: {}]
  %s2 = inlined_call_operand.vmem [shape: f32[1,128], index: 2, kind: input, shape index: {}]
  %s3 = inlined_call_operand.vmem [shape: f32[128,128], index: 3, kind: output, shape index: {}]
  %s4 = sld [smem:[#allocation0]]
  $region30: #{_lambda_.19} parent=0
    _
  %s6 = ssub.s32 1, %s4
  %s7 = scalar_select 0, %s6, %s4
  // Predicated region
  $region2: #{_lambda_.19} parent=0 // pred_check
    _
  $region3: #{_lambda_.19} parent=0 // pred_check_branch
    %9 = sbr.rel (0) target = $region5
  $region4: #{_lambda_.19} parent=0 // pred_region
    _
  $region5: #{_lambda_.19} parent=0 // pred_fallthru
    _
  // Predicated region
  $region6: #{_lambda_.19} parent=0 // pred_check
    _
  $region7: #{_lambda_.19} parent=0 // pred_check_branch
    %11 = sbr.rel (0) target = $region9
  $region8: #{_lambda_.19} parent=0 // pred_region
    _
  $region9: #{_lambda_.19} parent=0 // pred_fallthru
    _
  // Predicated region
  $region10: #{_lambda_.19} parent=0 // pred_check
    _
  $region11: #{_lambda_.19} parent=0 // pred_check_branch
    %13 = sbr.rel (0) target = $region13
  $region12: #{_lambda_.19} parent=0 // pred_region
    _
  $region13: #{_lambda_.19} parent=0 // pred_fallthru
    _
  %p14 = scmp.eq.s32.totalorder 0, 0
  // Predicated region
  $region14: #{_lambda_.19} parent=0 // pred_check
    %p15 = pneg %p14
  $region15: #{_lambda_.19} parent=0 // pred_check_branch
    %17 = sbr.rel (%p15) target = $region17
  $region16: #{_lambda_.19} parent=0 // pred_region
    %18 = vst [vmem:[#allocation2] sm:$0xff] 0.0
    %19 = vst [vmem:[#allocation2 + $0x8] sm:$0xff] 0.0
    %20 = vst [vmem:[#allocation2 + $0x10] sm:$0xff] 0.0
    %21 = vst [vmem:[#allocation2 + $0x18] sm:$0xff] 0.0
    %22 = vst [vmem:[#allocation2 + $0x20] sm:$0xff] 0.0
    %23 = vst [vmem:[#allocation2 + $0x28] sm:$0xff] 0.0
    %24 = vst [vmem:[#allocation2 + $0x30] sm:$0xff] 0.0
    %25 = vst [vmem:[#allocation2 + $0x38] sm:$0xff] 0.0
    %26 = vst [vmem:[#allocation2 + $0x40] sm:$0xff] 0.0
    %27 = vst [vmem:[#allocation2 + $0x48] sm:$0xff] 0.0
    %28 = vst [vmem:[#allocation2 + $0x50] sm:$0xff] 0.0
    %29 = vst [vmem:[#allocation2 + $0x58] sm:$0xff] 0.0
    %30 = vst [vmem:[#allocation2 + $0x60] sm:$0xff] 0.0
    %31 = vst [vmem:[#allocation2 + $0x68] sm:$0xff] 0.0
    %32 = vst [vmem:[#allocation2 + $0x70] sm:$0xff] 0.0
    %33 = vst [vmem:[#allocation2 + $0x78] sm:$0xff] 0.0
  $region17: #{_lambda_.19} parent=0 // pred_fallthru
    _
  %v34 = vld [vmem:[#allocation2] sm:$0xff]
  %v35 = vld [vmem:[#allocation2 + $0x8] sm:$0xff]
  %v36 = vld [vmem:[#allocation2 + $0x10] sm:$0xff]
  %v37 = vld [vmem:[#allocation2 + $0x18] sm:$0xff]
  %v38 = vld [vmem:[#allocation2 + $0x20] sm:$0xff]
  %v39 = vld [vmem:[#allocation2 + $0x28] sm:$0xff]
  %v40 = vld [vmem:[#allocation2 + $0x30] sm:$0xff]
  %v41 = vld [vmem:[#allocation2 + $0x38] sm:$0xff]
  %v42 = vld [vmem:[#allocation2 + $0x40] sm:$0xff]
  %v43 = vld [vmem:[#allocation2 + $0x48] sm:$0xff]
  %v44 = vld [vmem:[#allocation2 + $0x50] sm:$0xff]
  %v45 = vld [vmem:[#allocation2 + $0x58] sm:$0xff]
  %v46 = vld [vmem:[#allocation2 + $0x60] sm:$0xff]
  %v47 = vld [vmem:[#allocation2 + $0x68] sm:$0xff]
  %v48 = vld [vmem:[#allocation2 + $0x70] sm:$0xff]
  %v49 = vld [vmem:[#allocation2 + $0x78] sm:$0xff]
  %v50 = vld [vmem:[%s0] sm:$0xf]
  %v51 = vld [vmem:[%s0 + $0x4] sm:$0xf]
  %v52 = vld [vmem:[%s0 + $0x8] sm:$0xf]
  %v53 = vld [vmem:[%s0 + $0xc] sm:$0xf]
  %v54 = vld [vmem:[%s0 + $0x10] sm:$0xf]
  %v55 = vld [vmem:[%s0 + $0x14] sm:$0xf]
  %v56 = vld [vmem:[%s0 + $0x18] sm:$0xf]
  %v57 = vld [vmem:[%s0 + $0x1c] sm:$0xf]
  %v58 = vld [vmem:[%s0 + $0x20] sm:$0xf]
  %v59 = vld [vmem:[%s0 + $0x24] sm:$0xf]
  %v60 = vld [vmem:[%s0 + $0x28] sm:$0xf]
  %v61 = vld [vmem:[%s0 + $0x2c] sm:$0xf]
  %v62 = vld [vmem:[%s0 + $0x30] sm:$0xf]
  %v63 = vld [vmem:[%s0 + $0x34] sm:$0xf]
  %v64 = vld [vmem:[%s0 + $0x38] sm:$0xf]
  %v65 = vld [vmem:[%s0 + $0x3c] sm:$0xf]
  %v66 = vld [vmem:[%s1] sm:$0xf]
  %v67 = vld [vmem:[%s1 + $0x4] sm:$0xf]
  %v68 = vld [vmem:[%s1 + $0x8] sm:$0xf]
  %v69 = vld [vmem:[%s1 + $0xc] sm:$0xf]
  %v70 = vld [vmem:[%s1 + $0x10] sm:$0xf]
  %v71 = vld [vmem:[%s1 + $0x14] sm:$0xf]
  %v72 = vld [vmem:[%s1 + $0x18] sm:$0xf]
  %v73 = vld [vmem:[%s1 + $0x1c] sm:$0xf]
  %v74 = vld [vmem:[%s1 + $0x20] sm:$0xf]
  %v75 = vld [vmem:[%s1 + $0x24] sm:$0xf]
  %v76 = vld [vmem:[%s1 + $0x28] sm:$0xf]
  %v77 = vld [vmem:[%s1 + $0x2c] sm:$0xf]
  %v78 = vld [vmem:[%s1 + $0x30] sm:$0xf]
  %v79 = vld [vmem:[%s1 + $0x34] sm:$0xf]
  %v80 = vld [vmem:[%s1 + $0x38] sm:$0xf]
  %v81 = vld [vmem:[%s1 + $0x3c] sm:$0xf]
  %v98 = vunpack.c.l.b16 %v50
  %v99 = vunpack.c.l.b16 %v51
  %v100 = vunpack.c.l.b16 %v52
  %v101 = vunpack.c.l.b16 %v53
  %v102 = vunpack.c.l.b16 %v54
  %v103 = vunpack.c.l.b16 %v55
  %v104 = vunpack.c.l.b16 %v56
  %v105 = vunpack.c.l.b16 %v57
  %v106 = vunpack.c.l.b16 %v58
  %v107 = vunpack.c.l.b16 %v59
  %v108 = vunpack.c.l.b16 %v60
  %v109 = vunpack.c.l.b16 %v61
  %v110 = vunpack.c.l.b16 %v62
  %v111 = vunpack.c.l.b16 %v63
  %v112 = vunpack.c.l.b16 %v64
  %v113 = vunpack.c.l.b16 %v65
  %v114 = vpack.c.b16 %v99, %v98
  %v115 = vpack.c.b16 %v101, %v100
  %v116 = vpack.c.b16 %v103, %v102
  %v117 = vpack.c.b16 %v105, %v104
  %v118 = vpack.c.b16 %v107, %v106
  %v119 = vpack.c.b16 %v109, %v108
  %v120 = vpack.c.b16 %v111, %v110
  %v121 = vpack.c.b16 %v113, %v112
  %v146 = vunpack.c.l.b16 %v66
  %v147 = vunpack.c.l.b16 %v67
  %v148 = vunpack.c.l.b16 %v68
  %v149 = vunpack.c.l.b16 %v69
  %v150 = vunpack.c.l.b16 %v70
  %v151 = vunpack.c.l.b16 %v71
  %v152 = vunpack.c.l.b16 %v72
  %v153 = vunpack.c.l.b16 %v73
  %v154 = vunpack.c.l.b16 %v74
  %v155 = vunpack.c.l.b16 %v75
  %v156 = vunpack.c.l.b16 %v76
  %v157 = vunpack.c.l.b16 %v77
  %v158 = vunpack.c.l.b16 %v78
  %v159 = vunpack.c.l.b16 %v79
  %v160 = vunpack.c.l.b16 %v80
  %v161 = vunpack.c.l.b16 %v81
  %v162 = vpack.c.b16 %v147, %v146
  %v163 = vpack.c.b16 %v149, %v148
  %v164 = vpack.c.b16 %v151, %v150
  %v165 = vpack.c.b16 %v153, %v152
  %v166 = vpack.c.b16 %v155, %v154
  %v167 = vpack.c.b16 %v157, %v156
  %v168 = vpack.c.b16 %v159, %v158
  %v169 = vpack.c.b16 %v161, %v160
  %178 = vmatpush.bf16.msra.mxu0 %v169
  %179 = vmatpush.bf16.msra.mxu0 %v168
  %180 = vmatpush.bf16.msra.mxu0 %v167
  %181 = vmatpush.bf16.msra.mxu0 %v166
  %182 = vmatpush.bf16.msra.mxu0 %v165
  %183 = vmatpush.bf16.msra.mxu0 %v164
  %184 = vmatpush.bf16.msra.mxu0 %v163
  %185 = vmatpush.bf16.msra.mxu0 %v162
  %186 = vmatmul.bf16.gmra.mxu0 %v114
  %v187 = vpop.f32.mrf.mxu0
  %v188 = vadd.f32 0.0, %v187
  %v189 = vpop.f32.mrf.mxu0
  %v190 = vadd.f32 0.0, %v189
  %191 = vmatmul.bf16.gmra.mxu0 %v115
  %v192 = vpop.f32.mrf.mxu0
  %v193 = vadd.f32 0.0, %v192
  %v194 = vpop.f32.mrf.mxu0
  %v195 = vadd.f32 0.0, %v194
  %196 = vmatmul.bf16.gmra.mxu0 %v116
  %v197 = vpop.f32.mrf.mxu0
  %v198 = vadd.f32 0.0, %v197
  %v199 = vpop.f32.mrf.mxu0
  %v200 = vadd.f32 0.0, %v199
  %201 = vmatmul.bf16.gmra.mxu0 %v117
  %v202 = vpop.f32.mrf.mxu0
  %v203 = vadd.f32 0.0, %v202
  %v204 = vpop.f32.mrf.mxu0
  %v205 = vadd.f32 0.0, %v204
  %206 = vmatmul.bf16.gmra.mxu0 %v118
  %v207 = vpop.f32.mrf.mxu0
  %v208 = vadd.f32 0.0, %v207
  %v209 = vpop.f32.mrf.mxu0
  %v210 = vadd.f32 0.0, %v209
  %211 = vmatmul.bf16.gmra.mxu0 %v119
  %v212 = vpop.f32.mrf.mxu0
  %v213 = vadd.f32 0.0, %v212
  %v214 = vpop.f32.mrf.mxu0
  %v215 = vadd.f32 0.0, %v214
  %216 = vmatmul.bf16.gmra.mxu0 %v120
  %v217 = vpop.f32.mrf.mxu0
  %v218 = vadd.f32 0.0, %v217
  %v219 = vpop.f32.mrf.mxu0
  %v220 = vadd.f32 0.0, %v219
  %221 = vmatmul.bf16.gmra.mxu0 %v121
  %v222 = vpop.f32.mrf.mxu0
  %v223 = vadd.f32 0.0, %v222
  %v224 = vpop.f32.mrf.mxu0
  %v225 = vadd.f32 0.0, %v224
  %226 = vdwg.mxu0
  %v227 = vadd.f32 %v34, %v188
  %v228 = vadd.f32 %v35, %v190
  %v229 = vadd.f32 %v36, %v193
  %v230 = vadd.f32 %v37, %v195
  %v231 = vadd.f32 %v38, %v198
  %v232 = vadd.f32 %v39, %v200
  %v233 = vadd.f32 %v40, %v203
  %v234 = vadd.f32 %v41, %v205
  %v235 = vadd.f32 %v42, %v208
  %v236 = vadd.f32 %v43, %v210
  %v237 = vadd.f32 %v44, %v213
  %v238 = vadd.f32 %v45, %v215
  %v239 = vadd.f32 %v46, %v218
  %v240 = vadd.f32 %v47, %v220
  %v241 = vadd.f32 %v48, %v223
  %v242 = vadd.f32 %v49, %v225
  %243 = vst [vmem:[#allocation2] sm:$0xff] %v227
  %244 = vst [vmem:[#allocation2 + $0x8] sm:$0xff] %v228
  %245 = vst [vmem:[#allocation2 + $0x10] sm:$0xff] %v229
  %246 = vst [vmem:[#allocation2 + $0x18] sm:$0xff] %v230
  %247 = vst [vmem:[#allocation2 + $0x20] sm:$0xff] %v231
  %248 = vst [vmem:[#allocation2 + $0x28] sm:$0xff] %v232
  %249 = vst [vmem:[#allocation2 + $0x30] sm:$0xff] %v233
  %250 = vst [vmem:[#allocation2 + $0x38] sm:$0xff] %v234
  %251 = vst [vmem:[#allocation2 + $0x40] sm:$0xff] %v235
  %252 = vst [vmem:[#allocation2 + $0x48] sm:$0xff] %v236
  %253 = vst [vmem:[#allocation2 + $0x50] sm:$0xff] %v237
  %254 = vst [vmem:[#allocation2 + $0x58] sm:$0xff] %v238
  %255 = vst [vmem:[#allocation2 + $0x60] sm:$0xff] %v239
  %256 = vst [vmem:[#allocation2 + $0x68] sm:$0xff] %v240
  %257 = vst [vmem:[#allocation2 + $0x70] sm:$0xff] %v241
  %258 = vst [vmem:[#allocation2 + $0x78] sm:$0xff] %v242
  // Predicated region
  $region18: #{_lambda_.19} parent=0 // pred_check
    %p259 = pneg %p14
  $region19: #{_lambda_.19} parent=0 // pred_check_branch
    %261 = sbr.rel (%p259) target = $region21
  $region20: #{_lambda_.19} parent=0 // pred_region
    %v262 = vld [vmem:[#allocation2] sm:$0xff]
    %v263 = vld [vmem:[#allocation2 + $0x8] sm:$0xff]
    %v264 = vld [vmem:[#allocation2 + $0x10] sm:$0xff]
    %v265 = vld [vmem:[#allocation2 + $0x18] sm:$0xff]
    %v266 = vld [vmem:[#allocation2 + $0x20] sm:$0xff]
    %v267 = vld [vmem:[#allocation2 + $0x28] sm:$0xff]
    %v268 = vld [vmem:[#allocation2 + $0x30] sm:$0xff]
    %v269 = vld [vmem:[#allocation2 + $0x38] sm:$0xff]
    %v270 = vld [vmem:[#allocation2 + $0x40] sm:$0xff]
    %v271 = vld [vmem:[#allocation2 + $0x48] sm:$0xff]
    %v272 = vld [vmem:[#allocation2 + $0x50] sm:$0xff]
    %v273 = vld [vmem:[#allocation2 + $0x58] sm:$0xff]
    %v274 = vld [vmem:[#allocation2 + $0x60] sm:$0xff]
    %v275 = vld [vmem:[#allocation2 + $0x68] sm:$0xff]
    %v276 = vld [vmem:[#allocation2 + $0x70] sm:$0xff]
    %v277 = vld [vmem:[#allocation2 + $0x78] sm:$0xff]
    %v278 = vld [vmem:[%s2] sm:$0x1]
    %v280 = vperm.slane %v278, 0
    %v282 = vadd.f32 %v262, %v280
    %v283 = vadd.f32 %v263, %v280
    %v284 = vadd.f32 %v264, %v280
    %v285 = vadd.f32 %v265, %v280
    %v286 = vadd.f32 %v266, %v280
    %v287 = vadd.f32 %v267, %v280
    %v288 = vadd.f32 %v268, %v280
    %v289 = vadd.f32 %v269, %v280
    %v290 = vadd.f32 %v270, %v280
    %v291 = vadd.f32 %v271, %v280
    %v292 = vadd.f32 %v272, %v280
    %v293 = vadd.f32 %v273, %v280
    %v294 = vadd.f32 %v274, %v280
    %v295 = vadd.f32 %v275, %v280
    %v296 = vadd.f32 %v276, %v280
    %v297 = vadd.f32 %v277, %v280
    %v298 = vxor.u32 %v282, 2147483648
    %v299 = vxor.u32 %v283, 2147483648
    %v300 = vxor.u32 %v284, 2147483648
    %v301 = vxor.u32 %v285, 2147483648
    %v302 = vxor.u32 %v286, 2147483648
    %v303 = vxor.u32 %v287, 2147483648
    %v304 = vxor.u32 %v288, 2147483648
    %v305 = vxor.u32 %v289, 2147483648
    %v306 = vxor.u32 %v290, 2147483648
    %v307 = vxor.u32 %v291, 2147483648
    %v308 = vxor.u32 %v292, 2147483648
    %v309 = vxor.u32 %v293, 2147483648
    %v310 = vxor.u32 %v294, 2147483648
    %v311 = vxor.u32 %v295, 2147483648
    %v312 = vxor.u32 %v296, 2147483648
    %v313 = vxor.u32 %v297, 2147483648
    %v314 = vmul.f32 %v298, 1.442695
    %v315 = vpow.pop %v314
    %v316 = vmul.f32 %v299, 1.442695
    %v317 = vpow.pop %v316
    %v318 = vmul.f32 %v300, 1.442695
    %v319 = vpow.pop %v318
    %v320 = vmul.f32 %v301, 1.442695
    %v321 = vpow.pop %v320
    %v322 = vmul.f32 %v302, 1.442695
    %v323 = vpow.pop %v322
    %v324 = vmul.f32 %v303, 1.442695
    %v325 = vpow.pop %v324
    %v326 = vmul.f32 %v304, 1.442695
    %v327 = vpow.pop %v326
    %v328 = vmul.f32 %v305, 1.442695
    %v329 = vpow.pop %v328
    %v330 = vmul.f32 %v306, 1.442695
    %v331 = vpow.pop %v330
    %v332 = vmul.f32 %v307, 1.442695
    %v333 = vpow.pop %v332
    %v334 = vmul.f32 %v308, 1.442695
    %v335 = vpow.pop %v334
    %v336 = vmul.f32 %v309, 1.442695
    %v337 = vpow.pop %v336
    %v338 = vmul.f32 %v310, 1.442695
    %v339 = vpow.pop %v338
    %v340 = vmul.f32 %v311, 1.442695
    %v341 = vpow.pop %v340
    %v342 = vmul.f32 %v312, 1.442695
    %v343 = vpow.pop %v342
    %v344 = vmul.f32 %v313, 1.442695
    %v345 = vpow.pop %v344
    %v346 = vadd.f32 %v315, 1.0
    %v347 = vadd.f32 %v317, 1.0
    %v348 = vadd.f32 %v319, 1.0
    %v349 = vadd.f32 %v321, 1.0
    %v350 = vadd.f32 %v323, 1.0
    %v351 = vadd.f32 %v325, 1.0
    %v352 = vadd.f32 %v327, 1.0
    %v353 = vadd.f32 %v329, 1.0
    %v354 = vadd.f32 %v331, 1.0
    %v355 = vadd.f32 %v333, 1.0
    %v356 = vadd.f32 %v335, 1.0
    %v357 = vadd.f32 %v337, 1.0
    %v358 = vadd.f32 %v339, 1.0
    %v359 = vadd.f32 %v341, 1.0
    %v360 = vadd.f32 %v343, 1.0
    %v361 = vadd.f32 %v345, 1.0
    %v362 = vrcp.pop %v346
    %v363 = vmul.f32 %v346, %v362
    %v364 = vsub.f32 1.0, %v363
    %v365 = vmul.f32 %v362, %v364
    %v366 = vadd.f32 %v362, %v365
    %vm367 = vweird.f32 %v346
    %vm368 = vweird.f32 %v362
    %vm369 = vmor %vm367, %vm368
    %v370 = vsel %vm369, %v362, %v366
    %v371 = vand.u32 2147483647, %v346
    %vm372 = vcmp.eq.f32.partialorder %v371, 8.507059e+37
    %v373 = vand.u32 %v346, 2147483648
    %v374 = vor.u32 1.1754944e-38, %v373
    %v375 = vsel %vm372, %v374, %v370
    %v376 = vmul.f32 1.0, %v375
    %v377 = vrcp.pop %v347
    %v378 = vmul.f32 %v347, %v377
    %v379 = vsub.f32 1.0, %v378
    %v380 = vmul.f32 %v377, %v379
    %v381 = vadd.f32 %v377, %v380
    %vm382 = vweird.f32 %v347
    %vm383 = vweird.f32 %v377
    %vm384 = vmor %vm382, %vm383
    %v385 = vsel %vm384, %v377, %v381
    %v386 = vand.u32 2147483647, %v347
    %vm387 = vcmp.eq.f32.partialorder %v386, 8.507059e+37
    %v388 = vand.u32 %v347, 2147483648
    %v389 = vor.u32 1.1754944e-38, %v388
    %v390 = vsel %vm387, %v389, %v385
    %v391 = vmul.f32 1.0, %v390
    %v392 = vrcp.pop %v348
    %v393 = vmul.f32 %v348, %v392
    %v394 = vsub.f32 1.0, %v393
    %v395 = vmul.f32 %v392, %v394
    %v396 = vadd.f32 %v392, %v395
    %vm397 = vweird.f32 %v348
    %vm398 = vweird.f32 %v392
    %vm399 = vmor %vm397, %vm398
    %v400 = vsel %vm399, %v392, %v396
    %v401 = vand.u32 2147483647, %v348
    %vm402 = vcmp.eq.f32.partialorder %v401, 8.507059e+37
    %v403 = vand.u32 %v348, 2147483648
    %v404 = vor.u32 1.1754944e-38, %v403
    %v405 = vsel %vm402, %v404, %v400
    %v406 = vmul.f32 1.0, %v405
    %v407 = vrcp.pop %v349
    %v408 = vmul.f32 %v349, %v407
    %v409 = vsub.f32 1.0, %v408
    %v410 = vmul.f32 %v407, %v409
    %v411 = vadd.f32 %v407, %v410
    %vm412 = vweird.f32 %v349
    %vm413 = vweird.f32 %v407
    %vm414 = vmor %vm412, %vm413
    %v415 = vsel %vm414, %v407, %v411
    %v416 = vand.u32 2147483647, %v349
    %vm417 = vcmp.eq.f32.partialorder %v416, 8.507059e+37
    %v418 = vand.u32 %v349, 2147483648
    %v419 = vor.u32 1.1754944e-38, %v418
    %v420 = vsel %vm417, %v419, %v415
    %v421 = vmul.f32 1.0, %v420
    %v422 = vrcp.pop %v350
    %v423 = vmul.f32 %v350, %v422
    %v424 = vsub.f32 1.0, %v423
    %v425 = vmul.f32 %v422, %v424
    %v426 = vadd.f32 %v422, %v425
    %vm427 = vweird.f32 %v350
    %vm428 = vweird.f32 %v422
    %vm429 = vmor %vm427, %vm428
    %v430 = vsel %vm429, %v422, %v426
    %v431 = vand.u32 2147483647, %v350
    %vm432 = vcmp.eq.f32.partialorder %v431, 8.507059e+37
    %v433 = vand.u32 %v350, 2147483648
    %v434 = vor.u32 1.1754944e-38, %v433
    %v435 = vsel %vm432, %v434, %v430
    %v436 = vmul.f32 1.0, %v435
    %v437 = vrcp.pop %v351
    %v438 = vmul.f32 %v351, %v437
    %v439 = vsub.f32 1.0, %v438
    %v440 = vmul.f32 %v437, %v439
    %v441 = vadd.f32 %v437, %v440
    %vm442 = vweird.f32 %v351
    %vm443 = vweird.f32 %v437
    %vm444 = vmor %vm442, %vm443
    %v445 = vsel %vm444, %v437, %v441
    %v446 = vand.u32 2147483647, %v351
    %vm447 = vcmp.eq.f32.partialorder %v446, 8.507059e+37
    %v448 = vand.u32 %v351, 2147483648
    %v449 = vor.u32 1.1754944e-38, %v448
    %v450 = vsel %vm447, %v449, %v445
    %v451 = vmul.f32 1.0, %v450
    %v452 = vrcp.pop %v352
    %v453 = vmul.f32 %v352, %v452
    %v454 = vsub.f32 1.0, %v453
    %v455 = vmul.f32 %v452, %v454
    %v456 = vadd.f32 %v452, %v455
    %vm457 = vweird.f32 %v352
    %vm458 = vweird.f32 %v452
    %vm459 = vmor %vm457, %vm458
    %v460 = vsel %vm459, %v452, %v456
    %v461 = vand.u32 2147483647, %v352
    %vm462 = vcmp.eq.f32.partialorder %v461, 8.507059e+37
    %v463 = vand.u32 %v352, 2147483648
    %v464 = vor.u32 1.1754944e-38, %v463
    %v465 = vsel %vm462, %v464, %v460
    %v466 = vmul.f32 1.0, %v465
    %v467 = vrcp.pop %v353
    %v468 = vmul.f32 %v353, %v467
    %v469 = vsub.f32 1.0, %v468
    %v470 = vmul.f32 %v467, %v469
    %v471 = vadd.f32 %v467, %v470
    %vm472 = vweird.f32 %v353
    %vm473 = vweird.f32 %v467
    %vm474 = vmor %vm472, %vm473
    %v475 = vsel %vm474, %v467, %v471
    %v476 = vand.u32 2147483647, %v353
    %vm477 = vcmp.eq.f32.partialorder %v476, 8.507059e+37
    %v478 = vand.u32 %v353, 2147483648
    %v479 = vor.u32 1.1754944e-38, %v478
    %v480 = vsel %vm477, %v479, %v475
    %v481 = vmul.f32 1.0, %v480
    %v482 = vrcp.pop %v354
    %v483 = vmul.f32 %v354, %v482
    %v484 = vsub.f32 1.0, %v483
    %v485 = vmul.f32 %v482, %v484
    %v486 = vadd.f32 %v482, %v485
    %vm487 = vweird.f32 %v354
    %vm488 = vweird.f32 %v482
    %vm489 = vmor %vm487, %vm488
    %v490 = vsel %vm489, %v482, %v486
    %v491 = vand.u32 2147483647, %v354
    %vm492 = vcmp.eq.f32.partialorder %v491, 8.507059e+37
    %v493 = vand.u32 %v354, 2147483648
    %v494 = vor.u32 1.1754944e-38, %v493
    %v495 = vsel %vm492, %v494, %v490
    %v496 = vmul.f32 1.0, %v495
    %v497 = vrcp.pop %v355
    %v498 = vmul.f32 %v355, %v497
    %v499 = vsub.f32 1.0, %v498
    %v500 = vmul.f32 %v497, %v499
    %v501 = vadd.f32 %v497, %v500
    %vm502 = vweird.f32 %v355
    %vm503 = vweird.f32 %v497
    %vm504 = vmor %vm502, %vm503
    %v505 = vsel %vm504, %v497, %v501
    %v506 = vand.u32 2147483647, %v355
    %vm507 = vcmp.eq.f32.partialorder %v506, 8.507059e+37
    %v508 = vand.u32 %v355, 2147483648
    %v509 = vor.u32 1.1754944e-38, %v508
    %v510 = vsel %vm507, %v509, %v505
    %v511 = vmul.f32 1.0, %v510
    %v512 = vrcp.pop %v356
    %v513 = vmul.f32 %v356, %v512
    %v514 = vsub.f32 1.0, %v513
    %v515 = vmul.f32 %v512, %v514
    %v516 = vadd.f32 %v512, %v515
    %vm517 = vweird.f32 %v356
    %vm518 = vweird.f32 %v512
    %vm519 = vmor %vm517, %vm518
    %v520 = vsel %vm519, %v512, %v516
    %v521 = vand.u32 2147483647, %v356
    %vm522 = vcmp.eq.f32.partialorder %v521, 8.507059e+37
    %v523 = vand.u32 %v356, 2147483648
    %v524 = vor.u32 1.1754944e-38, %v523
    %v525 = vsel %vm522, %v524, %v520
    %v526 = vmul.f32 1.0, %v525
    %v527 = vrcp.pop %v357
    %v528 = vmul.f32 %v357, %v527
    %v529 = vsub.f32 1.0, %v528
    %v530 = vmul.f32 %v527, %v529
    %v531 = vadd.f32 %v527, %v530
    %vm532 = vweird.f32 %v357
    %vm533 = vweird.f32 %v527
    %vm534 = vmor %vm532, %vm533
    %v535 = vsel %vm534, %v527, %v531
    %v536 = vand.u32 2147483647, %v357
    %vm537 = vcmp.eq.f32.partialorder %v536, 8.507059e+37
    %v538 = vand.u32 %v357, 2147483648
    %v539 = vor.u32 1.1754944e-38, %v538
    %v540 = vsel %vm537, %v539, %v535
    %v541 = vmul.f32 1.0, %v540
    %v542 = vrcp.pop %v358
    %v543 = vmul.f32 %v358, %v542
    %v544 = vsub.f32 1.0, %v543
    %v545 = vmul.f32 %v542, %v544
    %v546 = vadd.f32 %v542, %v545
    %vm547 = vweird.f32 %v358
    %vm548 = vweird.f32 %v542
    %vm549 = vmor %vm547, %vm548
    %v550 = vsel %vm549, %v542, %v546
    %v551 = vand.u32 2147483647, %v358
    %vm552 = vcmp.eq.f32.partialorder %v551, 8.507059e+37
    %v553 = vand.u32 %v358, 2147483648
    %v554 = vor.u32 1.1754944e-38, %v553
    %v555 = vsel %vm552, %v554, %v550
    %v556 = vmul.f32 1.0, %v555
    %v557 = vrcp.pop %v359
    %v558 = vmul.f32 %v359, %v557
    %v559 = vsub.f32 1.0, %v558
    %v560 = vmul.f32 %v557, %v559
    %v561 = vadd.f32 %v557, %v560
    %vm562 = vweird.f32 %v359
    %vm563 = vweird.f32 %v557
    %vm564 = vmor %vm562, %vm563
    %v565 = vsel %vm564, %v557, %v561
    %v566 = vand.u32 2147483647, %v359
    %vm567 = vcmp.eq.f32.partialorder %v566, 8.507059e+37
    %v568 = vand.u32 %v359, 2147483648
    %v569 = vor.u32 1.1754944e-38, %v568
    %v570 = vsel %vm567, %v569, %v565
    %v571 = vmul.f32 1.0, %v570
    %v572 = vrcp.pop %v360
    %v573 = vmul.f32 %v360, %v572
    %v574 = vsub.f32 1.0, %v573
    %v575 = vmul.f32 %v572, %v574
    %v576 = vadd.f32 %v572, %v575
    %vm577 = vweird.f32 %v360
    %vm578 = vweird.f32 %v572
    %vm579 = vmor %vm577, %vm578
    %v580 = vsel %vm579, %v572, %v576
    %v581 = vand.u32 2147483647, %v360
    %vm582 = vcmp.eq.f32.partialorder %v581, 8.507059e+37
    %v583 = vand.u32 %v360, 2147483648
    %v584 = vor.u32 1.1754944e-38, %v583
    %v585 = vsel %vm582, %v584, %v580
    %v586 = vmul.f32 1.0, %v585
    %v587 = vrcp.pop %v361
    %v588 = vmul.f32 %v361, %v587
    %v589 = vsub.f32 1.0, %v588
    %v590 = vmul.f32 %v587, %v589
    %v591 = vadd.f32 %v587, %v590
    %vm592 = vweird.f32 %v361
    %vm593 = vweird.f32 %v587
    %vm594 = vmor %vm592, %vm593
    %v595 = vsel %vm594, %v587, %v591
    %v596 = vand.u32 2147483647, %v361
    %vm597 = vcmp.eq.f32.partialorder %v596, 8.507059e+37
    %v598 = vand.u32 %v361, 2147483648
    %v599 = vor.u32 1.1754944e-38, %v598
    %v600 = vsel %vm597, %v599, %v595
    %v601 = vmul.f32 1.0, %v600
    %602 = vst [vmem:[%s3] sm:$0xff] %v376
    %603 = vst [vmem:[%s3 + $0x8] sm:$0xff] %v391
    %604 = vst [vmem:[%s3 + $0x10] sm:$0xff] %v406
    %605 = vst [vmem:[%s3 + $0x18] sm:$0xff] %v421
    %606 = vst [vmem:[%s3 + $0x20] sm:$0xff] %v436
    %607 = vst [vmem:[%s3 + $0x28] sm:$0xff] %v451
    %608 = vst [vmem:[%s3 + $0x30] sm:$0xff] %v466
    %609 = vst [vmem:[%s3 + $0x38] sm:$0xff] %v481
    %610 = vst [vmem:[%s3 + $0x40] sm:$0xff] %v496
    %611 = vst [vmem:[%s3 + $0x48] sm:$0xff] %v511
    %612 = vst [vmem:[%s3 + $0x50] sm:$0xff] %v526
    %613 = vst [vmem:[%s3 + $0x58] sm:$0xff] %v541
    %614 = vst [vmem:[%s3 + $0x60] sm:$0xff] %v556
    %615 = vst [vmem:[%s3 + $0x68] sm:$0xff] %v571
    %616 = vst [vmem:[%s3 + $0x70] sm:$0xff] %v586
    %617 = vst [vmem:[%s3 + $0x78] sm:$0xff] %v601
  $region21: #{_lambda_.19} parent=0 // pred_fallthru
    _
  // Predicated region
  $region22: #{_lambda_.19} parent=0 // pred_check
    _
  $region23: #{_lambda_.19} parent=0 // pred_check_branch
    %619 = sbr.rel (0) target = $region25
  $region24: #{_lambda_.19} parent=0 // pred_region
    _
  $region25: #{_lambda_.19} parent=0 // pred_fallthru
    _
  // Predicated region
  $region26: #{_lambda_.19} parent=0 // pred_check
    _
  $region27: #{_lambda_.19} parent=0 // pred_check_branch
    %621 = sbr.rel (0) target = $region29
  $region28: #{_lambda_.19} parent=0 // pred_region
    _
  $region29: #{_lambda_.19} parent=0 // pred_fallthru
    _

</llo_original>
